<compile_context>
chip_gen: v7x
topology: tpu7x:2x2x1
jax: 0.10.0
libtpu: 0.0.40
codegen_flags: <defaults>
</compile_context>

<pallas_src>
import math
from functools import partial

import jax
import jax.numpy as jnp
from jax.experimental import pallas as pl
from jax.experimental.pallas import tpu as pltpu


def _rab_kernel(x_ref, me_ref,
                ln1_g_ref, ln1_b_ref, wqkv_ref, bqkv_ref, wo_ref, bo_ref,
                ln2_g_ref, ln2_b_ref, wfc_ref, bfc_ref, wproj_ref, bproj_ref,
                out_ref, *, n_head, ffn_chunk):
    """One batch-tile per grid step.  x_ref block: (bt, S, D) float32."""
    bt, S, D = x_ref.shape
    hd = D // n_head
    n = bt * S
    eps = 1e-5

    x = x_ref[...].astype(jnp.float32)                        # (bt, S, D)
    xf = x.reshape(n, D)

    def layer_norm(v, g_ref, b_ref):                          # row-wise LN in f32
        mu = jnp.mean(v, axis=-1, keepdims=True)
        var = jnp.mean(jnp.square(v - mu), axis=-1, keepdims=True)
        return (v - mu) * jax.lax.rsqrt(var + eps) * g_ref[...] + b_ref[...]

    # ------------- attention branch: x + out_proj(MHA(ln_1(x))) -------------
    xn = layer_norm(xf, ln1_g_ref, ln1_b_ref)
    qkv = jnp.dot(xn.astype(jnp.bfloat16), wqkv_ref[...],
                  preferred_element_type=jnp.float32) + bqkv_ref[...]       # (n, 3D) f32
    qkv = qkv.reshape(bt, S, 3 * D)
    me = me_ref[...]                                          # (bt, H, S) 0/1 mask rows, f32

    # accumulate the out-projection per head (no lane-offset slab stores)
    attn = jnp.zeros((n, D), jnp.float32) + bo_ref[...]
    for h in range(n_head):
        # 1/sqrt(hd) is already folded into the Q columns of wqkv / bqkv
        qh = qkv[:, :, h * hd:(h + 1) * hd].astype(jnp.bfloat16)
        kh = qkv[:, :, D + h * hd:D + (h + 1) * hd].astype(jnp.bfloat16)
        vh = qkv[:, :, 2 * D + h * hd:2 * D + (h + 1) * hd].astype(jnp.bfloat16)
        s = jnp.einsum("bqd,bkd->bqk", qh, kh,
                       preferred_element_type=jnp.float32)                  # (bt, S, S)
        # additive bias rebuilt in-kernel: outer product of the 0/1 mask row
        s = s + me[:, h, :, None] * me[:, h, None, :]
        s = s - jnp.max(s, axis=-1, keepdims=True)
        p = jnp.exp(s)
        p = p * pl.reciprocal(jnp.sum(p, axis=-1, keepdims=True), approx=True)
        oh = jnp.einsum("bqk,bkd->bqd", p.astype(jnp.bfloat16), vh,
                        preferred_element_type=jnp.float32)                 # (bt, S, hd)
        attn = attn + jnp.dot(oh.reshape(n, hd).astype(jnp.bfloat16),
                              wo_ref[h * hd:(h + 1) * hd, :],
                              preferred_element_type=jnp.float32)
    x1 = xf + attn                                                          # f32 residual

    # ---------- MLP branch: x + c_proj(QuickGELU(c_fc(ln_2(x)))) ----------
    # Chunked over the 4*D hidden dim so the (n, 4D) f32 intermediate never
    # lives all at once (VMEM / spill pressure, esp. v7x's 64 MiB).
    x1n = layer_norm(x1, ln2_g_ref, ln2_b_ref)
    x1n_bf = x1n.astype(jnp.bfloat16)
    H4 = wfc_ref.shape[1]
    mlp = jnp.zeros((n, D), jnp.float32) + bproj_ref[...]
    for c0 in range(0, H4, ffn_chunk):
        c1 = min(c0 + ffn_chunk, H4)
        hfc = jnp.dot(x1n_bf, wfc_ref[:, c0:c1],
                      preferred_element_type=jnp.float32) + bfc_ref[:, c0:c1]
        gelu = hfc * jax.nn.sigmoid(1.702 * hfc)                            # QuickGELU (f32)
        mlp = mlp + jnp.dot(gelu.astype(jnp.bfloat16), wproj_ref[c0:c1, :],
                            preferred_element_type=jnp.float32)

    out_ref[...] = (x1 + mlp).reshape(bt, S, D).astype(out_ref.dtype)


def _pick_batch_tile(B, S, target_rows=512):
    """Largest divisor bt of B with bt*S <= target_rows (v6e/v7x MXU-friendly),
    keeping >=2 grid steps when B > 1 so both v7x TensorCores get work."""
    best = 1
    for cand in range(1, B + 1):
        if B % cand:
            continue
        if cand * S > target_rows:
            continue
        if B > 1 and B // cand < 2:
            continue
        best = cand
    return best


def _vmem_limit_bytes(D, bt, S, H):
    """Derive the scoped-VMEM request from the actual footprint, capped by the
    device's reported VMEM capacity."""
    n = bt * S
    footprint = (
        24 * D * D + 52 * D * 4                       # resident bf16 weights + f32 biases/LN
        + 2 * (2 * n * D * 4) + 2 * bt * H * S * 4    # double-buffered x / out / mask-row blocks
        + (9 * D + 2 * min(4 * D, 2048)) * n * 4      # f32 in-kernel intermediates (qkv, ffn chunk, temps)
    )
    limit = max(32 * 2**20, int(footprint * 1.5))
    try:
        cap = int(pltpu.get_tpu_info().vmem_capacity_bytes) * 3 // 4
    except Exception:  # pragma: no cover - conservative fallback
        cap = 48 * 2**20
    # TODO(synk): if footprint exceeds the cap (very large d_model on v7x),
    # stream wfc/wproj with pipelined BlockSpecs instead of keeping them resident.
    return min(limit, cap)


def _residual_attention_block(x, m_eff, lp, *, n_head):
    B, S, D = x.shape
    H = n_head
    bt = _pick_batch_tile(B, S)
    n_tok = B * S
    ffn_chunk = min(4 * D, 2048)

    # Whole array, resident in VMEM, single buffer (weights never change across
    # grid steps, so no double-buffering).
    resident = pl.BlockSpec(memory_space=pltpu.MemorySpace.VMEM)

    cost = pl.CostEstimate(
        flops=int(24 * n_tok * D * D + 4 * B * S * S * D),
        transcendentals=int(B * H * S * S + 4 * n_tok * D),
        bytes_accessed=int(2 * n_tok * D * 4 + B * H * S * 4
                           + 12 * D * D * 2 + 13 * D * 4),
    )

    return pl.pallas_call(
        partial(_rab_kernel, n_head=n_head, ffn_chunk=ffn_chunk),
        out_shape=jax.ShapeDtypeStruct((B, S, D), x.dtype),
        grid=(B // bt,),
        in_specs=[
            pl.BlockSpec((bt, S, D), lambda b: (b, 0, 0)),   # x (pipelined)
            pl.BlockSpec((bt, H, S), lambda b: (b, 0, 0)),   # per-head mask rows (tiny)
            resident, resident,                              # ln_1 gamma / beta (f32)
            resident, resident,                              # in_proj W^T (bf16, Q-scaled), bias
            resident, resident,                              # out_proj W^T (bf16), bias
            resident, resident,                              # ln_2 gamma / beta
            resident, resident,                              # c_fc W^T (bf16), bias
            resident, resident,                              # c_proj W^T (bf16), bias
        ],
        out_specs=pl.BlockSpec((bt, S, D), lambda b: (b, 0, 0)),
        compiler_params=pltpu.CompilerParams(
            dimension_semantics=("parallel",),
            vmem_limit_bytes=_vmem_limit_bytes(D, bt, S, H),
        ),
        cost_estimate=cost,
    )(x, m_eff,
      lp["ln1_g"], lp["ln1_b"], lp["wqkv_t"], lp["bqkv"], lp["wo_t"], lp["bo"],
      lp["ln2_g"], lp["ln2_b"], lp["wfc_t"], lp["bfc"], lp["wproj_t"], lp["bproj"])


def outfits_transformer(embeddings, input_mask, params, n_head):
    """Pallas forward of OutfitsTransformer: emb + pos -> n_layers x block."""
    B, S, D = embeddings.shape
    assert D % n_head == 0
    hd = D // n_head
    scale = 1.0 / math.sqrt(hd)

    # Mask row table encoding PyTorch's `.repeat(n_head,1,1)` consumption:
    # head (b, h) uses input_mask[(b*n_head + h) % B].  Only (B, H, S) floats
    # ship to the kernel; the (S, S) outer product is rebuilt in-kernel.
    m = input_mask.astype(jnp.float32)
    idx = (jnp.arange(B)[:, None] * n_head + jnp.arange(n_head)[None, :]) % B
    m_eff = m[idx]                                            # (B, H, S)

    # Positional embedding added once, in the wrapper (no dead per-layer operand).
    x = embeddings.astype(jnp.float32) + params["pos"][None]

    for lp in params["layers"]:
        # Fold 1/sqrt(hd) into the Q columns of the qkv projection (once per
        # call, amortized over all tokens) and delete the in-kernel scale mul.
        wqkv_t = lp["wqkv_t"]
        wqkv_scaled = jnp.concatenate(
            [wqkv_t[:, :D].astype(jnp.float32) * scale,
             wqkv_t[:, D:].astype(jnp.float32)], axis=1).astype(wqkv_t.dtype)
        bqkv_scaled = jnp.concatenate(
            [lp["bqkv"][:, :D] * scale, lp["bqkv"][:, D:]], axis=1)
        lp_k = dict(lp, wqkv_t=wqkv_scaled, bqkv=bqkv_scaled)
        x = _residual_attention_block(x, m_eff, lp_k, n_head=n_head)
    return x


def _reference(embeddings, input_mask, params, n_head):
    """Pure-JAX f32 reference mirroring the PyTorch module."""
    B, S, D = embeddings.shape
    hd = D // n_head
    scale = 1.0 / math.sqrt(hd)
    m = input_mask.astype(jnp.float32)
    bias = m[:, :, None] * m[:, None, :]
    bias_bh = jnp.tile(bias, (n_head, 1, 1)).reshape(B, n_head, S, S)

    def ln(v, g, b):
        mu = jnp.mean(v, -1, keepdims=True)
        var = jnp.mean((v - mu) ** 2, -1, keepdims=True)
        return (v - mu) * jax.lax.rsqrt(var + 1e-5) * g[0] + b[0]

    x = embeddings.astype(jnp.float32) + params["pos"][None]
    for lp in params["layers"]:
        wqkv = lp["wqkv_t"].astype(jnp.float32)
        wo = lp["wo_t"].astype(jnp.float32)
        wfc = lp["wfc_t"].astype(jnp.float32)
        wproj = lp["wproj_t"].astype(jnp.float32)

        xn = ln(x, lp["ln1_g"], lp["ln1_b"])
        qkv = xn @ wqkv + lp["bqkv"][0]
        q = (qkv[..., :D] * scale).reshape(B, S, n_head, hd).transpose(0, 2, 1, 3)
        k = qkv[..., D:2 * D].reshape(B, S, n_head, hd).transpose(0, 2, 1, 3)
        v = qkv[..., 2 * D:].reshape(B, S, n_head, hd).transpose(0, 2, 1, 3)
        s = jnp.einsum("bhqd,bhkd->bhqk", q, k) + bias_bh
        p = jax.nn.softmax(s, axis=-1)
        ao = jnp.einsum("bhqk,bhkd->bhqd", p, v).transpose(0, 2, 1, 3).reshape(B, S, D)
        x = x + ao @ wo + lp["bo"][0]

        x1n = ln(x, lp["ln2_g"], lp["ln2_b"])
        hfc = x1n @ wfc + lp["bfc"][0]
        g = hfc * jax.nn.sigmoid(1.702 * hfc)
        x = x + g @ wproj + lp["bproj"][0]
    return x


def init_params(key, n_categories, d_model, n_layers):
    keys = jax.random.split(key, n_layers + 1)
    pos = 0.01 * jax.random.normal(keys[0], (n_categories, d_model), jnp.float32)
    std = 0.02
    layers = []
    for li in range(n_layers):
        ks = jax.random.split(keys[li + 1], 8)
        layers.append({
            "ln1_g": jnp.ones((1, d_model), jnp.float32),
            "ln1_b": jnp.zeros((1, d_model), jnp.float32),
            # in_proj_weight is (3D, D) in PyTorch; stored transposed, bf16 for the MXU.
            "wqkv_t": (std * jax.random.normal(ks[0], (d_model, 3 * d_model))).astype(jnp.bfloat16),
            "bqkv": std * jax.random.normal(ks[1], (1, 3 * d_model), jnp.float32),
            "wo_t": (std * jax.random.normal(ks[2], (d_model, d_model))).astype(jnp.bfloat16),
            "bo": std * jax.random.normal(ks[3], (1, d_model), jnp.float32),
            "ln2_g": jnp.ones((1, d_model), jnp.float32),
            "ln2_b": jnp.zeros((1, d_model), jnp.float32),
            "wfc_t": (std * jax.random.normal(ks[4], (d_model, 4 * d_model))).astype(jnp.bfloat16),
            "bfc": std * jax.random.normal(ks[5], (1, 4 * d_model), jnp.float32),
            "wproj_t": (std * jax.random.normal(ks[6], (4 * d_model, d_model))).astype(jnp.bfloat16),
            "bproj": std * jax.random.normal(ks[7], (1, d_model), jnp.float32),
        })
    return {"pos": pos, "layers": layers}


if __name__ == "__main__":
    B, S, D, H, L = 2, 8, 32, 4, 2        # batch, n_categories(seq), d_model, heads, layers
    key = jax.random.PRNGKey(0)
    k_x, k_m, k_p = jax.random.split(key, 3)
    embeddings = jax.random.normal(k_x, (B, S, D), jnp.float32)
    input_mask = (jax.random.uniform(k_m, (B, S)) > 0.25).astype(jnp.float32)
    params = init_params(k_p, S, D, L)

    fwd = jax.jit(outfits_transformer, static_argnums=(3,))
    out = jax.block_until_ready(fwd(embeddings, input_mask, params, H))

    ref = _reference(embeddings, input_mask, params, H)
    assert out.shape == (B, S, D)
    err = jnp.max(jnp.abs(out - ref))
    assert jnp.allclose(out, ref, atol=3e-2, rtol=3e-2), f"max abs err {err}"
    print("KERNEL_OK")
</pallas_src>

<mosaic_0001>
module attributes {stable_mosaic.version = 11 : i64} {
  func.func @_rab_kernel(%arg0: i32, %arg1: memref<1x8x32xf32, #tpu.memory_space<vmem>>, %arg2: memref<1x4x8xf32, #tpu.memory_space<vmem>>, %arg3: memref<1x32xf32, #tpu.memory_space<vmem>>, %arg4: memref<1x32xf32, #tpu.memory_space<vmem>>, %arg5: memref<32x96xbf16, #tpu.memory_space<vmem>>, %arg6: memref<1x96xf32, #tpu.memory_space<vmem>>, %arg7: memref<32x32xbf16, #tpu.memory_space<vmem>>, %arg8: memref<1x32xf32, #tpu.memory_space<vmem>>, %arg9: memref<1x32xf32, #tpu.memory_space<vmem>>, %arg10: memref<1x32xf32, #tpu.memory_space<vmem>>, %arg11: memref<32x128xbf16, #tpu.memory_space<vmem>>, %arg12: memref<1x128xf32, #tpu.memory_space<vmem>>, %arg13: memref<128x32xbf16, #tpu.memory_space<vmem>>, %arg14: memref<1x32xf32, #tpu.memory_space<vmem>>, %arg15: memref<1x8x32xf32, #tpu.memory_space<vmem>>) attributes {dimension_semantics = [#tpu.dimension_semantics<parallel>], iteration_bounds = array<i64: 2>, scalar_prefetch = 0 : i64, scratch_operands = 0 : i64, tpu.core_type = #tpu.core_type<tc>, window_params = [{transform_indices = @transform_0, window_bounds = array<i64: 1, 8, 32>}, {transform_indices = @transform_1, window_bounds = array<i64: 1, 4, 8>}, {pipeline_mode = #tpu.pipeline_mode<synchronous>, transform_indices = @transform_2, window_bounds = array<i64: 1, 32>}, {pipeline_mode = #tpu.pipeline_mode<synchronous>, transform_indices = @transform_3, window_bounds = array<i64: 1, 32>}, {pipeline_mode = #tpu.pipeline_mode<synchronous>, transform_indices = @transform_4, window_bounds = array<i64: 32, 96>}, {pipeline_mode = #tpu.pipeline_mode<synchronous>, transform_indices = @transform_5, window_bounds = array<i64: 1, 96>}, {pipeline_mode = #tpu.pipeline_mode<synchronous>, transform_indices = @transform_6, window_bounds = array<i64: 32, 32>}, {pipeline_mode = #tpu.pipeline_mode<synchronous>, transform_indices = @transform_7, window_bounds = array<i64: 1, 32>}, {pipeline_mode = #tpu.pipeline_mode<synchronous>, transform_indices = @transform_8, window_bounds = array<i64: 1, 32>}, {pipeline_mode = #tpu.pipeline_mode<synchronous>, transform_indices = @transform_9, window_bounds = array<i64: 1, 32>}, {pipeline_mode = #tpu.pipeline_mode<synchronous>, transform_indices = @transform_10, window_bounds = array<i64: 32, 128>}, {pipeline_mode = #tpu.pipeline_mode<synchronous>, transform_indices = @transform_11, window_bounds = array<i64: 1, 128>}, {pipeline_mode = #tpu.pipeline_mode<synchronous>, transform_indices = @transform_12, window_bounds = array<i64: 128, 32>}, {pipeline_mode = #tpu.pipeline_mode<synchronous>, transform_indices = @transform_13, window_bounds = array<i64: 1, 32>}, {transform_indices = @transform_14, window_bounds = array<i64: 1, 8, 32>}]} {
    %c0 = arith.constant 0 : index
    %c0_0 = arith.constant 0 : index
    %c0_1 = arith.constant 0 : index
    %0 = vector.load %arg1[%c0, %c0_0, %c0_1] : memref<1x8x32xf32, #tpu.memory_space<vmem>>, vector<1x8x32xf32>
    %1 = vector.shape_cast %0 : vector<1x8x32xf32> to vector<8x32xf32>
    %cst = arith.constant dense<0.000000e+00> : vector<8xf32>
    %2 = vector.multi_reduction <add>, %1, %cst [1] : vector<8x32xf32> to vector<8xf32>
    %3 = vector.shape_cast %2 : vector<8xf32> to vector<8x1xf32>
    %cst_2 = arith.constant 3.200000e+01 : f32
    %4 = vector.broadcast %cst_2 : f32 to vector<8x1xf32>
    %5 = arith.divf %3, %4 : vector<8x1xf32>
    %6 = vector.broadcast %5 : vector<8x1xf32> to vector<8x32xf32>
    %7 = arith.subf %1, %6 : vector<8x32xf32>
    %8 = arith.mulf %7, %7 : vector<8x32xf32>
    %cst_3 = arith.constant dense<0.000000e+00> : vector<8xf32>
    %9 = vector.multi_reduction <add>, %8, %cst_3 [1] : vector<8x32xf32> to vector<8xf32>
    %10 = vector.shape_cast %9 : vector<8xf32> to vector<8x1xf32>
    %cst_4 = arith.constant 3.200000e+01 : f32
    %11 = vector.broadcast %cst_4 : f32 to vector<8x1xf32>
    %12 = arith.divf %10, %11 : vector<8x1xf32>
    %13 = vector.broadcast %5 : vector<8x1xf32> to vector<8x32xf32>
    %14 = arith.subf %1, %13 : vector<8x32xf32>
    %cst_5 = arith.constant 9.99999974E-6 : f32
    %15 = vector.broadcast %cst_5 : f32 to vector<8x1xf32>
    %16 = arith.addf %12, %15 : vector<8x1xf32>
    %17 = math.rsqrt %16 : vector<8x1xf32>
    %18 = vector.broadcast %17 : vector<8x1xf32> to vector<8x32xf32>
    %19 = arith.mulf %14, %18 : vector<8x32xf32>
    %c0_6 = arith.constant 0 : index
    %c0_7 = arith.constant 0 : index
    %20 = vector.load %arg3[%c0_6, %c0_7] : memref<1x32xf32, #tpu.memory_space<vmem>>, vector<1x32xf32>
    %21 = vector.broadcast %20 : vector<1x32xf32> to vector<8x32xf32>
    %22 = arith.mulf %19, %21 : vector<8x32xf32>
    %c0_8 = arith.constant 0 : index
    %c0_9 = arith.constant 0 : index
    %23 = vector.load %arg4[%c0_8, %c0_9] : memref<1x32xf32, #tpu.memory_space<vmem>>, vector<1x32xf32>
    %24 = vector.broadcast %23 : vector<1x32xf32> to vector<8x32xf32>
    %25 = arith.addf %22, %24 : vector<8x32xf32>
    %26 = arith.truncf %25 : vector<8x32xf32> to vector<8x32xbf16>
    %c0_10 = arith.constant 0 : index
    %c0_11 = arith.constant 0 : index
    %27 = vector.load %arg5[%c0_10, %c0_11] : memref<32x96xbf16, #tpu.memory_space<vmem>>, vector<32x96xbf16>
    %cst_12 = arith.constant dense<0.000000e+00> : vector<8x96xf32>
    %28 = tpu.matmul %26, %27, %cst_12 {dimension_numbers = #tpu.dot_dimension_numbers<[1], [0], [0], [1], [0, 0, 1, 1], [], []>} : vector<8x32xbf16>, vector<32x96xbf16>, vector<8x96xf32> -> vector<8x96xf32>
    %c0_13 = arith.constant 0 : index
    %c0_14 = arith.constant 0 : index
    %29 = vector.load %arg6[%c0_13, %c0_14] : memref<1x96xf32, #tpu.memory_space<vmem>>, vector<1x96xf32>
    %30 = vector.broadcast %29 : vector<1x96xf32> to vector<8x96xf32>
    %31 = arith.addf %28, %30 : vector<8x96xf32>
    %32 = vector.shape_cast %31 : vector<8x96xf32> to vector<1x8x96xf32>
    %c0_15 = arith.constant 0 : index
    %c0_16 = arith.constant 0 : index
    %c0_17 = arith.constant 0 : index
    %33 = vector.load %arg2[%c0_15, %c0_16, %c0_17] : memref<1x4x8xf32, #tpu.memory_space<vmem>>, vector<1x4x8xf32>
    %cst_18 = arith.constant 0.000000e+00 : f32
    %34 = vector.broadcast %cst_18 : f32 to vector<8x32xf32>
    %c0_19 = arith.constant 0 : index
    %c0_20 = arith.constant 0 : index
    %35 = vector.load %arg8[%c0_19, %c0_20] : memref<1x32xf32, #tpu.memory_space<vmem>>, vector<1x32xf32>
    %36 = vector.broadcast %35 : vector<1x32xf32> to vector<8x32xf32>
    %37 = arith.addf %34, %36 : vector<8x32xf32>
    %38 = vector.extract_strided_slice %32 {offsets = [0, 0, 0], sizes = [1, 8, 8], strides = [1, 1, 1]} : vector<1x8x96xf32> to vector<1x8x8xf32>
    %39 = arith.truncf %38 : vector<1x8x8xf32> to vector<1x8x8xbf16>
    %40 = vector.extract_strided_slice %32 {offsets = [0, 0, 32], sizes = [1, 8, 8], strides = [1, 1, 1]} : vector<1x8x96xf32> to vector<1x8x8xf32>
    %41 = arith.truncf %40 : vector<1x8x8xf32> to vector<1x8x8xbf16>
    %42 = vector.extract_strided_slice %32 {offsets = [0, 0, 64], sizes = [1, 8, 8], strides = [1, 1, 1]} : vector<1x8x96xf32> to vector<1x8x8xf32>
    %43 = arith.truncf %42 : vector<1x8x8xf32> to vector<1x8x8xbf16>
    "tpu.trace_start"() <{level = 10 : i32, message = "bqd,bkd->bqk"}> : () -> ()
    %cst_21 = arith.constant dense<0.000000e+00> : vector<1x8x8xf32>
    %44 = tpu.matmul %39, %41, %cst_21 {dimension_numbers = #tpu.dot_dimension_numbers<[2], [2], [1], [1], [0, 0, 0, 1, 1, 1], [0], [0]>} : vector<1x8x8xbf16>, vector<1x8x8xbf16>, vector<1x8x8xf32> -> vector<1x8x8xf32>
    "tpu.trace_stop"() : () -> ()
    %45 = vector.extract_strided_slice %33 {offsets = [0, 0, 0], sizes = [1, 1, 8], strides = [1, 1, 1]} : vector<1x4x8xf32> to vector<1x1x8xf32>
    %46 = vector.shape_cast %45 : vector<1x1x8xf32> to vector<1x8xf32>
    %47 = vector.shape_cast %46 : vector<1x8xf32> to vector<1x8x1xf32>
    %48 = vector.extract_strided_slice %33 {offsets = [0, 0, 0], sizes = [1, 1, 8], strides = [1, 1, 1]} : vector<1x4x8xf32> to vector<1x1x8xf32>
    %49 = vector.shape_cast %48 : vector<1x1x8xf32> to vector<1x8xf32>
    %50 = vector.shape_cast %49 : vector<1x8xf32> to vector<1x1x8xf32>
    %51 = vector.broadcast %47 : vector<1x8x1xf32> to vector<1x8x8xf32>
    %52 = vector.broadcast %50 : vector<1x1x8xf32> to vector<1x8x8xf32>
    %53 = arith.mulf %51, %52 : vector<1x8x8xf32>
    %54 = arith.addf %44, %53 : vector<1x8x8xf32>
    %cst_22 = arith.constant dense<0xFF800000> : vector<1x8xf32>
    %55 = vector.multi_reduction <maximumf>, %54, %cst_22 [2] : vector<1x8x8xf32> to vector<1x8xf32>
    %56 = vector.shape_cast %55 : vector<1x8xf32> to vector<1x8x1xf32>
    %57 = vector.broadcast %56 : vector<1x8x1xf32> to vector<1x8x8xf32>
    %58 = arith.subf %54, %57 : vector<1x8x8xf32>
    %59 = math.exp %58 : vector<1x8x8xf32>
    %cst_23 = arith.constant dense<0.000000e+00> : vector<1x8xf32>
    %60 = vector.multi_reduction <add>, %59, %cst_23 [2] : vector<1x8x8xf32> to vector<1x8xf32>
    %61 = vector.shape_cast %60 : vector<1x8xf32> to vector<1x8x1xf32>
    %62 = tpu.reciprocal %61 {approx = true} : vector<1x8x1xf32> -> vector<1x8x1xf32>
    %63 = vector.broadcast %62 : vector<1x8x1xf32> to vector<1x8x8xf32>
    %64 = arith.mulf %59, %63 : vector<1x8x8xf32>
    %65 = arith.truncf %64 : vector<1x8x8xf32> to vector<1x8x8xbf16>
    "tpu.trace_start"() <{level = 10 : i32, message = "bqk,bkd->bqd"}> : () -> ()
    %cst_24 = arith.constant dense<0.000000e+00> : vector<1x8x8xf32>
    %66 = tpu.matmul %65, %43, %cst_24 {dimension_numbers = #tpu.dot_dimension_numbers<[2], [1], [1], [2], [0, 0, 0, 1, 1, 2], [0], [0]>} : vector<1x8x8xbf16>, vector<1x8x8xbf16>, vector<1x8x8xf32> -> vector<1x8x8xf32>
    "tpu.trace_stop"() : () -> ()
    %67 = vector.shape_cast %66 : vector<1x8x8xf32> to vector<8x8xf32>
    %68 = arith.truncf %67 : vector<8x8xf32> to vector<8x8xbf16>
    %c0_25 = arith.constant 0 : index
    %c0_26 = arith.constant 0 : index
    %69 = vector.load %arg7[%c0_25, %c0_26] : memref<32x32xbf16, #tpu.memory_space<vmem>>, vector<8x32xbf16>
    %cst_27 = arith.constant dense<0.000000e+00> : vector<8x32xf32>
    %70 = tpu.matmul %68, %69, %cst_27 {dimension_numbers = #tpu.dot_dimension_numbers<[1], [0], [0], [1], [0, 0, 1, 1], [], []>} : vector<8x8xbf16>, vector<8x32xbf16>, vector<8x32xf32> -> vector<8x32xf32>
    %71 = arith.addf %37, %70 : vector<8x32xf32>
    %72 = vector.extract_strided_slice %32 {offsets = [0, 0, 8], sizes = [1, 8, 8], strides = [1, 1, 1]} : vector<1x8x96xf32> to vector<1x8x8xf32>
    %73 = arith.truncf %72 : vector<1x8x8xf32> to vector<1x8x8xbf16>
    %74 = vector.extract_strided_slice %32 {offsets = [0, 0, 40], sizes = [1, 8, 8], strides = [1, 1, 1]} : vector<1x8x96xf32> to vector<1x8x8xf32>
    %75 = arith.truncf %74 : vector<1x8x8xf32> to vector<1x8x8xbf16>
    %76 = vector.extract_strided_slice %32 {offsets = [0, 0, 72], sizes = [1, 8, 8], strides = [1, 1, 1]} : vector<1x8x96xf32> to vector<1x8x8xf32>
    %77 = arith.truncf %76 : vector<1x8x8xf32> to vector<1x8x8xbf16>
    "tpu.trace_start"() <{level = 10 : i32, message = "bqd,bkd->bqk"}> : () -> ()
    %cst_28 = arith.constant dense<0.000000e+00> : vector<1x8x8xf32>
    %78 = tpu.matmul %73, %75, %cst_28 {dimension_numbers = #tpu.dot_dimension_numbers<[2], [2], [1], [1], [0, 0, 0, 1, 1, 1], [0], [0]>} : vector<1x8x8xbf16>, vector<1x8x8xbf16>, vector<1x8x8xf32> -> vector<1x8x8xf32>
    "tpu.trace_stop"() : () -> ()
    %79 = vector.extract_strided_slice %33 {offsets = [0, 1, 0], sizes = [1, 1, 8], strides = [1, 1, 1]} : vector<1x4x8xf32> to vector<1x1x8xf32>
    %80 = vector.shape_cast %79 : vector<1x1x8xf32> to vector<1x8xf32>
    %81 = vector.shape_cast %80 : vector<1x8xf32> to vector<1x8x1xf32>
    %82 = vector.extract_strided_slice %33 {offsets = [0, 1, 0], sizes = [1, 1, 8], strides = [1, 1, 1]} : vector<1x4x8xf32> to vector<1x1x8xf32>
    %83 = vector.shape_cast %82 : vector<1x1x8xf32> to vector<1x8xf32>
    %84 = vector.shape_cast %83 : vector<1x8xf32> to vector<1x1x8xf32>
    %85 = vector.broadcast %81 : vector<1x8x1xf32> to vector<1x8x8xf32>
    %86 = vector.broadcast %84 : vector<1x1x8xf32> to vector<1x8x8xf32>
    %87 = arith.mulf %85, %86 : vector<1x8x8xf32>
    %88 = arith.addf %78, %87 : vector<1x8x8xf32>
    %cst_29 = arith.constant dense<0xFF800000> : vector<1x8xf32>
    %89 = vector.multi_reduction <maximumf>, %88, %cst_29 [2] : vector<1x8x8xf32> to vector<1x8xf32>
    %90 = vector.shape_cast %89 : vector<1x8xf32> to vector<1x8x1xf32>
    %91 = vector.broadcast %90 : vector<1x8x1xf32> to vector<1x8x8xf32>
    %92 = arith.subf %88, %91 : vector<1x8x8xf32>
    %93 = math.exp %92 : vector<1x8x8xf32>
    %cst_30 = arith.constant dense<0.000000e+00> : vector<1x8xf32>
    %94 = vector.multi_reduction <add>, %93, %cst_30 [2] : vector<1x8x8xf32> to vector<1x8xf32>
    %95 = vector.shape_cast %94 : vector<1x8xf32> to vector<1x8x1xf32>
    %96 = tpu.reciprocal %95 {approx = true} : vector<1x8x1xf32> -> vector<1x8x1xf32>
    %97 = vector.broadcast %96 : vector<1x8x1xf32> to vector<1x8x8xf32>
    %98 = arith.mulf %93, %97 : vector<1x8x8xf32>
    %99 = arith.truncf %98 : vector<1x8x8xf32> to vector<1x8x8xbf16>
    "tpu.trace_start"() <{level = 10 : i32, message = "bqk,bkd->bqd"}> : () -> ()
    %cst_31 = arith.constant dense<0.000000e+00> : vector<1x8x8xf32>
    %100 = tpu.matmul %99, %77, %cst_31 {dimension_numbers = #tpu.dot_dimension_numbers<[2], [1], [1], [2], [0, 0, 0, 1, 1, 2], [0], [0]>} : vector<1x8x8xbf16>, vector<1x8x8xbf16>, vector<1x8x8xf32> -> vector<1x8x8xf32>
    "tpu.trace_stop"() : () -> ()
    %101 = vector.shape_cast %100 : vector<1x8x8xf32> to vector<8x8xf32>
    %102 = arith.truncf %101 : vector<8x8xf32> to vector<8x8xbf16>
    %c8 = arith.constant 8 : index
    %c0_32 = arith.constant 0 : index
    %103 = vector.load %arg7[%c8, %c0_32] : memref<32x32xbf16, #tpu.memory_space<vmem>>, vector<8x32xbf16>
    %cst_33 = arith.constant dense<0.000000e+00> : vector<8x32xf32>
    %104 = tpu.matmul %102, %103, %cst_33 {dimension_numbers = #tpu.dot_dimension_numbers<[1], [0], [0], [1], [0, 0, 1, 1], [], []>} : vector<8x8xbf16>, vector<8x32xbf16>, vector<8x32xf32> -> vector<8x32xf32>
    %105 = arith.addf %71, %104 : vector<8x32xf32>
    %106 = vector.extract_strided_slice %32 {offsets = [0, 0, 16], sizes = [1, 8, 8], strides = [1, 1, 1]} : vector<1x8x96xf32> to vector<1x8x8xf32>
    %107 = arith.truncf %106 : vector<1x8x8xf32> to vector<1x8x8xbf16>
    %108 = vector.extract_strided_slice %32 {offsets = [0, 0, 48], sizes = [1, 8, 8], strides = [1, 1, 1]} : vector<1x8x96xf32> to vector<1x8x8xf32>
    %109 = arith.truncf %108 : vector<1x8x8xf32> to vector<1x8x8xbf16>
    %110 = vector.extract_strided_slice %32 {offsets = [0, 0, 80], sizes = [1, 8, 8], strides = [1, 1, 1]} : vector<1x8x96xf32> to vector<1x8x8xf32>
    %111 = arith.truncf %110 : vector<1x8x8xf32> to vector<1x8x8xbf16>
    "tpu.trace_start"() <{level = 10 : i32, message = "bqd,bkd->bqk"}> : () -> ()
    %cst_34 = arith.constant dense<0.000000e+00> : vector<1x8x8xf32>
    %112 = tpu.matmul %107, %109, %cst_34 {dimension_numbers = #tpu.dot_dimension_numbers<[2], [2], [1], [1], [0, 0, 0, 1, 1, 1], [0], [0]>} : vector<1x8x8xbf16>, vector<1x8x8xbf16>, vector<1x8x8xf32> -> vector<1x8x8xf32>
    "tpu.trace_stop"() : () -> ()
    %113 = vector.extract_strided_slice %33 {offsets = [0, 2, 0], sizes = [1, 1, 8], strides = [1, 1, 1]} : vector<1x4x8xf32> to vector<1x1x8xf32>
    %114 = vector.shape_cast %113 : vector<1x1x8xf32> to vector<1x8xf32>
    %115 = vector.shape_cast %114 : vector<1x8xf32> to vector<1x8x1xf32>
    %116 = vector.extract_strided_slice %33 {offsets = [0, 2, 0], sizes = [1, 1, 8], strides = [1, 1, 1]} : vector<1x4x8xf32> to vector<1x1x8xf32>
    %117 = vector.shape_cast %116 : vector<1x1x8xf32> to vector<1x8xf32>
    %118 = vector.shape_cast %117 : vector<1x8xf32> to vector<1x1x8xf32>
    %119 = vector.broadcast %115 : vector<1x8x1xf32> to vector<1x8x8xf32>
    %120 = vector.broadcast %118 : vector<1x1x8xf32> to vector<1x8x8xf32>
    %121 = arith.mulf %119, %120 : vector<1x8x8xf32>
    %122 = arith.addf %112, %121 : vector<1x8x8xf32>
    %cst_35 = arith.constant dense<0xFF800000> : vector<1x8xf32>
    %123 = vector.multi_reduction <maximumf>, %122, %cst_35 [2] : vector<1x8x8xf32> to vector<1x8xf32>
    %124 = vector.shape_cast %123 : vector<1x8xf32> to vector<1x8x1xf32>
    %125 = vector.broadcast %124 : vector<1x8x1xf32> to vector<1x8x8xf32>
    %126 = arith.subf %122, %125 : vector<1x8x8xf32>
    %127 = math.exp %126 : vector<1x8x8xf32>
    %cst_36 = arith.constant dense<0.000000e+00> : vector<1x8xf32>
    %128 = vector.multi_reduction <add>, %127, %cst_36 [2] : vector<1x8x8xf32> to vector<1x8xf32>
    %129 = vector.shape_cast %128 : vector<1x8xf32> to vector<1x8x1xf32>
    %130 = tpu.reciprocal %129 {approx = true} : vector<1x8x1xf32> -> vector<1x8x1xf32>
    %131 = vector.broadcast %130 : vector<1x8x1xf32> to vector<1x8x8xf32>
    %132 = arith.mulf %127, %131 : vector<1x8x8xf32>
    %133 = arith.truncf %132 : vector<1x8x8xf32> to vector<1x8x8xbf16>
    "tpu.trace_start"() <{level = 10 : i32, message = "bqk,bkd->bqd"}> : () -> ()
    %cst_37 = arith.constant dense<0.000000e+00> : vector<1x8x8xf32>
    %134 = tpu.matmul %133, %111, %cst_37 {dimension_numbers = #tpu.dot_dimension_numbers<[2], [1], [1], [2], [0, 0, 0, 1, 1, 2], [0], [0]>} : vector<1x8x8xbf16>, vector<1x8x8xbf16>, vector<1x8x8xf32> -> vector<1x8x8xf32>
    "tpu.trace_stop"() : () -> ()
    %135 = vector.shape_cast %134 : vector<1x8x8xf32> to vector<8x8xf32>
    %136 = arith.truncf %135 : vector<8x8xf32> to vector<8x8xbf16>
    %c16 = arith.constant 16 : index
    %c0_38 = arith.constant 0 : index
    %137 = vector.load %arg7[%c16, %c0_38] : memref<32x32xbf16, #tpu.memory_space<vmem>>, vector<8x32xbf16>
    %cst_39 = arith.constant dense<0.000000e+00> : vector<8x32xf32>
    %138 = tpu.matmul %136, %137, %cst_39 {dimension_numbers = #tpu.dot_dimension_numbers<[1], [0], [0], [1], [0, 0, 1, 1], [], []>} : vector<8x8xbf16>, vector<8x32xbf16>, vector<8x32xf32> -> vector<8x32xf32>
    %139 = arith.addf %105, %138 : vector<8x32xf32>
    %140 = vector.extract_strided_slice %32 {offsets = [0, 0, 24], sizes = [1, 8, 8], strides = [1, 1, 1]} : vector<1x8x96xf32> to vector<1x8x8xf32>
    %141 = arith.truncf %140 : vector<1x8x8xf32> to vector<1x8x8xbf16>
    %142 = vector.extract_strided_slice %32 {offsets = [0, 0, 56], sizes = [1, 8, 8], strides = [1, 1, 1]} : vector<1x8x96xf32> to vector<1x8x8xf32>
    %143 = arith.truncf %142 : vector<1x8x8xf32> to vector<1x8x8xbf16>
    %144 = vector.extract_strided_slice %32 {offsets = [0, 0, 88], sizes = [1, 8, 8], strides = [1, 1, 1]} : vector<1x8x96xf32> to vector<1x8x8xf32>
    %145 = arith.truncf %144 : vector<1x8x8xf32> to vector<1x8x8xbf16>
    "tpu.trace_start"() <{level = 10 : i32, message = "bqd,bkd->bqk"}> : () -> ()
    %cst_40 = arith.constant dense<0.000000e+00> : vector<1x8x8xf32>
    %146 = tpu.matmul %141, %143, %cst_40 {dimension_numbers = #tpu.dot_dimension_numbers<[2], [2], [1], [1], [0, 0, 0, 1, 1, 1], [0], [0]>} : vector<1x8x8xbf16>, vector<1x8x8xbf16>, vector<1x8x8xf32> -> vector<1x8x8xf32>
    "tpu.trace_stop"() : () -> ()
    %147 = vector.extract_strided_slice %33 {offsets = [0, 3, 0], sizes = [1, 1, 8], strides = [1, 1, 1]} : vector<1x4x8xf32> to vector<1x1x8xf32>
    %148 = vector.shape_cast %147 : vector<1x1x8xf32> to vector<1x8xf32>
    %149 = vector.shape_cast %148 : vector<1x8xf32> to vector<1x8x1xf32>
    %150 = vector.extract_strided_slice %33 {offsets = [0, 3, 0], sizes = [1, 1, 8], strides = [1, 1, 1]} : vector<1x4x8xf32> to vector<1x1x8xf32>
    %151 = vector.shape_cast %150 : vector<1x1x8xf32> to vector<1x8xf32>
    %152 = vector.shape_cast %151 : vector<1x8xf32> to vector<1x1x8xf32>
    %153 = vector.broadcast %149 : vector<1x8x1xf32> to vector<1x8x8xf32>
    %154 = vector.broadcast %152 : vector<1x1x8xf32> to vector<1x8x8xf32>
    %155 = arith.mulf %153, %154 : vector<1x8x8xf32>
    %156 = arith.addf %146, %155 : vector<1x8x8xf32>
    %cst_41 = arith.constant dense<0xFF800000> : vector<1x8xf32>
    %157 = vector.multi_reduction <maximumf>, %156, %cst_41 [2] : vector<1x8x8xf32> to vector<1x8xf32>
    %158 = vector.shape_cast %157 : vector<1x8xf32> to vector<1x8x1xf32>
    %159 = vector.broadcast %158 : vector<1x8x1xf32> to vector<1x8x8xf32>
    %160 = arith.subf %156, %159 : vector<1x8x8xf32>
    %161 = math.exp %160 : vector<1x8x8xf32>
    %cst_42 = arith.constant dense<0.000000e+00> : vector<1x8xf32>
    %162 = vector.multi_reduction <add>, %161, %cst_42 [2] : vector<1x8x8xf32> to vector<1x8xf32>
    %163 = vector.shape_cast %162 : vector<1x8xf32> to vector<1x8x1xf32>
    %164 = tpu.reciprocal %163 {approx = true} : vector<1x8x1xf32> -> vector<1x8x1xf32>
    %165 = vector.broadcast %164 : vector<1x8x1xf32> to vector<1x8x8xf32>
    %166 = arith.mulf %161, %165 : vector<1x8x8xf32>
    %167 = arith.truncf %166 : vector<1x8x8xf32> to vector<1x8x8xbf16>
    "tpu.trace_start"() <{level = 10 : i32, message = "bqk,bkd->bqd"}> : () -> ()
    %cst_43 = arith.constant dense<0.000000e+00> : vector<1x8x8xf32>
    %168 = tpu.matmul %167, %145, %cst_43 {dimension_numbers = #tpu.dot_dimension_numbers<[2], [1], [1], [2], [0, 0, 0, 1, 1, 2], [0], [0]>} : vector<1x8x8xbf16>, vector<1x8x8xbf16>, vector<1x8x8xf32> -> vector<1x8x8xf32>
    "tpu.trace_stop"() : () -> ()
    %169 = vector.shape_cast %168 : vector<1x8x8xf32> to vector<8x8xf32>
    %170 = arith.truncf %169 : vector<8x8xf32> to vector<8x8xbf16>
    %c24 = arith.constant 24 : index
    %c0_44 = arith.constant 0 : index
    %171 = vector.load %arg7[%c24, %c0_44] : memref<32x32xbf16, #tpu.memory_space<vmem>>, vector<8x32xbf16>
    %cst_45 = arith.constant dense<0.000000e+00> : vector<8x32xf32>
    %172 = tpu.matmul %170, %171, %cst_45 {dimension_numbers = #tpu.dot_dimension_numbers<[1], [0], [0], [1], [0, 0, 1, 1], [], []>} : vector<8x8xbf16>, vector<8x32xbf16>, vector<8x32xf32> -> vector<8x32xf32>
    %173 = arith.addf %139, %172 : vector<8x32xf32>
    %174 = arith.addf %1, %173 : vector<8x32xf32>
    %cst_46 = arith.constant dense<0.000000e+00> : vector<8xf32>
    %175 = vector.multi_reduction <add>, %174, %cst_46 [1] : vector<8x32xf32> to vector<8xf32>
    %176 = vector.shape_cast %175 : vector<8xf32> to vector<8x1xf32>
    %cst_47 = arith.constant 3.200000e+01 : f32
    %177 = vector.broadcast %cst_47 : f32 to vector<8x1xf32>
    %178 = arith.divf %176, %177 : vector<8x1xf32>
    %179 = vector.broadcast %178 : vector<8x1xf32> to vector<8x32xf32>
    %180 = arith.subf %174, %179 : vector<8x32xf32>
    %181 = arith.mulf %180, %180 : vector<8x32xf32>
    %cst_48 = arith.constant dense<0.000000e+00> : vector<8xf32>
    %182 = vector.multi_reduction <add>, %181, %cst_48 [1] : vector<8x32xf32> to vector<8xf32>
    %183 = vector.shape_cast %182 : vector<8xf32> to vector<8x1xf32>
    %cst_49 = arith.constant 3.200000e+01 : f32
    %184 = vector.broadcast %cst_49 : f32 to vector<8x1xf32>
    %185 = arith.divf %183, %184 : vector<8x1xf32>
    %186 = vector.broadcast %178 : vector<8x1xf32> to vector<8x32xf32>
    %187 = arith.subf %174, %186 : vector<8x32xf32>
    %cst_50 = arith.constant 9.99999974E-6 : f32
    %188 = vector.broadcast %cst_50 : f32 to vector<8x1xf32>
    %189 = arith.addf %185, %188 : vector<8x1xf32>
    %190 = math.rsqrt %189 : vector<8x1xf32>
    %191 = vector.broadcast %190 : vector<8x1xf32> to vector<8x32xf32>
    %192 = arith.mulf %187, %191 : vector<8x32xf32>
    %c0_51 = arith.constant 0 : index
    %c0_52 = arith.constant 0 : index
    %193 = vector.load %arg9[%c0_51, %c0_52] : memref<1x32xf32, #tpu.memory_space<vmem>>, vector<1x32xf32>
    %194 = vector.broadcast %193 : vector<1x32xf32> to vector<8x32xf32>
    %195 = arith.mulf %192, %194 : vector<8x32xf32>
    %c0_53 = arith.constant 0 : index
    %c0_54 = arith.constant 0 : index
    %196 = vector.load %arg10[%c0_53, %c0_54] : memref<1x32xf32, #tpu.memory_space<vmem>>, vector<1x32xf32>
    %197 = vector.broadcast %196 : vector<1x32xf32> to vector<8x32xf32>
    %198 = arith.addf %195, %197 : vector<8x32xf32>
    %199 = arith.truncf %198 : vector<8x32xf32> to vector<8x32xbf16>
    %cst_55 = arith.constant 0.000000e+00 : f32
    %200 = vector.broadcast %cst_55 : f32 to vector<8x32xf32>
    %c0_56 = arith.constant 0 : index
    %c0_57 = arith.constant 0 : index
    %201 = vector.load %arg14[%c0_56, %c0_57] : memref<1x32xf32, #tpu.memory_space<vmem>>, vector<1x32xf32>
    %202 = vector.broadcast %201 : vector<1x32xf32> to vector<8x32xf32>
    %203 = arith.addf %200, %202 : vector<8x32xf32>
    %c0_58 = arith.constant 0 : index
    %c0_59 = arith.constant 0 : index
    %204 = vector.load %arg11[%c0_58, %c0_59] : memref<32x128xbf16, #tpu.memory_space<vmem>>, vector<32x128xbf16>
    %cst_60 = arith.constant dense<0.000000e+00> : vector<8x128xf32>
    %205 = tpu.matmul %199, %204, %cst_60 {dimension_numbers = #tpu.dot_dimension_numbers<[1], [0], [0], [1], [0, 0, 1, 1], [], []>} : vector<8x32xbf16>, vector<32x128xbf16>, vector<8x128xf32> -> vector<8x128xf32>
    %c0_61 = arith.constant 0 : index
    %c0_62 = arith.constant 0 : index
    %206 = vector.load %arg12[%c0_61, %c0_62] : memref<1x128xf32, #tpu.memory_space<vmem>>, vector<1x128xf32>
    %207 = vector.broadcast %206 : vector<1x128xf32> to vector<8x128xf32>
    %208 = arith.addf %205, %207 : vector<8x128xf32>
    %cst_63 = arith.constant 1.702000e+00 : f32
    %209 = vector.broadcast %cst_63 : f32 to vector<8x128xf32>
    %210 = arith.mulf %209, %208 : vector<8x128xf32>
    %211 = arith.negf %210 : vector<8x128xf32>
    %212 = math.exp %211 : vector<8x128xf32>
    %cst_64 = arith.constant 1.000000e+00 : f32
    %213 = vector.broadcast %cst_64 : f32 to vector<8x128xf32>
    %214 = arith.addf %213, %212 : vector<8x128xf32>
    %215 = arith.divf %213, %214 : vector<8x128xf32>
    %216 = arith.mulf %208, %215 : vector<8x128xf32>
    %217 = arith.truncf %216 : vector<8x128xf32> to vector<8x128xbf16>
    %c0_65 = arith.constant 0 : index
    %c0_66 = arith.constant 0 : index
    %218 = vector.load %arg13[%c0_65, %c0_66] : memref<128x32xbf16, #tpu.memory_space<vmem>>, vector<128x32xbf16>
    %cst_67 = arith.constant dense<0.000000e+00> : vector<8x32xf32>
    %219 = tpu.matmul %217, %218, %cst_67 {dimension_numbers = #tpu.dot_dimension_numbers<[1], [0], [0], [1], [0, 0, 1, 1], [], []>} : vector<8x128xbf16>, vector<128x32xbf16>, vector<8x32xf32> -> vector<8x32xf32>
    %220 = arith.addf %203, %219 : vector<8x32xf32>
    %221 = arith.addf %174, %220 : vector<8x32xf32>
    %222 = vector.shape_cast %221 : vector<8x32xf32> to vector<1x8x32xf32>
    %c0_68 = arith.constant 0 : index
    %c0_69 = arith.constant 0 : index
    %c0_70 = arith.constant 0 : index
    %223 = vector.load %arg15[%c0_68, %c0_69, %c0_70] : memref<1x8x32xf32, #tpu.memory_space<vmem>>, vector<1x8x32xf32>
    tpu.vector_store %arg15[%c0_68, %c0_69, %c0_70], %222 {strides = array<i32>} : memref<1x8x32xf32, #tpu.memory_space<vmem>>, vector<1x8x32xf32>,
    return
  }
  func.func @transform_0(%arg0: i32) -> (i32, i32, i32) {
    %c0_i32 = arith.constant 0 : i32
    %c0_i32_0 = arith.constant 0 : i32
    %c0_i32_1 = arith.constant 0 : i32
    return %arg0, %c0_i32, %c0_i32_0 : i32, i32, i32
  }
  func.func @transform_1(%arg0: i32) -> (i32, i32, i32) {
    %c0_i32 = arith.constant 0 : i32
    %c0_i32_0 = arith.constant 0 : i32
    %c0_i32_1 = arith.constant 0 : i32
    return %arg0, %c0_i32, %c0_i32_0 : i32, i32, i32
  }
  func.func @transform_2(%arg0: i32) -> (i32, i32) {
    %c0_i32 = arith.constant 0 : i32
    %c0_i32_0 = arith.constant 0 : i32
    %c0_i32_1 = arith.constant 0 : i32
    return %c0_i32, %c0_i32_0 : i32, i32
  }
  func.func @transform_3(%arg0: i32) -> (i32, i32) {
    %c0_i32 = arith.constant 0 : i32
    %c0_i32_0 = arith.constant 0 : i32
    %c0_i32_1 = arith.constant 0 : i32
    return %c0_i32, %c0_i32_0 : i32, i32
  }
  func.func @transform_4(%arg0: i32) -> (i32, i32) {
    %c0_i32 = arith.constant 0 : i32
    %c0_i32_0 = arith.constant 0 : i32
    %c0_i32_1 = arith.constant 0 : i32
    return %c0_i32, %c0_i32_0 : i32, i32
  }
  func.func @transform_5(%arg0: i32) -> (i32, i32) {
    %c0_i32 = arith.constant 0 : i32
    %c0_i32_0 = arith.constant 0 : i32
    %c0_i32_1 = arith.constant 0 : i32
    return %c0_i32, %c0_i32_0 : i32, i32
  }
  func.func @transform_6(%arg0: i32) -> (i32, i32) {
    %c0_i32 = arith.constant 0 : i32
    %c0_i32_0 = arith.constant 0 : i32
    %c0_i32_1 = arith.constant 0 : i32
    return %c0_i32, %c0_i32_0 : i32, i32
  }
  func.func @transform_7(%arg0: i32) -> (i32, i32) {
    %c0_i32 = arith.constant 0 : i32
    %c0_i32_0 = arith.constant 0 : i32
    %c0_i32_1 = arith.constant 0 : i32
    return %c0_i32, %c0_i32_0 : i32, i32
  }
  func.func @transform_8(%arg0: i32) -> (i32, i32) {
    %c0_i32 = arith.constant 0 : i32
    %c0_i32_0 = arith.constant 0 : i32
    %c0_i32_1 = arith.constant 0 : i32
    return %c0_i32, %c0_i32_0 : i32, i32
  }
  func.func @transform_9(%arg0: i32) -> (i32, i32) {
    %c0_i32 = arith.constant 0 : i32
    %c0_i32_0 = arith.constant 0 : i32
    %c0_i32_1 = arith.constant 0 : i32
    return %c0_i32, %c0_i32_0 : i32, i32
  }
  func.func @transform_10(%arg0: i32) -> (i32, i32) {
    %c0_i32 = arith.constant 0 : i32
    %c0_i32_0 = arith.constant 0 : i32
    %c0_i32_1 = arith.constant 0 : i32
    return %c0_i32, %c0_i32_0 : i32, i32
  }
  func.func @transform_11(%arg0: i32) -> (i32, i32) {
    %c0_i32 = arith.constant 0 : i32
    %c0_i32_0 = arith.constant 0 : i32
    %c0_i32_1 = arith.constant 0 : i32
    return %c0_i32, %c0_i32_0 : i32, i32
  }
  func.func @transform_12(%arg0: i32) -> (i32, i32) {
    %c0_i32 = arith.constant 0 : i32
    %c0_i32_0 = arith.constant 0 : i32
    %c0_i32_1 = arith.constant 0 : i32
    return %c0_i32, %c0_i32_0 : i32, i32
  }
  func.func @transform_13(%arg0: i32) -> (i32, i32) {
    %c0_i32 = arith.constant 0 : i32
    %c0_i32_0 = arith.constant 0 : i32
    %c0_i32_1 = arith.constant 0 : i32
    return %c0_i32, %c0_i32_0 : i32, i32
  }
  func.func @transform_14(%arg0: i32) -> (i32, i32, i32) {
    %c0_i32 = arith.constant 0 : i32
    %c0_i32_0 = arith.constant 0 : i32
    %c0_i32_1 = arith.constant 0 : i32
    return %arg0, %c0_i32, %c0_i32_0 : i32, i32, i32
  }
}

module attributes {stable_mosaic.version = 11 : i64} {
  func.func @_rab_kernel(%arg0: i32, %arg1: memref<1x8x32xf32, #tpu.memory_space<vmem>>, %arg2: memref<1x4x8xf32, #tpu.memory_space<vmem>>, %arg3: memref<1x32xf32, #tpu.memory_space<vmem>>, %arg4: memref<1x32xf32, #tpu.memory_space<vmem>>, %arg5: memref<32x96xbf16, #tpu.memory_space<vmem>>, %arg6: memref<1x96xf32, #tpu.memory_space<vmem>>, %arg7: memref<32x32xbf16, #tpu.memory_space<vmem>>, %arg8: memref<1x32xf32, #tpu.memory_space<vmem>>, %arg9: memref<1x32xf32, #tpu.memory_space<vmem>>, %arg10: memref<1x32xf32, #tpu.memory_space<vmem>>, %arg11: memref<32x128xbf16, #tpu.memory_space<vmem>>, %arg12: memref<1x128xf32, #tpu.memory_space<vmem>>, %arg13: memref<128x32xbf16, #tpu.memory_space<vmem>>, %arg14: memref<1x32xf32, #tpu.memory_space<vmem>>, %arg15: memref<1x8x32xf32, #tpu.memory_space<vmem>>) attributes {dimension_semantics = [#tpu.dimension_semantics<parallel>], iteration_bounds = array<i64: 2>, scalar_prefetch = 0 : i64, scratch_operands = 0 : i64, tpu.core_type = #tpu.core_type<tc>, window_params = [{transform_indices = @transform_0, window_bounds = array<i64: 1, 8, 32>}, {transform_indices = @transform_1, window_bounds = array<i64: 1, 4, 8>}, {pipeline_mode = #tpu.pipeline_mode<synchronous>, transform_indices = @transform_2, window_bounds = array<i64: 1, 32>}, {pipeline_mode = #tpu.pipeline_mode<synchronous>, transform_indices = @transform_3, window_bounds = array<i64: 1, 32>}, {pipeline_mode = #tpu.pipeline_mode<synchronous>, transform_indices = @transform_4, window_bounds = array<i64: 32, 96>}, {pipeline_mode = #tpu.pipeline_mode<synchronous>, transform_indices = @transform_5, window_bounds = array<i64: 1, 96>}, {pipeline_mode = #tpu.pipeline_mode<synchronous>, transform_indices = @transform_6, window_bounds = array<i64: 32, 32>}, {pipeline_mode = #tpu.pipeline_mode<synchronous>, transform_indices = @transform_7, window_bounds = array<i64: 1, 32>}, {pipeline_mode = #tpu.pipeline_mode<synchronous>, transform_indices = @transform_8, window_bounds = array<i64: 1, 32>}, {pipeline_mode = #tpu.pipeline_mode<synchronous>, transform_indices = @transform_9, window_bounds = array<i64: 1, 32>}, {pipeline_mode = #tpu.pipeline_mode<synchronous>, transform_indices = @transform_10, window_bounds = array<i64: 32, 128>}, {pipeline_mode = #tpu.pipeline_mode<synchronous>, transform_indices = @transform_11, window_bounds = array<i64: 1, 128>}, {pipeline_mode = #tpu.pipeline_mode<synchronous>, transform_indices = @transform_12, window_bounds = array<i64: 128, 32>}, {pipeline_mode = #tpu.pipeline_mode<synchronous>, transform_indices = @transform_13, window_bounds = array<i64: 1, 32>}, {transform_indices = @transform_14, window_bounds = array<i64: 1, 8, 32>}]} {
    %c0 = arith.constant 0 : index
    %c0_0 = arith.constant 0 : index
    %c0_1 = arith.constant 0 : index
    %0 = vector.load %arg1[%c0, %c0_0, %c0_1] : memref<1x8x32xf32, #tpu.memory_space<vmem>>, vector<1x8x32xf32>
    %1 = vector.shape_cast %0 : vector<1x8x32xf32> to vector<8x32xf32>
    %cst = arith.constant dense<0.000000e+00> : vector<8xf32>
    %2 = vector.multi_reduction <add>, %1, %cst [1] : vector<8x32xf32> to vector<8xf32>
    %3 = vector.shape_cast %2 : vector<8xf32> to vector<8x1xf32>
    %cst_2 = arith.constant 3.200000e+01 : f32
    %4 = vector.broadcast %cst_2 : f32 to vector<8x1xf32>
    %5 = arith.divf %3, %4 : vector<8x1xf32>
    %6 = vector.broadcast %5 : vector<8x1xf32> to vector<8x32xf32>
    %7 = arith.subf %1, %6 : vector<8x32xf32>
    %8 = arith.mulf %7, %7 : vector<8x32xf32>
    %cst_3 = arith.constant dense<0.000000e+00> : vector<8xf32>
    %9 = vector.multi_reduction <add>, %8, %cst_3 [1] : vector<8x32xf32> to vector<8xf32>
    %10 = vector.shape_cast %9 : vector<8xf32> to vector<8x1xf32>
    %cst_4 = arith.constant 3.200000e+01 : f32
    %11 = vector.broadcast %cst_4 : f32 to vector<8x1xf32>
    %12 = arith.divf %10, %11 : vector<8x1xf32>
    %13 = vector.broadcast %5 : vector<8x1xf32> to vector<8x32xf32>
    %14 = arith.subf %1, %13 : vector<8x32xf32>
    %cst_5 = arith.constant 9.99999974E-6 : f32
    %15 = vector.broadcast %cst_5 : f32 to vector<8x1xf32>
    %16 = arith.addf %12, %15 : vector<8x1xf32>
    %17 = math.rsqrt %16 : vector<8x1xf32>
    %18 = vector.broadcast %17 : vector<8x1xf32> to vector<8x32xf32>
    %19 = arith.mulf %14, %18 : vector<8x32xf32>
    %c0_6 = arith.constant 0 : index
    %c0_7 = arith.constant 0 : index
    %20 = vector.load %arg3[%c0_6, %c0_7] : memref<1x32xf32, #tpu.memory_space<vmem>>, vector<1x32xf32>
    %21 = vector.broadcast %20 : vector<1x32xf32> to vector<8x32xf32>
    %22 = arith.mulf %19, %21 : vector<8x32xf32>
    %c0_8 = arith.constant 0 : index
    %c0_9 = arith.constant 0 : index
    %23 = vector.load %arg4[%c0_8, %c0_9] : memref<1x32xf32, #tpu.memory_space<vmem>>, vector<1x32xf32>
    %24 = vector.broadcast %23 : vector<1x32xf32> to vector<8x32xf32>
    %25 = arith.addf %22, %24 : vector<8x32xf32>
    %26 = arith.truncf %25 : vector<8x32xf32> to vector<8x32xbf16>
    %c0_10 = arith.constant 0 : index
    %c0_11 = arith.constant 0 : index
    %27 = vector.load %arg5[%c0_10, %c0_11] : memref<32x96xbf16, #tpu.memory_space<vmem>>, vector<32x96xbf16>
    %cst_12 = arith.constant dense<0.000000e+00> : vector<8x96xf32>
    %28 = tpu.matmul %26, %27, %cst_12 {dimension_numbers = #tpu.dot_dimension_numbers<[1], [0], [0], [1], [0, 0, 1, 1], [], []>} : vector<8x32xbf16>, vector<32x96xbf16>, vector<8x96xf32> -> vector<8x96xf32>
    %c0_13 = arith.constant 0 : index
    %c0_14 = arith.constant 0 : index
    %29 = vector.load %arg6[%c0_13, %c0_14] : memref<1x96xf32, #tpu.memory_space<vmem>>, vector<1x96xf32>
    %30 = vector.broadcast %29 : vector<1x96xf32> to vector<8x96xf32>
    %31 = arith.addf %28, %30 : vector<8x96xf32>
    %32 = vector.shape_cast %31 : vector<8x96xf32> to vector<1x8x96xf32>
    %c0_15 = arith.constant 0 : index
    %c0_16 = arith.constant 0 : index
    %c0_17 = arith.constant 0 : index
    %33 = vector.load %arg2[%c0_15, %c0_16, %c0_17] : memref<1x4x8xf32, #tpu.memory_space<vmem>>, vector<1x4x8xf32>
    %cst_18 = arith.constant 0.000000e+00 : f32
    %34 = vector.broadcast %cst_18 : f32 to vector<8x32xf32>
    %c0_19 = arith.constant 0 : index
    %c0_20 = arith.constant 0 : index
    %35 = vector.load %arg8[%c0_19, %c0_20] : memref<1x32xf32, #tpu.memory_space<vmem>>, vector<1x32xf32>
    %36 = vector.broadcast %35 : vector<1x32xf32> to vector<8x32xf32>
    %37 = arith.addf %34, %36 : vector<8x32xf32>
    %38 = vector.extract_strided_slice %32 {offsets = [0, 0, 0], sizes = [1, 8, 8], strides = [1, 1, 1]} : vector<1x8x96xf32> to vector<1x8x8xf32>
    %39 = arith.truncf %38 : vector<1x8x8xf32> to vector<1x8x8xbf16>
    %40 = vector.extract_strided_slice %32 {offsets = [0, 0, 32], sizes = [1, 8, 8], strides = [1, 1, 1]} : vector<1x8x96xf32> to vector<1x8x8xf32>
    %41 = arith.truncf %40 : vector<1x8x8xf32> to vector<1x8x8xbf16>
    %42 = vector.extract_strided_slice %32 {offsets = [0, 0, 64], sizes = [1, 8, 8], strides = [1, 1, 1]} : vector<1x8x96xf32> to vector<1x8x8xf32>
    %43 = arith.truncf %42 : vector<1x8x8xf32> to vector<1x8x8xbf16>
    "tpu.trace_start"() <{level = 10 : i32, message = "bqd,bkd->bqk"}> : () -> ()
    %cst_21 = arith.constant dense<0.000000e+00> : vector<1x8x8xf32>
    %44 = tpu.matmul %39, %41, %cst_21 {dimension_numbers = #tpu.dot_dimension_numbers<[2], [2], [1], [1], [0, 0, 0, 1, 1, 1], [0], [0]>} : vector<1x8x8xbf16>, vector<1x8x8xbf16>, vector<1x8x8xf32> -> vector<1x8x8xf32>
    "tpu.trace_stop"() : () -> ()
    %45 = vector.extract_strided_slice %33 {offsets = [0, 0, 0], sizes = [1, 1, 8], strides = [1, 1, 1]} : vector<1x4x8xf32> to vector<1x1x8xf32>
    %46 = vector.shape_cast %45 : vector<1x1x8xf32> to vector<1x8xf32>
    %47 = vector.shape_cast %46 : vector<1x8xf32> to vector<1x8x1xf32>
    %48 = vector.extract_strided_slice %33 {offsets = [0, 0, 0], sizes = [1, 1, 8], strides = [1, 1, 1]} : vector<1x4x8xf32> to vector<1x1x8xf32>
    %49 = vector.shape_cast %48 : vector<1x1x8xf32> to vector<1x8xf32>
    %50 = vector.shape_cast %49 : vector<1x8xf32> to vector<1x1x8xf32>
    %51 = vector.broadcast %47 : vector<1x8x1xf32> to vector<1x8x8xf32>
    %52 = vector.broadcast %50 : vector<1x1x8xf32> to vector<1x8x8xf32>
    %53 = arith.mulf %51, %52 : vector<1x8x8xf32>
    %54 = arith.addf %44, %53 : vector<1x8x8xf32>
    %cst_22 = arith.constant dense<0xFF800000> : vector<1x8xf32>
    %55 = vector.multi_reduction <maximumf>, %54, %cst_22 [2] : vector<1x8x8xf32> to vector<1x8xf32>
    %56 = vector.shape_cast %55 : vector<1x8xf32> to vector<1x8x1xf32>
    %57 = vector.broadcast %56 : vector<1x8x1xf32> to vector<1x8x8xf32>
    %58 = arith.subf %54, %57 : vector<1x8x8xf32>
    %59 = math.exp %58 : vector<1x8x8xf32>
    %cst_23 = arith.constant dense<0.000000e+00> : vector<1x8xf32>
    %60 = vector.multi_reduction <add>, %59, %cst_23 [2] : vector<1x8x8xf32> to vector<1x8xf32>
    %61 = vector.shape_cast %60 : vector<1x8xf32> to vector<1x8x1xf32>
    %62 = tpu.reciprocal %61 {approx = true} : vector<1x8x1xf32> -> vector<1x8x1xf32>
    %63 = vector.broadcast %62 : vector<1x8x1xf32> to vector<1x8x8xf32>
    %64 = arith.mulf %59, %63 : vector<1x8x8xf32>
    %65 = arith.truncf %64 : vector<1x8x8xf32> to vector<1x8x8xbf16>
    "tpu.trace_start"() <{level = 10 : i32, message = "bqk,bkd->bqd"}> : () -> ()
    %cst_24 = arith.constant dense<0.000000e+00> : vector<1x8x8xf32>
    %66 = tpu.matmul %65, %43, %cst_24 {dimension_numbers = #tpu.dot_dimension_numbers<[2], [1], [1], [2], [0, 0, 0, 1, 1, 2], [0], [0]>} : vector<1x8x8xbf16>, vector<1x8x8xbf16>, vector<1x8x8xf32> -> vector<1x8x8xf32>
    "tpu.trace_stop"() : () -> ()
    %67 = vector.shape_cast %66 : vector<1x8x8xf32> to vector<8x8xf32>
    %68 = arith.truncf %67 : vector<8x8xf32> to vector<8x8xbf16>
    %c0_25 = arith.constant 0 : index
    %c0_26 = arith.constant 0 : index
    %69 = vector.load %arg7[%c0_25, %c0_26] : memref<32x32xbf16, #tpu.memory_space<vmem>>, vector<8x32xbf16>
    %cst_27 = arith.constant dense<0.000000e+00> : vector<8x32xf32>
    %70 = tpu.matmul %68, %69, %cst_27 {dimension_numbers = #tpu.dot_dimension_numbers<[1], [0], [0], [1], [0, 0, 1, 1], [], []>} : vector<8x8xbf16>, vector<8x32xbf16>, vector<8x32xf32> -> vector<8x32xf32>
    %71 = arith.addf %37, %70 : vector<8x32xf32>
    %72 = vector.extract_strided_slice %32 {offsets = [0, 0, 8], sizes = [1, 8, 8], strides = [1, 1, 1]} : vector<1x8x96xf32> to vector<1x8x8xf32>
    %73 = arith.truncf %72 : vector<1x8x8xf32> to vector<1x8x8xbf16>
    %74 = vector.extract_strided_slice %32 {offsets = [0, 0, 40], sizes = [1, 8, 8], strides = [1, 1, 1]} : vector<1x8x96xf32> to vector<1x8x8xf32>
    %75 = arith.truncf %74 : vector<1x8x8xf32> to vector<1x8x8xbf16>
    %76 = vector.extract_strided_slice %32 {offsets = [0, 0, 72], sizes = [1, 8, 8], strides = [1, 1, 1]} : vector<1x8x96xf32> to vector<1x8x8xf32>
    %77 = arith.truncf %76 : vector<1x8x8xf32> to vector<1x8x8xbf16>
    "tpu.trace_start"() <{level = 10 : i32, message = "bqd,bkd->bqk"}> : () -> ()
    %cst_28 = arith.constant dense<0.000000e+00> : vector<1x8x8xf32>
    %78 = tpu.matmul %73, %75, %cst_28 {dimension_numbers = #tpu.dot_dimension_numbers<[2], [2], [1], [1], [0, 0, 0, 1, 1, 1], [0], [0]>} : vector<1x8x8xbf16>, vector<1x8x8xbf16>, vector<1x8x8xf32> -> vector<1x8x8xf32>
    "tpu.trace_stop"() : () -> ()
    %79 = vector.extract_strided_slice %33 {offsets = [0, 1, 0], sizes = [1, 1, 8], strides = [1, 1, 1]} : vector<1x4x8xf32> to vector<1x1x8xf32>
    %80 = vector.shape_cast %79 : vector<1x1x8xf32> to vector<1x8xf32>
    %81 = vector.shape_cast %80 : vector<1x8xf32> to vector<1x8x1xf32>
    %82 = vector.extract_strided_slice %33 {offsets = [0, 1, 0], sizes = [1, 1, 8], strides = [1, 1, 1]} : vector<1x4x8xf32> to vector<1x1x8xf32>
    %83 = vector.shape_cast %82 : vector<1x1x8xf32> to vector<1x8xf32>
    %84 = vector.shape_cast %83 : vector<1x8xf32> to vector<1x1x8xf32>
    %85 = vector.broadcast %81 : vector<1x8x1xf32> to vector<1x8x8xf32>
    %86 = vector.broadcast %84 : vector<1x1x8xf32> to vector<1x8x8xf32>
    %87 = arith.mulf %85, %86 : vector<1x8x8xf32>
    %88 = arith.addf %78, %87 : vector<1x8x8xf32>
    %cst_29 = arith.constant dense<0xFF800000> : vector<1x8xf32>
    %89 = vector.multi_reduction <maximumf>, %88, %cst_29 [2] : vector<1x8x8xf32> to vector<1x8xf32>
    %90 = vector.shape_cast %89 : vector<1x8xf32> to vector<1x8x1xf32>
    %91 = vector.broadcast %90 : vector<1x8x1xf32> to vector<1x8x8xf32>
    %92 = arith.subf %88, %91 : vector<1x8x8xf32>
    %93 = math.exp %92 : vector<1x8x8xf32>
    %cst_30 = arith.constant dense<0.000000e+00> : vector<1x8xf32>
    %94 = vector.multi_reduction <add>, %93, %cst_30 [2] : vector<1x8x8xf32> to vector<1x8xf32>
    %95 = vector.shape_cast %94 : vector<1x8xf32> to vector<1x8x1xf32>
    %96 = tpu.reciprocal %95 {approx = true} : vector<1x8x1xf32> -> vector<1x8x1xf32>
    %97 = vector.broadcast %96 : vector<1x8x1xf32> to vector<1x8x8xf32>
    %98 = arith.mulf %93, %97 : vector<1x8x8xf32>
    %99 = arith.truncf %98 : vector<1x8x8xf32> to vector<1x8x8xbf16>
    "tpu.trace_start"() <{level = 10 : i32, message = "bqk,bkd->bqd"}> : () -> ()
    %cst_31 = arith.constant dense<0.000000e+00> : vector<1x8x8xf32>
    %100 = tpu.matmul %99, %77, %cst_31 {dimension_numbers = #tpu.dot_dimension_numbers<[2], [1], [1], [2], [0, 0, 0, 1, 1, 2], [0], [0]>} : vector<1x8x8xbf16>, vector<1x8x8xbf16>, vector<1x8x8xf32> -> vector<1x8x8xf32>
    "tpu.trace_stop"() : () -> ()
    %101 = vector.shape_cast %100 : vector<1x8x8xf32> to vector<8x8xf32>
    %102 = arith.truncf %101 : vector<8x8xf32> to vector<8x8xbf16>
    %c8 = arith.constant 8 : index
    %c0_32 = arith.constant 0 : index
    %103 = vector.load %arg7[%c8, %c0_32] : memref<32x32xbf16, #tpu.memory_space<vmem>>, vector<8x32xbf16>
    %cst_33 = arith.constant dense<0.000000e+00> : vector<8x32xf32>
    %104 = tpu.matmul %102, %103, %cst_33 {dimension_numbers = #tpu.dot_dimension_numbers<[1], [0], [0], [1], [0, 0, 1, 1], [], []>} : vector<8x8xbf16>, vector<8x32xbf16>, vector<8x32xf32> -> vector<8x32xf32>
    %105 = arith.addf %71, %104 : vector<8x32xf32>
    %106 = vector.extract_strided_slice %32 {offsets = [0, 0, 16], sizes = [1, 8, 8], strides = [1, 1, 1]} : vector<1x8x96xf32> to vector<1x8x8xf32>
    %107 = arith.truncf %106 : vector<1x8x8xf32> to vector<1x8x8xbf16>
    %108 = vector.extract_strided_slice %32 {offsets = [0, 0, 48], sizes = [1, 8, 8], strides = [1, 1, 1]} : vector<1x8x96xf32> to vector<1x8x8xf32>
    %109 = arith.truncf %108 : vector<1x8x8xf32> to vector<1x8x8xbf16>
    %110 = vector.extract_strided_slice %32 {offsets = [0, 0, 80], sizes = [1, 8, 8], strides = [1, 1, 1]} : vector<1x8x96xf32> to vector<1x8x8xf32>
    %111 = arith.truncf %110 : vector<1x8x8xf32> to vector<1x8x8xbf16>
    "tpu.trace_start"() <{level = 10 : i32, message = "bqd,bkd->bqk"}> : () -> ()
    %cst_34 = arith.constant dense<0.000000e+00> : vector<1x8x8xf32>
    %112 = tpu.matmul %107, %109, %cst_34 {dimension_numbers = #tpu.dot_dimension_numbers<[2], [2], [1], [1], [0, 0, 0, 1, 1, 1], [0], [0]>} : vector<1x8x8xbf16>, vector<1x8x8xbf16>, vector<1x8x8xf32> -> vector<1x8x8xf32>
    "tpu.trace_stop"() : () -> ()
    %113 = vector.extract_strided_slice %33 {offsets = [0, 2, 0], sizes = [1, 1, 8], strides = [1, 1, 1]} : vector<1x4x8xf32> to vector<1x1x8xf32>
    %114 = vector.shape_cast %113 : vector<1x1x8xf32> to vector<1x8xf32>
    %115 = vector.shape_cast %114 : vector<1x8xf32> to vector<1x8x1xf32>
    %116 = vector.extract_strided_slice %33 {offsets = [0, 2, 0], sizes = [1, 1, 8], strides = [1, 1, 1]} : vector<1x4x8xf32> to vector<1x1x8xf32>
    %117 = vector.shape_cast %116 : vector<1x1x8xf32> to vector<1x8xf32>
    %118 = vector.shape_cast %117 : vector<1x8xf32> to vector<1x1x8xf32>
    %119 = vector.broadcast %115 : vector<1x8x1xf32> to vector<1x8x8xf32>
    %120 = vector.broadcast %118 : vector<1x1x8xf32> to vector<1x8x8xf32>
    %121 = arith.mulf %119, %120 : vector<1x8x8xf32>
    %122 = arith.addf %112, %121 : vector<1x8x8xf32>
    %cst_35 = arith.constant dense<0xFF800000> : vector<1x8xf32>
    %123 = vector.multi_reduction <maximumf>, %122, %cst_35 [2] : vector<1x8x8xf32> to vector<1x8xf32>
    %124 = vector.shape_cast %123 : vector<1x8xf32> to vector<1x8x1xf32>
    %125 = vector.broadcast %124 : vector<1x8x1xf32> to vector<1x8x8xf32>
    %126 = arith.subf %122, %125 : vector<1x8x8xf32>
    %127 = math.exp %126 : vector<1x8x8xf32>
    %cst_36 = arith.constant dense<0.000000e+00> : vector<1x8xf32>
    %128 = vector.multi_reduction <add>, %127, %cst_36 [2] : vector<1x8x8xf32> to vector<1x8xf32>
    %129 = vector.shape_cast %128 : vector<1x8xf32> to vector<1x8x1xf32>
    %130 = tpu.reciprocal %129 {approx = true} : vector<1x8x1xf32> -> vector<1x8x1xf32>
    %131 = vector.broadcast %130 : vector<1x8x1xf32> to vector<1x8x8xf32>
    %132 = arith.mulf %127, %131 : vector<1x8x8xf32>
    %133 = arith.truncf %132 : vector<1x8x8xf32> to vector<1x8x8xbf16>
    "tpu.trace_start"() <{level = 10 : i32, message = "bqk,bkd->bqd"}> : () -> ()
    %cst_37 = arith.constant dense<0.000000e+00> : vector<1x8x8xf32>
    %134 = tpu.matmul %133, %111, %cst_37 {dimension_numbers = #tpu.dot_dimension_numbers<[2], [1], [1], [2], [0, 0, 0, 1, 1, 2], [0], [0]>} : vector<1x8x8xbf16>, vector<1x8x8xbf16>, vector<1x8x8xf32> -> vector<1x8x8xf32>
    "tpu.trace_stop"() : () -> ()
    %135 = vector.shape_cast %134 : vector<1x8x8xf32> to vector<8x8xf32>
    %136 = arith.truncf %135 : vector<8x8xf32> to vector<8x8xbf16>
    %c16 = arith.constant 16 : index
    %c0_38 = arith.constant 0 : index
    %137 = vector.load %arg7[%c16, %c0_38] : memref<32x32xbf16, #tpu.memory_space<vmem>>, vector<8x32xbf16>
    %cst_39 = arith.constant dense<0.000000e+00> : vector<8x32xf32>
    %138 = tpu.matmul %136, %137, %cst_39 {dimension_numbers = #tpu.dot_dimension_numbers<[1], [0], [0], [1], [0, 0, 1, 1], [], []>} : vector<8x8xbf16>, vector<8x32xbf16>, vector<8x32xf32> -> vector<8x32xf32>
    %139 = arith.addf %105, %138 : vector<8x32xf32>
    %140 = vector.extract_strided_slice %32 {offsets = [0, 0, 24], sizes = [1, 8, 8], strides = [1, 1, 1]} : vector<1x8x96xf32> to vector<1x8x8xf32>
    %141 = arith.truncf %140 : vector<1x8x8xf32> to vector<1x8x8xbf16>
    %142 = vector.extract_strided_slice %32 {offsets = [0, 0, 56], sizes = [1, 8, 8], strides = [1, 1, 1]} : vector<1x8x96xf32> to vector<1x8x8xf32>
    %143 = arith.truncf %142 : vector<1x8x8xf32> to vector<1x8x8xbf16>
    %144 = vector.extract_strided_slice %32 {offsets = [0, 0, 88], sizes = [1, 8, 8], strides = [1, 1, 1]} : vector<1x8x96xf32> to vector<1x8x8xf32>
    %145 = arith.truncf %144 : vector<1x8x8xf32> to vector<1x8x8xbf16>
    "tpu.trace_start"() <{level = 10 : i32, message = "bqd,bkd->bqk"}> : () -> ()
    %cst_40 = arith.constant dense<0.000000e+00> : vector<1x8x8xf32>
    %146 = tpu.matmul %141, %143, %cst_40 {dimension_numbers = #tpu.dot_dimension_numbers<[2], [2], [1], [1], [0, 0, 0, 1, 1, 1], [0], [0]>} : vector<1x8x8xbf16>, vector<1x8x8xbf16>, vector<1x8x8xf32> -> vector<1x8x8xf32>
    "tpu.trace_stop"() : () -> ()
    %147 = vector.extract_strided_slice %33 {offsets = [0, 3, 0], sizes = [1, 1, 8], strides = [1, 1, 1]} : vector<1x4x8xf32> to vector<1x1x8xf32>
    %148 = vector.shape_cast %147 : vector<1x1x8xf32> to vector<1x8xf32>
    %149 = vector.shape_cast %148 : vector<1x8xf32> to vector<1x8x1xf32>
    %150 = vector.extract_strided_slice %33 {offsets = [0, 3, 0], sizes = [1, 1, 8], strides = [1, 1, 1]} : vector<1x4x8xf32> to vector<1x1x8xf32>
    %151 = vector.shape_cast %150 : vector<1x1x8xf32> to vector<1x8xf32>
    %152 = vector.shape_cast %151 : vector<1x8xf32> to vector<1x1x8xf32>
    %153 = vector.broadcast %149 : vector<1x8x1xf32> to vector<1x8x8xf32>
    %154 = vector.broadcast %152 : vector<1x1x8xf32> to vector<1x8x8xf32>
    %155 = arith.mulf %153, %154 : vector<1x8x8xf32>
    %156 = arith.addf %146, %155 : vector<1x8x8xf32>
    %cst_41 = arith.constant dense<0xFF800000> : vector<1x8xf32>
    %157 = vector.multi_reduction <maximumf>, %156, %cst_41 [2] : vector<1x8x8xf32> to vector<1x8xf32>
    %158 = vector.shape_cast %157 : vector<1x8xf32> to vector<1x8x1xf32>
    %159 = vector.broadcast %158 : vector<1x8x1xf32> to vector<1x8x8xf32>
    %160 = arith.subf %156, %159 : vector<1x8x8xf32>
    %161 = math.exp %160 : vector<1x8x8xf32>
    %cst_42 = arith.constant dense<0.000000e+00> : vector<1x8xf32>
    %162 = vector.multi_reduction <add>, %161, %cst_42 [2] : vector<1x8x8xf32> to vector<1x8xf32>
    %163 = vector.shape_cast %162 : vector<1x8xf32> to vector<1x8x1xf32>
    %164 = tpu.reciprocal %163 {approx = true} : vector<1x8x1xf32> -> vector<1x8x1xf32>
    %165 = vector.broadcast %164 : vector<1x8x1xf32> to vector<1x8x8xf32>
    %166 = arith.mulf %161, %165 : vector<1x8x8xf32>
    %167 = arith.truncf %166 : vector<1x8x8xf32> to vector<1x8x8xbf16>
    "tpu.trace_start"() <{level = 10 : i32, message = "bqk,bkd->bqd"}> : () -> ()
    %cst_43 = arith.constant dense<0.000000e+00> : vector<1x8x8xf32>
    %168 = tpu.matmul %167, %145, %cst_43 {dimension_numbers = #tpu.dot_dimension_numbers<[2], [1], [1], [2], [0, 0, 0, 1, 1, 2], [0], [0]>} : vector<1x8x8xbf16>, vector<1x8x8xbf16>, vector<1x8x8xf32> -> vector<1x8x8xf32>
    "tpu.trace_stop"() : () -> ()
    %169 = vector.shape_cast %168 : vector<1x8x8xf32> to vector<8x8xf32>
    %170 = arith.truncf %169 : vector<8x8xf32> to vector<8x8xbf16>
    %c24 = arith.constant 24 : index
    %c0_44 = arith.constant 0 : index
    %171 = vector.load %arg7[%c24, %c0_44] : memref<32x32xbf16, #tpu.memory_space<vmem>>, vector<8x32xbf16>
    %cst_45 = arith.constant dense<0.000000e+00> : vector<8x32xf32>
    %172 = tpu.matmul %170, %171, %cst_45 {dimension_numbers = #tpu.dot_dimension_numbers<[1], [0], [0], [1], [0, 0, 1, 1], [], []>} : vector<8x8xbf16>, vector<8x32xbf16>, vector<8x32xf32> -> vector<8x32xf32>
    %173 = arith.addf %139, %172 : vector<8x32xf32>
    %174 = arith.addf %1, %173 : vector<8x32xf32>
    %cst_46 = arith.constant dense<0.000000e+00> : vector<8xf32>
    %175 = vector.multi_reduction <add>, %174, %cst_46 [1] : vector<8x32xf32> to vector<8xf32>
    %176 = vector.shape_cast %175 : vector<8xf32> to vector<8x1xf32>
    %cst_47 = arith.constant 3.200000e+01 : f32
    %177 = vector.broadcast %cst_47 : f32 to vector<8x1xf32>
    %178 = arith.divf %176, %177 : vector<8x1xf32>
    %179 = vector.broadcast %178 : vector<8x1xf32> to vector<8x32xf32>
    %180 = arith.subf %174, %179 : vector<8x32xf32>
    %181 = arith.mulf %180, %180 : vector<8x32xf32>
    %cst_48 = arith.constant dense<0.000000e+00> : vector<8xf32>
    %182 = vector.multi_reduction <add>, %181, %cst_48 [1] : vector<8x32xf32> to vector<8xf32>
    %183 = vector.shape_cast %182 : vector<8xf32> to vector<8x1xf32>
    %cst_49 = arith.constant 3.200000e+01 : f32
    %184 = vector.broadcast %cst_49 : f32 to vector<8x1xf32>
    %185 = arith.divf %183, %184 : vector<8x1xf32>
    %186 = vector.broadcast %178 : vector<8x1xf32> to vector<8x32xf32>
    %187 = arith.subf %174, %186 : vector<8x32xf32>
    %cst_50 = arith.constant 9.99999974E-6 : f32
    %188 = vector.broadcast %cst_50 : f32 to vector<8x1xf32>
    %189 = arith.addf %185, %188 : vector<8x1xf32>
    %190 = math.rsqrt %189 : vector<8x1xf32>
    %191 = vector.broadcast %190 : vector<8x1xf32> to vector<8x32xf32>
    %192 = arith.mulf %187, %191 : vector<8x32xf32>
    %c0_51 = arith.constant 0 : index
    %c0_52 = arith.constant 0 : index
    %193 = vector.load %arg9[%c0_51, %c0_52] : memref<1x32xf32, #tpu.memory_space<vmem>>, vector<1x32xf32>
    %194 = vector.broadcast %193 : vector<1x32xf32> to vector<8x32xf32>
    %195 = arith.mulf %192, %194 : vector<8x32xf32>
    %c0_53 = arith.constant 0 : index
    %c0_54 = arith.constant 0 : index
    %196 = vector.load %arg10[%c0_53, %c0_54] : memref<1x32xf32, #tpu.memory_space<vmem>>, vector<1x32xf32>
    %197 = vector.broadcast %196 : vector<1x32xf32> to vector<8x32xf32>
    %198 = arith.addf %195, %197 : vector<8x32xf32>
    %199 = arith.truncf %198 : vector<8x32xf32> to vector<8x32xbf16>
    %cst_55 = arith.constant 0.000000e+00 : f32
    %200 = vector.broadcast %cst_55 : f32 to vector<8x32xf32>
    %c0_56 = arith.constant 0 : index
    %c0_57 = arith.constant 0 : index
    %201 = vector.load %arg14[%c0_56, %c0_57] : memref<1x32xf32, #tpu.memory_space<vmem>>, vector<1x32xf32>
    %202 = vector.broadcast %201 : vector<1x32xf32> to vector<8x32xf32>
    %203 = arith.addf %200, %202 : vector<8x32xf32>
    %c0_58 = arith.constant 0 : index
    %c0_59 = arith.constant 0 : index
    %204 = vector.load %arg11[%c0_58, %c0_59] : memref<32x128xbf16, #tpu.memory_space<vmem>>, vector<32x128xbf16>
    %cst_60 = arith.constant dense<0.000000e+00> : vector<8x128xf32>
    %205 = tpu.matmul %199, %204, %cst_60 {dimension_numbers = #tpu.dot_dimension_numbers<[1], [0], [0], [1], [0, 0, 1, 1], [], []>} : vector<8x32xbf16>, vector<32x128xbf16>, vector<8x128xf32> -> vector<8x128xf32>
    %c0_61 = arith.constant 0 : index
    %c0_62 = arith.constant 0 : index
    %206 = vector.load %arg12[%c0_61, %c0_62] : memref<1x128xf32, #tpu.memory_space<vmem>>, vector<1x128xf32>
    %207 = vector.broadcast %206 : vector<1x128xf32> to vector<8x128xf32>
    %208 = arith.addf %205, %207 : vector<8x128xf32>
    %cst_63 = arith.constant 1.702000e+00 : f32
    %209 = vector.broadcast %cst_63 : f32 to vector<8x128xf32>
    %210 = arith.mulf %209, %208 : vector<8x128xf32>
    %211 = arith.negf %210 : vector<8x128xf32>
    %212 = math.exp %211 : vector<8x128xf32>
    %cst_64 = arith.constant 1.000000e+00 : f32
    %213 = vector.broadcast %cst_64 : f32 to vector<8x128xf32>
    %214 = arith.addf %213, %212 : vector<8x128xf32>
    %215 = arith.divf %213, %214 : vector<8x128xf32>
    %216 = arith.mulf %208, %215 : vector<8x128xf32>
    %217 = arith.truncf %216 : vector<8x128xf32> to vector<8x128xbf16>
    %c0_65 = arith.constant 0 : index
    %c0_66 = arith.constant 0 : index
    %218 = vector.load %arg13[%c0_65, %c0_66] : memref<128x32xbf16, #tpu.memory_space<vmem>>, vector<128x32xbf16>
    %cst_67 = arith.constant dense<0.000000e+00> : vector<8x32xf32>
    %219 = tpu.matmul %217, %218, %cst_67 {dimension_numbers = #tpu.dot_dimension_numbers<[1], [0], [0], [1], [0, 0, 1, 1], [], []>} : vector<8x128xbf16>, vector<128x32xbf16>, vector<8x32xf32> -> vector<8x32xf32>
    %220 = arith.addf %203, %219 : vector<8x32xf32>
    %221 = arith.addf %174, %220 : vector<8x32xf32>
    %222 = vector.shape_cast %221 : vector<8x32xf32> to vector<1x8x32xf32>
    %c0_68 = arith.constant 0 : index
    %c0_69 = arith.constant 0 : index
    %c0_70 = arith.constant 0 : index
    %223 = vector.load %arg15[%c0_68, %c0_69, %c0_70] : memref<1x8x32xf32, #tpu.memory_space<vmem>>, vector<1x8x32xf32>
    tpu.vector_store %arg15[%c0_68, %c0_69, %c0_70], %222 {strides = array<i32>} : memref<1x8x32xf32, #tpu.memory_space<vmem>>, vector<1x8x32xf32>,
    return
  }
  func.func @transform_0(%arg0: i32) -> (i32, i32, i32) {
    %c0_i32 = arith.constant 0 : i32
    %c0_i32_0 = arith.constant 0 : i32
    %c0_i32_1 = arith.constant 0 : i32
    return %arg0, %c0_i32, %c0_i32_0 : i32, i32, i32
  }
  func.func @transform_1(%arg0: i32) -> (i32, i32, i32) {
    %c0_i32 = arith.constant 0 : i32
    %c0_i32_0 = arith.constant 0 : i32
    %c0_i32_1 = arith.constant 0 : i32
    return %arg0, %c0_i32, %c0_i32_0 : i32, i32, i32
  }
  func.func @transform_2(%arg0: i32) -> (i32, i32) {
    %c0_i32 = arith.constant 0 : i32
    %c0_i32_0 = arith.constant 0 : i32
    %c0_i32_1 = arith.constant 0 : i32
    return %c0_i32, %c0_i32_0 : i32, i32
  }
  func.func @transform_3(%arg0: i32) -> (i32, i32) {
    %c0_i32 = arith.constant 0 : i32
    %c0_i32_0 = arith.constant 0 : i32
    %c0_i32_1 = arith.constant 0 : i32
    return %c0_i32, %c0_i32_0 : i32, i32
  }
  func.func @transform_4(%arg0: i32) -> (i32, i32) {
    %c0_i32 = arith.constant 0 : i32
    %c0_i32_0 = arith.constant 0 : i32
    %c0_i32_1 = arith.constant 0 : i32
    return %c0_i32, %c0_i32_0 : i32, i32
  }
  func.func @transform_5(%arg0: i32) -> (i32, i32) {
    %c0_i32 = arith.constant 0 : i32
    %c0_i32_0 = arith.constant 0 : i32
    %c0_i32_1 = arith.constant 0 : i32
    return %c0_i32, %c0_i32_0 : i32, i32
  }
  func.func @transform_6(%arg0: i32) -> (i32, i32) {
    %c0_i32 = arith.constant 0 : i32
    %c0_i32_0 = arith.constant 0 : i32
    %c0_i32_1 = arith.constant 0 : i32
    return %c0_i32, %c0_i32_0 : i32, i32
  }
  func.func @transform_7(%arg0: i32) -> (i32, i32) {
    %c0_i32 = arith.constant 0 : i32
    %c0_i32_0 = arith.constant 0 : i32
    %c0_i32_1 = arith.constant 0 : i32
    return %c0_i32, %c0_i32_0 : i32, i32
  }
  func.func @transform_8(%arg0: i32) -> (i32, i32) {
    %c0_i32 = arith.constant 0 : i32
    %c0_i32_0 = arith.constant 0 : i32
    %c0_i32_1 = arith.constant 0 : i32
    return %c0_i32, %c0_i32_0 : i32, i32
  }
  func.func @transform_9(%arg0: i32) -> (i32, i32) {
    %c0_i32 = arith.constant 0 : i32
    %c0_i32_0 = arith.constant 0 : i32
    %c0_i32_1 = arith.constant 0 : i32
    return %c0_i32, %c0_i32_0 : i32, i32
  }
  func.func @transform_10(%arg0: i32) -> (i32, i32) {
    %c0_i32 = arith.constant 0 : i32
    %c0_i32_0 = arith.constant 0 : i32
    %c0_i32_1 = arith.constant 0 : i32
    return %c0_i32, %c0_i32_0 : i32, i32
  }
  func.func @transform_11(%arg0: i32) -> (i32, i32) {
    %c0_i32 = arith.constant 0 : i32
    %c0_i32_0 = arith.constant 0 : i32
    %c0_i32_1 = arith.constant 0 : i32
    return %c0_i32, %c0_i32_0 : i32, i32
  }
  func.func @transform_12(%arg0: i32) -> (i32, i32) {
    %c0_i32 = arith.constant 0 : i32
    %c0_i32_0 = arith.constant 0 : i32
    %c0_i32_1 = arith.constant 0 : i32
    return %c0_i32, %c0_i32_0 : i32, i32
  }
  func.func @transform_13(%arg0: i32) -> (i32, i32) {
    %c0_i32 = arith.constant 0 : i32
    %c0_i32_0 = arith.constant 0 : i32
    %c0_i32_1 = arith.constant 0 : i32
    return %c0_i32, %c0_i32_0 : i32, i32
  }
  func.func @transform_14(%arg0: i32) -> (i32, i32, i32) {
    %c0_i32 = arith.constant 0 : i32
    %c0_i32_0 = arith.constant 0 : i32
    %c0_i32_1 = arith.constant 0 : i32
    return %arg0, %c0_i32, %c0_i32_0 : i32, i32, i32
  }
}

</mosaic_0001>

<llo_original>
// kernel: outfits_transformer.3
$region0: #{outfits_transformer.3}
  #allocation0 [shape = 'u32[]', space=smem, size = 0x4, offset = 0x4, fixed_abs, tag = 'smem constant byte address 0x4 - core index']
  #allocation1 [shape = 'u32[144,128]{1,0:T(1,128)}', space=vmem, size = 0x12000, scoped, tag = 'internal scratch']
  %s0 = inlined_call_operand.vmem [shape: f32[2,8,32], index: 0, kind: input, shape index: {}]
  %s1 = inlined_call_operand.vmem [shape: f32[2,4,8], index: 1, kind: input, shape index: {}]
  %s2 = inlined_call_operand.vmem [shape: f32[1,32], index: 2, kind: input, shape index: {}]
  %s3 = inlined_call_operand.vmem [shape: f32[1,32], index: 3, kind: input, shape index: {}]
  %s4 = inlined_call_operand.vmem [shape: bf16[32,96], index: 4, kind: input, shape index: {}]
  %s5 = inlined_call_operand.vmem [shape: f32[1,96], index: 5, kind: input, shape index: {}]
  %s6 = inlined_call_operand.vmem [shape: bf16[32,32], index: 6, kind: input, shape index: {}]
  %s7 = inlined_call_operand.vmem [shape: f32[1,32], index: 7, kind: input, shape index: {}]
  %s8 = inlined_call_operand.vmem [shape: f32[1,32], index: 8, kind: input, shape index: {}]
  %s9 = inlined_call_operand.vmem [shape: f32[1,32], index: 9, kind: input, shape index: {}]
  %s10 = inlined_call_operand.vmem [shape: bf16[32,128], index: 10, kind: input, shape index: {}]
  %s11 = inlined_call_operand.vmem [shape: f32[1,128], index: 11, kind: input, shape index: {}]
  %s12 = inlined_call_operand.vmem [shape: bf16[128,32], index: 12, kind: input, shape index: {}]
  %s13 = inlined_call_operand.vmem [shape: f32[1,32], index: 13, kind: input, shape index: {}]
  %s14 = inlined_call_operand.hbm [shape: f32[2,8,32], index: 14, kind: output, shape index: {}]
  %s15 = sld [smem:[#allocation0]]
  $region89: #{outfits_transformer.3} parent=0
    _
  %s17 = ssub.s32 1, %s15
  %s18 = scalar_select 0, %s17, %s15
  $region1: #{outfits_transformer.3} parent=0
    #allocation2 [shape = 'u8[8192]{0}', space=vmem, size = 0x2000, scoped, tag = 'output window, operand 0']
    #allocation3 [shape = 's32[2]{0}', space=sflag, size = 0x8, scoped, tag = 'scoped memory for outfits_transformer.3']
    %19 = vsyncpa [#allocation3], 0
    %s20 = scalar_lea.sflag [#allocation3], 1
    %21 = vsyncpa %s20, 0
    loop: start=0, step=1, limit=4
    $region2: #{outfits_transformer.3} parent=1 // loop_pre_header
      _
    $region3: #{outfits_transformer.3} parent=1 // loop_header
      %s23 = sphi 0, %s27
      %p24 = scmp.ge.s32.totalorder %s23, 4
      %s33 = sphi 0, %s35
      %s36 = sphi 0, %s33
      %s37 = sphi 0, %s36
      %s53 = sphi 0, %s37
      %s59 = sphi 0, %s61
      %s62 = sphi 0, %s59
      %s63 = sphi 0, %s62
      %s79 = sphi 0, %s63
      %s83 = sphi 0, %s83
      %s85 = sphi 0, %s83
      %s86 = sphi 0, %s85
      %s100 = sphi 0, %s86
      %s104 = sphi 0, %s104
      %s106 = sphi 0, %s104
      %s107 = sphi 0, %s106
      %s121 = sphi 0, %s107
      %s125 = sphi 0, %s125
      %s127 = sphi 0, %s125
      %s128 = sphi 0, %s127
      %s142 = sphi 0, %s128
      %s146 = sphi 0, %s146
      %s148 = sphi 0, %s146
      %s149 = sphi 0, %s148
      %s163 = sphi 0, %s149
      %s167 = sphi 0, %s167
      %s169 = sphi 0, %s167
      %s170 = sphi 0, %s169
      %s184 = sphi 0, %s170
      %s188 = sphi 0, %s188
      %s190 = sphi 0, %s188
      %s191 = sphi 0, %s190
      %s205 = sphi 0, %s191
      %s209 = sphi 0, %s209
      %s211 = sphi 0, %s209
      %s212 = sphi 0, %s211
      %s226 = sphi 0, %s212
      %s230 = sphi 0, %s230
      %s232 = sphi 0, %s230
      %s233 = sphi 0, %s232
      %s247 = sphi 0, %s233
      %s251 = sphi 0, %s251
      %s253 = sphi 0, %s251
      %s254 = sphi 0, %s253
      %s268 = sphi 0, %s254
      %s272 = sphi 0, %s272
      %s274 = sphi 0, %s272
      %s275 = sphi 0, %s274
      %s289 = sphi 0, %s275
      %s293 = sphi 0, %s293
      %s295 = sphi 0, %s293
      %s296 = sphi 0, %s295
      %s310 = sphi 0, %s296
      %s314 = sphi 0, %s314
      %s316 = sphi 0, %s314
      %s317 = sphi 0, %s316
      %s331 = sphi 0, %s317
      %s337 = sphi 0, %s339
      %s340 = sphi 0, %s337
      %s341 = sphi 0, %s340
      %s357 = sphi 0, %s341
    $region4: #{outfits_transformer.3} parent=1 // loop_header_branch
      %26 = sbr.rel (%p24) target = $region8
    $region5: #{outfits_transformer.3} parent=1 // loop_body
      %s28 = ssub.s32 %s23, 1
      %s29 = ssub.s32 %s23, 2
      %s30 = sadd.s32 %s23, 1
      %s31 = ssub.s32 %s23, %s30
      %p32 = scmp.eq.s32.totalorder %s31, 0
      %s34 = sadd.s32 %s33, 1
      %s35 = scalar_select %p32, %s33, %s34
      %p38 = pneg %p32
      %p39 = scmp.eq.s32.totalorder %s23, 1
      %p40 = por %p38, %p39
      %p41 = scmp.ne.s32.totalorder %s33, %s36
      %p42 = scmp.eq.s32.totalorder %s23, 0
      %p43 = por %p41, %p42
      %p44 = scmp.ne.s32.totalorder %s33, %s36
      %p45 = scmp.eq.s32.totalorder %s28, 1
      %p46 = por %p44, %p45
      %p47 = scmp.ne.s32.totalorder %s36, %s37
      %p48 = scmp.eq.s32.totalorder %s28, 0
      %p49 = por %p47, %p48
      %p50 = scmp.ne.s32.totalorder %s36, %s37
      %p51 = scmp.eq.s32.totalorder %s29, 1
      %p52 = por %p50, %p51
      %p54 = scmp.ne.s32.totalorder %s37, %s53
      %p55 = scmp.eq.s32.totalorder %s29, 0
      %p56 = por %p54, %p55
      %s57 = ssub.s32 %s23, %s30
      %p58 = scmp.eq.s32.totalorder %s57, 0
      %s60 = sadd.s32 %s59, 1
      %s61 = scalar_select %p58, %s59, %s60
      %p64 = pneg %p58
      %p65 = scmp.eq.s32.totalorder %s23, 1
      %p66 = por %p64, %p65
      %p67 = scmp.ne.s32.totalorder %s59, %s62
      %p68 = scmp.eq.s32.totalorder %s23, 0
      %p69 = por %p67, %p68
      %p70 = scmp.ne.s32.totalorder %s59, %s62
      %p71 = scmp.eq.s32.totalorder %s28, 1
      %p72 = por %p70, %p71
      %p73 = scmp.ne.s32.totalorder %s62, %s63
      %p74 = scmp.eq.s32.totalorder %s28, 0
      %p75 = por %p73, %p74
      %p76 = scmp.ne.s32.totalorder %s62, %s63
      %p77 = scmp.eq.s32.totalorder %s29, 1
      %p78 = por %p76, %p77
      %p80 = scmp.ne.s32.totalorder %s63, %s79
      %p81 = scmp.eq.s32.totalorder %s29, 0
      %p82 = por %p80, %p81
      %s84 = sadd.s32 %s83, 1
      %p87 = scmp.eq.s32.totalorder %s23, 1
      %p88 = scmp.ne.s32.totalorder %s83, %s85
      %p89 = scmp.eq.s32.totalorder %s23, 0
      %p90 = por %p88, %p89
      %p91 = scmp.ne.s32.totalorder %s83, %s85
      %p92 = scmp.eq.s32.totalorder %s28, 1
      %p93 = por %p91, %p92
      %p94 = scmp.ne.s32.totalorder %s85, %s86
      %p95 = scmp.eq.s32.totalorder %s28, 0
      %p96 = por %p94, %p95
      %p97 = scmp.ne.s32.totalorder %s85, %s86
      %p98 = scmp.eq.s32.totalorder %s29, 1
      %p99 = por %p97, %p98
      %p101 = scmp.ne.s32.totalorder %s86, %s100
      %p102 = scmp.eq.s32.totalorder %s29, 0
      %p103 = por %p101, %p102
      %s105 = sadd.s32 %s104, 1
      %p108 = scmp.eq.s32.totalorder %s23, 1
      %p109 = scmp.ne.s32.totalorder %s104, %s106
      %p110 = scmp.eq.s32.totalorder %s23, 0
      %p111 = por %p109, %p110
      %p112 = scmp.ne.s32.totalorder %s104, %s106
      %p113 = scmp.eq.s32.totalorder %s28, 1
      %p114 = por %p112, %p113
      %p115 = scmp.ne.s32.totalorder %s106, %s107
      %p116 = scmp.eq.s32.totalorder %s28, 0
      %p117 = por %p115, %p116
      %p118 = scmp.ne.s32.totalorder %s106, %s107
      %p119 = scmp.eq.s32.totalorder %s29, 1
      %p120 = por %p118, %p119
      %p122 = scmp.ne.s32.totalorder %s107, %s121
      %p123 = scmp.eq.s32.totalorder %s29, 0
      %p124 = por %p122, %p123
      %s126 = sadd.s32 %s125, 1
      %p129 = scmp.eq.s32.totalorder %s23, 1
      %p130 = scmp.ne.s32.totalorder %s125, %s127
      %p131 = scmp.eq.s32.totalorder %s23, 0
      %p132 = por %p130, %p131
      %p133 = scmp.ne.s32.totalorder %s125, %s127
      %p134 = scmp.eq.s32.totalorder %s28, 1
      %p135 = por %p133, %p134
      %p136 = scmp.ne.s32.totalorder %s127, %s128
      %p137 = scmp.eq.s32.totalorder %s28, 0
      %p138 = por %p136, %p137
      %p139 = scmp.ne.s32.totalorder %s127, %s128
      %p140 = scmp.eq.s32.totalorder %s29, 1
      %p141 = por %p139, %p140
      %p143 = scmp.ne.s32.totalorder %s128, %s142
      %p144 = scmp.eq.s32.totalorder %s29, 0
      %p145 = por %p143, %p144
      %s147 = sadd.s32 %s146, 1
      %p150 = scmp.eq.s32.totalorder %s23, 1
      %p151 = scmp.ne.s32.totalorder %s146, %s148
      %p152 = scmp.eq.s32.totalorder %s23, 0
      %p153 = por %p151, %p152
      %p154 = scmp.ne.s32.totalorder %s146, %s148
      %p155 = scmp.eq.s32.totalorder %s28, 1
      %p156 = por %p154, %p155
      %p157 = scmp.ne.s32.totalorder %s148, %s149
      %p158 = scmp.eq.s32.totalorder %s28, 0
      %p159 = por %p157, %p158
      %p160 = scmp.ne.s32.totalorder %s148, %s149
      %p161 = scmp.eq.s32.totalorder %s29, 1
      %p162 = por %p160, %p161
      %p164 = scmp.ne.s32.totalorder %s149, %s163
      %p165 = scmp.eq.s32.totalorder %s29, 0
      %p166 = por %p164, %p165
      %s168 = sadd.s32 %s167, 1
      %p171 = scmp.eq.s32.totalorder %s23, 1
      %p172 = scmp.ne.s32.totalorder %s167, %s169
      %p173 = scmp.eq.s32.totalorder %s23, 0
      %p174 = por %p172, %p173
      %p175 = scmp.ne.s32.totalorder %s167, %s169
      %p176 = scmp.eq.s32.totalorder %s28, 1
      %p177 = por %p175, %p176
      %p178 = scmp.ne.s32.totalorder %s169, %s170
      %p179 = scmp.eq.s32.totalorder %s28, 0
      %p180 = por %p178, %p179
      %p181 = scmp.ne.s32.totalorder %s169, %s170
      %p182 = scmp.eq.s32.totalorder %s29, 1
      %p183 = por %p181, %p182
      %p185 = scmp.ne.s32.totalorder %s170, %s184
      %p186 = scmp.eq.s32.totalorder %s29, 0
      %p187 = por %p185, %p186
      %s189 = sadd.s32 %s188, 1
      %p192 = scmp.eq.s32.totalorder %s23, 1
      %p193 = scmp.ne.s32.totalorder %s188, %s190
      %p194 = scmp.eq.s32.totalorder %s23, 0
      %p195 = por %p193, %p194
      %p196 = scmp.ne.s32.totalorder %s188, %s190
      %p197 = scmp.eq.s32.totalorder %s28, 1
      %p198 = por %p196, %p197
      %p199 = scmp.ne.s32.totalorder %s190, %s191
      %p200 = scmp.eq.s32.totalorder %s28, 0
      %p201 = por %p199, %p200
      %p202 = scmp.ne.s32.totalorder %s190, %s191
      %p203 = scmp.eq.s32.totalorder %s29, 1
      %p204 = por %p202, %p203
      %p206 = scmp.ne.s32.totalorder %s191, %s205
      %p207 = scmp.eq.s32.totalorder %s29, 0
      %p208 = por %p206, %p207
      %s210 = sadd.s32 %s209, 1
      %p213 = scmp.eq.s32.totalorder %s23, 1
      %p214 = scmp.ne.s32.totalorder %s209, %s211
      %p215 = scmp.eq.s32.totalorder %s23, 0
      %p216 = por %p214, %p215
      %p217 = scmp.ne.s32.totalorder %s209, %s211
      %p218 = scmp.eq.s32.totalorder %s28, 1
      %p219 = por %p217, %p218
      %p220 = scmp.ne.s32.totalorder %s211, %s212
      %p221 = scmp.eq.s32.totalorder %s28, 0
      %p222 = por %p220, %p221
      %p223 = scmp.ne.s32.totalorder %s211, %s212
      %p224 = scmp.eq.s32.totalorder %s29, 1
      %p225 = por %p223, %p224
      %p227 = scmp.ne.s32.totalorder %s212, %s226
      %p228 = scmp.eq.s32.totalorder %s29, 0
      %p229 = por %p227, %p228
      %s231 = sadd.s32 %s230, 1
      %p234 = scmp.eq.s32.totalorder %s23, 1
      %p235 = scmp.ne.s32.totalorder %s230, %s232
      %p236 = scmp.eq.s32.totalorder %s23, 0
      %p237 = por %p235, %p236
      %p238 = scmp.ne.s32.totalorder %s230, %s232
      %p239 = scmp.eq.s32.totalorder %s28, 1
      %p240 = por %p238, %p239
      %p241 = scmp.ne.s32.totalorder %s232, %s233
      %p242 = scmp.eq.s32.totalorder %s28, 0
      %p243 = por %p241, %p242
      %p244 = scmp.ne.s32.totalorder %s232, %s233
      %p245 = scmp.eq.s32.totalorder %s29, 1
      %p246 = por %p244, %p245
      %p248 = scmp.ne.s32.totalorder %s233, %s247
      %p249 = scmp.eq.s32.totalorder %s29, 0
      %p250 = por %p248, %p249
      %s252 = sadd.s32 %s251, 1
      %p255 = scmp.eq.s32.totalorder %s23, 1
      %p256 = scmp.ne.s32.totalorder %s251, %s253
      %p257 = scmp.eq.s32.totalorder %s23, 0
      %p258 = por %p256, %p257
      %p259 = scmp.ne.s32.totalorder %s251, %s253
      %p260 = scmp.eq.s32.totalorder %s28, 1
      %p261 = por %p259, %p260
      %p262 = scmp.ne.s32.totalorder %s253, %s254
      %p263 = scmp.eq.s32.totalorder %s28, 0
      %p264 = por %p262, %p263
      %p265 = scmp.ne.s32.totalorder %s253, %s254
      %p266 = scmp.eq.s32.totalorder %s29, 1
      %p267 = por %p265, %p266
      %p269 = scmp.ne.s32.totalorder %s254, %s268
      %p270 = scmp.eq.s32.totalorder %s29, 0
      %p271 = por %p269, %p270
      %s273 = sadd.s32 %s272, 1
      %p276 = scmp.eq.s32.totalorder %s23, 1
      %p277 = scmp.ne.s32.totalorder %s272, %s274
      %p278 = scmp.eq.s32.totalorder %s23, 0
      %p279 = por %p277, %p278
      %p280 = scmp.ne.s32.totalorder %s272, %s274
      %p281 = scmp.eq.s32.totalorder %s28, 1
      %p282 = por %p280, %p281
      %p283 = scmp.ne.s32.totalorder %s274, %s275
      %p284 = scmp.eq.s32.totalorder %s28, 0
      %p285 = por %p283, %p284
      %p286 = scmp.ne.s32.totalorder %s274, %s275
      %p287 = scmp.eq.s32.totalorder %s29, 1
      %p288 = por %p286, %p287
      %p290 = scmp.ne.s32.totalorder %s275, %s289
      %p291 = scmp.eq.s32.totalorder %s29, 0
      %p292 = por %p290, %p291
      %s294 = sadd.s32 %s293, 1
      %p297 = scmp.eq.s32.totalorder %s23, 1
      %p298 = scmp.ne.s32.totalorder %s293, %s295
      %p299 = scmp.eq.s32.totalorder %s23, 0
      %p300 = por %p298, %p299
      %p301 = scmp.ne.s32.totalorder %s293, %s295
      %p302 = scmp.eq.s32.totalorder %s28, 1
      %p303 = por %p301, %p302
      %p304 = scmp.ne.s32.totalorder %s295, %s296
      %p305 = scmp.eq.s32.totalorder %s28, 0
      %p306 = por %p304, %p305
      %p307 = scmp.ne.s32.totalorder %s295, %s296
      %p308 = scmp.eq.s32.totalorder %s29, 1
      %p309 = por %p307, %p308
      %p311 = scmp.ne.s32.totalorder %s296, %s310
      %p312 = scmp.eq.s32.totalorder %s29, 0
      %p313 = por %p311, %p312
      %s315 = sadd.s32 %s314, 1
      %p318 = scmp.eq.s32.totalorder %s23, 1
      %p319 = scmp.ne.s32.totalorder %s314, %s316
      %p320 = scmp.eq.s32.totalorder %s23, 0
      %p321 = por %p319, %p320
      %p322 = scmp.ne.s32.totalorder %s314, %s316
      %p323 = scmp.eq.s32.totalorder %s28, 1
      %p324 = por %p322, %p323
      %p325 = scmp.ne.s32.totalorder %s316, %s317
      %p326 = scmp.eq.s32.totalorder %s28, 0
      %p327 = por %p325, %p326
      %p328 = scmp.ne.s32.totalorder %s316, %s317
      %p329 = scmp.eq.s32.totalorder %s29, 1
      %p330 = por %p328, %p329
      %p332 = scmp.ne.s32.totalorder %s317, %s331
      %p333 = scmp.eq.s32.totalorder %s29, 0
      %p334 = por %p332, %p333
      %s335 = ssub.s32 %s23, %s30
      %p336 = scmp.eq.s32.totalorder %s335, 0
      %s338 = sadd.s32 %s337, 1
      %s339 = scalar_select %p336, %s337, %s338
      %p342 = pneg %p336
      %p343 = scmp.eq.s32.totalorder %s23, 1
      %p344 = por %p342, %p343
      %p345 = scmp.ne.s32.totalorder %s337, %s340
      %p346 = scmp.eq.s32.totalorder %s23, 0
      %p347 = por %p345, %p346
      %p348 = scmp.ne.s32.totalorder %s337, %s340
      %p349 = scmp.eq.s32.totalorder %s28, 1
      %p350 = por %p348, %p349
      %p351 = scmp.ne.s32.totalorder %s340, %s341
      %p352 = scmp.eq.s32.totalorder %s28, 0
      %p353 = por %p351, %p352
      %p354 = scmp.ne.s32.totalorder %s340, %s341
      %p355 = scmp.eq.s32.totalorder %s29, 1
      %p356 = por %p354, %p355
      %p358 = scmp.ne.s32.totalorder %s341, %s357
      %p359 = scmp.eq.s32.totalorder %s29, 0
      %p360 = por %p358, %p359
      %p361 = scmp.le.s32.totalorder 1, %s23
      %p362 = scmp.lt.s32.totalorder %s23, 3
      %p363 = pnand %p361, %p362
      %p364 = pneg %p363
      // Predicated region
      $region9: #{outfits_transformer.3} parent=5 // pred_check
        _
      $region10: #{outfits_transformer.3} parent=5 // pred_check_branch
        %366 = sbr.rel (%p363) target = $region12
      $region11: #{outfits_transformer.3} parent=5 // pred_region
        %s367 = ssub.s32 %s23, 1
        // Predicated region
        $region13: #{outfits_transformer.3} parent=11 // pred_check
          %p368 = pneg %p96
        $region14: #{outfits_transformer.3} parent=11 // pred_check_branch
          %370 = sbr.rel (%p368) target = $region16
        $region15: #{outfits_transformer.3} parent=11 // pred_region
          _
        $region16: #{outfits_transformer.3} parent=11 // pred_fallthru
          _
        // Predicated region
        $region17: #{outfits_transformer.3} parent=11 // pred_check
          %p371 = pneg %p117
        $region18: #{outfits_transformer.3} parent=11 // pred_check_branch
          %373 = sbr.rel (%p371) target = $region20
        $region19: #{outfits_transformer.3} parent=11 // pred_region
          _
        $region20: #{outfits_transformer.3} parent=11 // pred_fallthru
          _
        // Predicated region
        $region21: #{outfits_transformer.3} parent=11 // pred_check
          %p374 = pneg %p138
        $region22: #{outfits_transformer.3} parent=11 // pred_check_branch
          %376 = sbr.rel (%p374) target = $region24
        $region23: #{outfits_transformer.3} parent=11 // pred_region
          _
        $region24: #{outfits_transformer.3} parent=11 // pred_fallthru
          _
        // Predicated region
        $region25: #{outfits_transformer.3} parent=11 // pred_check
          %p377 = pneg %p159
        $region26: #{outfits_transformer.3} parent=11 // pred_check_branch
          %379 = sbr.rel (%p377) target = $region28
        $region27: #{outfits_transformer.3} parent=11 // pred_region
          _
        $region28: #{outfits_transformer.3} parent=11 // pred_fallthru
          _
        // Predicated region
        $region29: #{outfits_transformer.3} parent=11 // pred_check
          %p380 = pneg %p180
        $region30: #{outfits_transformer.3} parent=11 // pred_check_branch
          %382 = sbr.rel (%p380) target = $region32
        $region31: #{outfits_transformer.3} parent=11 // pred_region
          _
        $region32: #{outfits_transformer.3} parent=11 // pred_fallthru
          _
        // Predicated region
        $region33: #{outfits_transformer.3} parent=11 // pred_check
          %p383 = pneg %p201
        $region34: #{outfits_transformer.3} parent=11 // pred_check_branch
          %385 = sbr.rel (%p383) target = $region36
        $region35: #{outfits_transformer.3} parent=11 // pred_region
          _
        $region36: #{outfits_transformer.3} parent=11 // pred_fallthru
          _
        // Predicated region
        $region37: #{outfits_transformer.3} parent=11 // pred_check
          %p386 = pneg %p222
        $region38: #{outfits_transformer.3} parent=11 // pred_check_branch
          %388 = sbr.rel (%p386) target = $region40
        $region39: #{outfits_transformer.3} parent=11 // pred_region
          _
        $region40: #{outfits_transformer.3} parent=11 // pred_fallthru
          _
        // Predicated region
        $region41: #{outfits_transformer.3} parent=11 // pred_check
          %p389 = pneg %p243
        $region42: #{outfits_transformer.3} parent=11 // pred_check_branch
          %391 = sbr.rel (%p389) target = $region44
        $region43: #{outfits_transformer.3} parent=11 // pred_region
          _
        $region44: #{outfits_transformer.3} parent=11 // pred_fallthru
          _
        // Predicated region
        $region45: #{outfits_transformer.3} parent=11 // pred_check
          %p392 = pneg %p264
        $region46: #{outfits_transformer.3} parent=11 // pred_check_branch
          %394 = sbr.rel (%p392) target = $region48
        $region47: #{outfits_transformer.3} parent=11 // pred_region
          _
        $region48: #{outfits_transformer.3} parent=11 // pred_fallthru
          _
        // Predicated region
        $region49: #{outfits_transformer.3} parent=11 // pred_check
          %p395 = pneg %p285
        $region50: #{outfits_transformer.3} parent=11 // pred_check_branch
          %397 = sbr.rel (%p395) target = $region52
        $region51: #{outfits_transformer.3} parent=11 // pred_region
          _
        $region52: #{outfits_transformer.3} parent=11 // pred_fallthru
          _
        // Predicated region
        $region53: #{outfits_transformer.3} parent=11 // pred_check
          %p398 = pneg %p306
        $region54: #{outfits_transformer.3} parent=11 // pred_check_branch
          %400 = sbr.rel (%p398) target = $region56
        $region55: #{outfits_transformer.3} parent=11 // pred_region
          _
        $region56: #{outfits_transformer.3} parent=11 // pred_fallthru
          _
        // Predicated region
        $region57: #{outfits_transformer.3} parent=11 // pred_check
          %p401 = pneg %p327
        $region58: #{outfits_transformer.3} parent=11 // pred_check_branch
          %403 = sbr.rel (%p401) target = $region60
        $region59: #{outfits_transformer.3} parent=11 // pred_region
          _
        $region60: #{outfits_transformer.3} parent=11 // pred_fallthru
          _
      $region12: #{outfits_transformer.3} parent=5 // pred_fallthru
        _
      %p404 = scmp.lt.s32.totalorder %s23, 2
      // Predicated region
      $region61: #{outfits_transformer.3} parent=5 // pred_check
        %p405 = pneg %p404
      $region62: #{outfits_transformer.3} parent=5 // pred_check_branch
        %407 = sbr.rel (%p405) target = $region64
      $region63: #{outfits_transformer.3} parent=5 // pred_region
        // Predicated region
        $region65: #{outfits_transformer.3} parent=63 // pred_check
          %p408 = pneg %p43
        $region66: #{outfits_transformer.3} parent=63 // pred_check_branch
          %410 = sbr.rel (%p408) target = $region68
        $region67: #{outfits_transformer.3} parent=63 // pred_region
          %p411 = scmp.lt.s32.totalorder %s23, 1
          %s412 = scalar_select %p411, %s23, 1
          %s413 = smul.addr %s412, 8
          %s414 = scalar_lea.vmem %s0, %s413
        $region68: #{outfits_transformer.3} parent=63 // pred_fallthru
          _
        // Predicated region
        $region69: #{outfits_transformer.3} parent=63 // pred_check
          %p415 = pneg %p69
        $region70: #{outfits_transformer.3} parent=63 // pred_check_branch
          %417 = sbr.rel (%p415) target = $region72
        $region71: #{outfits_transformer.3} parent=63 // pred_region
          %p418 = scmp.lt.s32.totalorder %s23, 1
          %s419 = scalar_select %p418, %s23, 1
          %s420 = smul.addr %s419, 4
          %s421 = scalar_lea.vmem %s1, %s420
        $region72: #{outfits_transformer.3} parent=63 // pred_fallthru
          _
      $region64: #{outfits_transformer.3} parent=5 // pred_fallthru
        _
      %p422 = scmp.le.s32.totalorder 1, %s23
      %p423 = scmp.lt.s32.totalorder %s23, 3
      %p424 = pnand %p422, %p423
      %p425 = pneg %p424
      // Predicated region
      $region73: #{outfits_transformer.3} parent=5 // pred_check
        _
      $region74: #{outfits_transformer.3} parent=5 // pred_check_branch
        %427 = sbr.rel (%p424) target = $region76
      $region75: #{outfits_transformer.3} parent=5 // pred_region
        %s428 = ssub.s32 %s23, 1
        %p429 = scmp.lt.s32.totalorder %s28, 1
        %s430 = scalar_select %p429, %s28, 1
        %s431 = smul.addr %s430, 8
        %s432 = scalar_lea.vmem %s0, %s431
        %p433 = pneg %p49
        %p434 = pneg %p46
        %p435 = scmp.lt.s32.totalorder %s28, 1
        %s436 = scalar_select %p435, %s28, 1
        %s437 = smul.addr %s436, 4
        %s438 = scalar_lea.vmem %s1, %s437
        %p439 = pneg %p75
        %p440 = pneg %p72
        %p441 = pneg %p96
        %p442 = pneg %p93
        %p443 = pneg %p117
        %p444 = pneg %p114
        %p445 = pneg %p138
        %p446 = pneg %p135
        %p447 = pneg %p159
        %p448 = pneg %p156
        %p449 = pneg %p180
        %p450 = pneg %p177
        %p451 = pneg %p201
        %p452 = pneg %p198
        %p453 = pneg %p222
        %p454 = pneg %p219
        %p455 = pneg %p243
        %p456 = pneg %p240
        %p457 = pneg %p264
        %p458 = pneg %p261
        %p459 = pneg %p285
        %p460 = pneg %p282
        %p461 = pneg %p306
        %p462 = pneg %p303
        %p463 = pneg %p327
        %p464 = pneg %p324
        %p465 = pneg %p353
        %p466 = pneg %p350
        %s467 = sand.u32 %s340, 1
        %s468 = scalar_lea.sflag [#allocation3], %s467
        %s469 = sand.u32 %s340, 1
        %s470 = smul.addr %s469, 8
        %s471 = scalar_lea.vmem [#allocation2], %s470
        %p472 = scmp.lt.s32.totalorder %s28, 1
        %s473 = scalar_select %p472, %s28, 1
        %s474 = smul.addr %s473, 8
        %s475 = scalar_lea.vmem %s0, %s474
        %p476 = scmp.lt.s32.totalorder %s28, 1
        %s477 = scalar_select %p476, %s28, 1
        %s478 = smul.addr %s477, 4
        %s479 = scalar_lea.vmem %s1, %s478
        %v481 = vld [vmem:[%s475] sm:$0xff]
        %vm482 = vcmask 261120
        %v483 = vsel %vm482, %v481, 0.0
        %484 = vadd.xlane.f32.xlu0 %v483
        %v485 = vpop.xlane.xlu0 %484
        %v486 = vrcp.pop 32.0
        %v487 = vmul.f32 %v485, %v486
        %v488 = vsub.f32 %v481, %v487
        %v489 = vmul.f32 %v488, %v488
        %v490 = vsel %vm482, %v489, 0.0
        %491 = vadd.xlane.f32.xlu0 %v490
        %v492 = vpop.xlane.xlu0 %491
        %v493 = vmul.f32 %v492, %v486
        %v494 = vadd.f32 %v493, 1e-05
        %v495 = vrsqrt.pop %v494
        %v496 = vmul.f32 %v488, %v495
        %v497 = vld [vmem:[%s2] sm:$0x1]
        %v499 = vlaneseq
        %v500 = vshrl.u32 %v499, 7
        %v501 = vsub.s32 0, %v500
        %v502 = vrot.slane %v497, %v501
        %v504 = vmul.f32 %v496, %v502
        %v505 = vld [vmem:[%s3] sm:$0x1]
        %v507 = vlaneseq
        %v508 = vshrl.u32 %v507, 7
        %v509 = vsub.s32 0, %v508
        %v510 = vrot.slane %v505, %v509
        %v512 = vadd.f32 %v504, %v510
        %v513 = vpack.c.bf16 %v512, %v512
        %v514 = vld [vmem:[%s4] sm:$0xf]
        %v515 = vld [vmem:[%s4 + $0x4] sm:$0xf]
        %v516 = vld [vmem:[%s4 + $0x8] sm:$0xf]
        %v517 = vld [vmem:[%s4 + $0xc] sm:$0xf]
        %v518 = vld [vmem:[%s5] sm:$0x1]
        %v520 = vlaneseq
        %v521 = vshrl.u32 %v520, 7
        %v522 = vsub.s32 0, %v521
        %v523 = vrot.slane %v518, %v522
        %v529 = vunpack.c.l.b16 %v514
        %v530 = vunpack.c.l.b16 %v515
        %v531 = vunpack.c.l.b16 %v516
        %v532 = vunpack.c.l.b16 %v517
        %v533 = vpack.c.b16 %v530, %v529
        %v534 = vpack.c.b16 %v532, %v531
        %v538 = vsel %vm482, %v513, 0
        %540 = vmatprep.subr.bf16.mxu0 0
        %541 = vmatpush1.bf16.msra.mxu0 %v533
        %542 = vmatprep.subr.bf16.mxu0 0
        %543 = vmatpush1.bf16.msra.mxu0 %v534
        %544 = vmatprep.subr.bf16.mxu0 0
        %545 = vmatpush1.bf16.msra.mxu0 0
        %546 = vmatprep.subr.bf16.mxu0 0
        %547 = vmatpush1.bf16.msra.mxu0 0
        %548 = vmatprep.subr.bf16.mxu0 0
        %549 = vmatpush1.bf16.msra.mxu0 0
        %550 = vmatprep.subr.bf16.mxu0 0
        %551 = vmatpush1.bf16.msra.mxu0 0
        %552 = vmatprep.subr.bf16.mxu0 0
        %553 = vmatpush1.bf16.msra.mxu0 0
        %554 = vmatprep.subr.bf16.mxu0 0
        %555 = vmatpush1.bf16.msra.mxu0 0
        %556 = vmatprep.subr.bf16.mxu0 0
        %557 = vmatpush1.bf16.msra.mxu0 0
        %558 = vmatprep.subr.bf16.mxu0 0
        %559 = vmatpush1.bf16.msra.mxu0 0
        %560 = vmatprep.subr.bf16.mxu0 0
        %561 = vmatpush1.bf16.msra.mxu0 0
        %562 = vmatprep.subr.bf16.mxu0 0
        %563 = vmatpush1.bf16.msra.mxu0 0
        %564 = vmatprep.subr.bf16.mxu0 0
        %565 = vmatpush1.bf16.msra.mxu0 0
        %566 = vmatprep.subr.bf16.mxu0 0
        %567 = vmatpush1.bf16.msra.mxu0 0
        %568 = vmatprep.subr.bf16.mxu0 0
        %569 = vmatpush1.bf16.msra.mxu0 0
        %570 = vmatprep.subr.bf16.mxu0 0
        %571 = vmatpush1.bf16.msra.mxu0 0
        %572 = vmatprep.mubr.bf16.mxu0 0
        %573 = vmatmul.mubr.bf16.gmra.mrb[0].mxu0 %v538
        %v574 = vpop.f32.mrb[0].mxu0
        %v575 = vadd.f32 %v523, %v574
        %v576 = vpop.f32.mrb[0].mxu0
        %v577 = vpop.f32.mrb[0].mxu0
        %v578 = vpop.f32.mrb[0].mxu0
        %579 = vdwg.mxu0
        %v580 = vld [vmem:[%s479] sm:$0xf]
        %v581 = vld [vmem:[%s7] sm:$0x1]
        %v583 = vlaneseq
        %v584 = vshrl.u32 %v583, 7
        %v585 = vsub.s32 0, %v584
        %v586 = vrot.slane %v581, %v585
        %v588 = vadd.f32 %v586, 0.0
        %v589 = vpack.c.bf16 %v575, %v575
        %v590 = vlaneseq
        %v591 = vshrl.u32 %v590, 7
        %v592 = vsub.s32 0, %v591
        %v593 = vrot.slane %v580, %v592
        %595 = vbcast.lane.b32.xlu0 %v593, 256
        %v596 = vpop.permute.xlu0 %595
        %v597 = vmul.f32 %v596, %v593
        %599 = vrot.lane.b32.xlu0 %v589, 96
        %v600 = vpop.permute.xlu0 %599
        %vm601 = vcmask 64512
        %v603 = vsel %vm601, %v589, 0
        %v606 = vsel %vm601, %v600, 0
        %608 = vmatprep.subr.bf16.mxu0 0
        %609 = vmatpush1.bf16.xpose.msra.mxu0 %v606
        %610 = vmatprep.subr.bf16.mxu0 0
        %611 = vmatpush1.bf16.xpose.msra.mxu0 0
        %612 = vmatprep.subr.bf16.mxu0 0
        %613 = vmatpush1.bf16.xpose.msra.mxu0 0
        %614 = vmatprep.subr.bf16.mxu0 0
        %615 = vmatpush1.bf16.xpose.msra.mxu0 0
        %616 = vmatprep.subr.bf16.mxu0 0
        %617 = vmatpush1.bf16.xpose.msra.mxu0 0
        %618 = vmatprep.subr.bf16.mxu0 0
        %619 = vmatpush1.bf16.xpose.msra.mxu0 0
        %620 = vmatprep.subr.bf16.mxu0 0
        %621 = vmatpush1.bf16.xpose.msra.mxu0 0
        %622 = vmatprep.subr.bf16.mxu0 0
        %623 = vmatpush1.bf16.xpose.msra.mxu0 0
        %624 = vmatprep.subr.bf16.mxu0 0
        %625 = vmatpush1.bf16.xpose.msra.mxu0 0
        %626 = vmatprep.subr.bf16.mxu0 0
        %627 = vmatpush1.bf16.xpose.msra.mxu0 0
        %628 = vmatprep.subr.bf16.mxu0 0
        %629 = vmatpush1.bf16.xpose.msra.mxu0 0
        %630 = vmatprep.subr.bf16.mxu0 0
        %631 = vmatpush1.bf16.xpose.msra.mxu0 0
        %632 = vmatprep.subr.bf16.mxu0 0
        %633 = vmatpush1.bf16.xpose.msra.mxu0 0
        %634 = vmatprep.subr.bf16.mxu0 0
        %635 = vmatpush1.bf16.xpose.msra.mxu0 0
        %636 = vmatprep.subr.bf16.mxu0 0
        %637 = vmatpush1.bf16.xpose.msra.mxu0 0
        %638 = vmatprep.subr.bf16.mxu0 0
        %639 = vmatpush1.bf16.xpose.msra.mxu0 0
        %640 = vmatprep.mubr.bf16.mxu0 0
        %641 = vmatmul.mubr.bf16.gmra.mrb[0].mxu0 %v603
        %v642 = vpop.f32.mrb[0].mxu0
        %v643 = vadd.f32 %v597, %v642
        %v644 = vpop.f32.mrb[0].mxu0
        %v645 = vpop.f32.mrb[0].mxu0
        %v646 = vpop.f32.mrb[0].mxu0
        %647 = vdwg.mxu0
        %v648 = vsel %vm601, %v643, -inf
        %649 = vmax.xlane.f32.xlu0 %v648
        %v650 = vpop.xlane.xlu0 %649
        %v651 = vsub.f32 %v643, %v650
        %v652 = vmul.f32 %v651, 1.442695
        %v653 = vpow.pop %v652
        %v654 = vsel %vm601, %v653, 0.0
        %655 = vadd.xlane.f32.xlu0 %v654
        %v656 = vpop.xlane.xlu0 %655
        %v657 = vrcp.pop %v656
        %v658 = vmul.f32 %v653, %v657
        %v659 = vpack.c.bf16 %v658, %v658
        %660 = vrot.lane.b32.xlu0 %v589, 64
        %v661 = vpop.permute.xlu0 %660
        %v663 = vsel %vm601, %v659, 0
        %vm665 = vcmask 1043456
        %v667 = vsel %vm665, %v661, 0
        %669 = vmatprep.subr.bf16.mxu0 0
        %670 = vmatpush1.bf16.msra.mxu0 %v667
        %671 = vmatprep.subr.bf16.mxu0 0
        %672 = vmatpush1.bf16.msra.mxu0 0
        %673 = vmatprep.subr.bf16.mxu0 0
        %674 = vmatpush1.bf16.msra.mxu0 0
        %675 = vmatprep.subr.bf16.mxu0 0
        %676 = vmatpush1.bf16.msra.mxu0 0
        %677 = vmatprep.subr.bf16.mxu0 0
        %678 = vmatpush1.bf16.msra.mxu0 0
        %679 = vmatprep.subr.bf16.mxu0 0
        %680 = vmatpush1.bf16.msra.mxu0 0
        %681 = vmatprep.subr.bf16.mxu0 0
        %682 = vmatpush1.bf16.msra.mxu0 0
        %683 = vmatprep.subr.bf16.mxu0 0
        %684 = vmatpush1.bf16.msra.mxu0 0
        %685 = vmatprep.subr.bf16.mxu0 0
        %686 = vmatpush1.bf16.msra.mxu0 0
        %687 = vmatprep.subr.bf16.mxu0 0
        %688 = vmatpush1.bf16.msra.mxu0 0
        %689 = vmatprep.subr.bf16.mxu0 0
        %690 = vmatpush1.bf16.msra.mxu0 0
        %691 = vmatprep.subr.bf16.mxu0 0
        %692 = vmatpush1.bf16.msra.mxu0 0
        %693 = vmatprep.subr.bf16.mxu0 0
        %694 = vmatpush1.bf16.msra.mxu0 0
        %695 = vmatprep.subr.bf16.mxu0 0
        %696 = vmatpush1.bf16.msra.mxu0 0
        %697 = vmatprep.subr.bf16.mxu0 0
        %698 = vmatpush1.bf16.msra.mxu0 0
        %699 = vmatprep.subr.bf16.mxu0 0
        %700 = vmatpush1.bf16.msra.mxu0 0
        %701 = vmatprep.mubr.bf16.mxu0 0
        %702 = vmatmul.mubr.bf16.gmra.mrb[0].mxu0 %v663
        %v703 = vpop.f32.mrb[0].mxu0
        %v704 = vadd.f32 0.0, %v703
        %v705 = vpop.f32.mrb[0].mxu0
        %v706 = vpop.f32.mrb[0].mxu0
        %v707 = vpop.f32.mrb[0].mxu0
        %708 = vdwg.mxu0
        %v709 = vpack.c.bf16 %v704, %v704
        %v710 = vld [vmem:[%s6] sm:$0xf]
        %v712 = vsel %vm601, %v709, 0
        %v715 = vsel %vm665, %v710, 0
        %717 = vmatprep.subr.bf16.mxu0 0
        %718 = vmatpush1.bf16.msra.mxu0 %v715
        %719 = vmatprep.subr.bf16.mxu0 0
        %720 = vmatpush1.bf16.msra.mxu0 0
        %721 = vmatprep.subr.bf16.mxu0 0
        %722 = vmatpush1.bf16.msra.mxu0 0
        %723 = vmatprep.subr.bf16.mxu0 0
        %724 = vmatpush1.bf16.msra.mxu0 0
        %725 = vmatprep.subr.bf16.mxu0 0
        %726 = vmatpush1.bf16.msra.mxu0 0
        %727 = vmatprep.subr.bf16.mxu0 0
        %728 = vmatpush1.bf16.msra.mxu0 0
        %729 = vmatprep.subr.bf16.mxu0 0
        %730 = vmatpush1.bf16.msra.mxu0 0
        %731 = vmatprep.subr.bf16.mxu0 0
        %732 = vmatpush1.bf16.msra.mxu0 0
        %733 = vmatprep.subr.bf16.mxu0 0
        %734 = vmatpush1.bf16.msra.mxu0 0
        %735 = vmatprep.subr.bf16.mxu0 0
        %736 = vmatpush1.bf16.msra.mxu0 0
        %737 = vmatprep.subr.bf16.mxu0 0
        %738 = vmatpush1.bf16.msra.mxu0 0
        %739 = vmatprep.subr.bf16.mxu0 0
        %740 = vmatpush1.bf16.msra.mxu0 0
        %741 = vmatprep.subr.bf16.mxu0 0
        %742 = vmatpush1.bf16.msra.mxu0 0
        %743 = vmatprep.subr.bf16.mxu0 0
        %744 = vmatpush1.bf16.msra.mxu0 0
        %745 = vmatprep.subr.bf16.mxu0 0
        %746 = vmatpush1.bf16.msra.mxu0 0
        %747 = vmatprep.subr.bf16.mxu0 0
        %748 = vmatpush1.bf16.msra.mxu0 0
        %749 = vmatprep.mubr.bf16.mxu0 0
        %750 = vmatmul.mubr.bf16.gmra.mrb[0].mxu0 %v712
        %v751 = vpop.f32.mrb[0].mxu0
        %v752 = vadd.f32 0.0, %v751
        %v753 = vpop.f32.mrb[0].mxu0
        %v754 = vpop.f32.mrb[0].mxu0
        %v755 = vpop.f32.mrb[0].mxu0
        %756 = vdwg.mxu0
        %v757 = vadd.f32 %v588, %v752
        %v758 = vlaneseq
        %v759 = vshrl.u32 %v758, 7
        %v760 = vsub.s32 1, %v759
        %v761 = vrot.slane %v580, %v760
        %763 = vbcast.lane.b32.xlu0 %v761, 256
        %v764 = vpop.permute.xlu0 %763
        %v765 = vmul.f32 %v764, %v761
        %766 = vrot.lane.b32.xlu0 %v589, 120
        %v767 = vpop.permute.xlu0 %766
        %768 = vrot.lane.b32.xlu0 %v589, 88
        %v769 = vpop.permute.xlu0 %768
        %v771 = vsel %vm601, %v767, 0
        %v774 = vsel %vm601, %v769, 0
        %776 = vmatprep.subr.bf16.mxu0 0
        %777 = vmatpush1.bf16.xpose.msra.mxu0 %v774
        %778 = vmatprep.subr.bf16.mxu0 0
        %779 = vmatpush1.bf16.xpose.msra.mxu0 0
        %780 = vmatprep.subr.bf16.mxu0 0
        %781 = vmatpush1.bf16.xpose.msra.mxu0 0
        %782 = vmatprep.subr.bf16.mxu0 0
        %783 = vmatpush1.bf16.xpose.msra.mxu0 0
        %784 = vmatprep.subr.bf16.mxu0 0
        %785 = vmatpush1.bf16.xpose.msra.mxu0 0
        %786 = vmatprep.subr.bf16.mxu0 0
        %787 = vmatpush1.bf16.xpose.msra.mxu0 0
        %788 = vmatprep.subr.bf16.mxu0 0
        %789 = vmatpush1.bf16.xpose.msra.mxu0 0
        %790 = vmatprep.subr.bf16.mxu0 0
        %791 = vmatpush1.bf16.xpose.msra.mxu0 0
        %792 = vmatprep.subr.bf16.mxu0 0
        %793 = vmatpush1.bf16.xpose.msra.mxu0 0
        %794 = vmatprep.subr.bf16.mxu0 0
        %795 = vmatpush1.bf16.xpose.msra.mxu0 0
        %796 = vmatprep.subr.bf16.mxu0 0
        %797 = vmatpush1.bf16.xpose.msra.mxu0 0
        %798 = vmatprep.subr.bf16.mxu0 0
        %799 = vmatpush1.bf16.xpose.msra.mxu0 0
        %800 = vmatprep.subr.bf16.mxu0 0
        %801 = vmatpush1.bf16.xpose.msra.mxu0 0
        %802 = vmatprep.subr.bf16.mxu0 0
        %803 = vmatpush1.bf16.xpose.msra.mxu0 0
        %804 = vmatprep.subr.bf16.mxu0 0
        %805 = vmatpush1.bf16.xpose.msra.mxu0 0
        %806 = vmatprep.subr.bf16.mxu0 0
        %807 = vmatpush1.bf16.xpose.msra.mxu0 0
        %808 = vmatprep.mubr.bf16.mxu0 0
        %809 = vmatmul.mubr.bf16.gmra.mrb[0].mxu0 %v771
        %v810 = vpop.f32.mrb[0].mxu0
        %v811 = vadd.f32 %v765, %v810
        %v812 = vpop.f32.mrb[0].mxu0
        %v813 = vpop.f32.mrb[0].mxu0
        %v814 = vpop.f32.mrb[0].mxu0
        %815 = vdwg.mxu0
        %v816 = vsel %vm601, %v811, -inf
        %817 = vmax.xlane.f32.xlu0 %v816
        %v818 = vpop.xlane.xlu0 %817
        %v819 = vsub.f32 %v811, %v818
        %v820 = vmul.f32 %v819, 1.442695
        %v821 = vpow.pop %v820
        %v822 = vsel %vm601, %v821, 0.0
        %823 = vadd.xlane.f32.xlu0 %v822
        %v824 = vpop.xlane.xlu0 %823
        %v825 = vrcp.pop %v824
        %v826 = vmul.f32 %v821, %v825
        %v827 = vpack.c.bf16 %v826, %v826
        %828 = vrot.lane.b32.xlu0 %v589, 56
        %v829 = vpop.permute.xlu0 %828
        %v831 = vsel %vm601, %v827, 0
        %v834 = vsel %vm665, %v829, 0
        %836 = vmatprep.subr.bf16.mxu0 0
        %837 = vmatpush1.bf16.msra.mxu0 %v834
        %838 = vmatprep.subr.bf16.mxu0 0
        %839 = vmatpush1.bf16.msra.mxu0 0
        %840 = vmatprep.subr.bf16.mxu0 0
        %841 = vmatpush1.bf16.msra.mxu0 0
        %842 = vmatprep.subr.bf16.mxu0 0
        %843 = vmatpush1.bf16.msra.mxu0 0
        %844 = vmatprep.subr.bf16.mxu0 0
        %845 = vmatpush1.bf16.msra.mxu0 0
        %846 = vmatprep.subr.bf16.mxu0 0
        %847 = vmatpush1.bf16.msra.mxu0 0
        %848 = vmatprep.subr.bf16.mxu0 0
        %849 = vmatpush1.bf16.msra.mxu0 0
        %850 = vmatprep.subr.bf16.mxu0 0
        %851 = vmatpush1.bf16.msra.mxu0 0
        %852 = vmatprep.subr.bf16.mxu0 0
        %853 = vmatpush1.bf16.msra.mxu0 0
        %854 = vmatprep.subr.bf16.mxu0 0
        %855 = vmatpush1.bf16.msra.mxu0 0
        %856 = vmatprep.subr.bf16.mxu0 0
        %857 = vmatpush1.bf16.msra.mxu0 0
        %858 = vmatprep.subr.bf16.mxu0 0
        %859 = vmatpush1.bf16.msra.mxu0 0
        %860 = vmatprep.subr.bf16.mxu0 0
        %861 = vmatpush1.bf16.msra.mxu0 0
        %862 = vmatprep.subr.bf16.mxu0 0
        %863 = vmatpush1.bf16.msra.mxu0 0
        %864 = vmatprep.subr.bf16.mxu0 0
        %865 = vmatpush1.bf16.msra.mxu0 0
        %866 = vmatprep.subr.bf16.mxu0 0
        %867 = vmatpush1.bf16.msra.mxu0 0
        %868 = vmatprep.mubr.bf16.mxu0 0
        %869 = vmatmul.mubr.bf16.gmra.mrb[0].mxu0 %v831
        %v870 = vpop.f32.mrb[0].mxu0
        %v871 = vadd.f32 0.0, %v870
        %v872 = vpop.f32.mrb[0].mxu0
        %v873 = vpop.f32.mrb[0].mxu0
        %v874 = vpop.f32.mrb[0].mxu0
        %875 = vdwg.mxu0
        %v876 = vpack.c.bf16 %v871, %v871
        %v877 = vld [vmem:[%s6 + $0x4] sm:$0xf]
        %v879 = vsel %vm601, %v876, 0
        %v882 = vsel %vm665, %v877, 0
        %884 = vmatprep.subr.bf16.mxu0 0
        %885 = vmatpush1.bf16.msra.mxu0 %v882
        %886 = vmatprep.subr.bf16.mxu0 0
        %887 = vmatpush1.bf16.msra.mxu0 0
        %888 = vmatprep.subr.bf16.mxu0 0
        %889 = vmatpush1.bf16.msra.mxu0 0
        %890 = vmatprep.subr.bf16.mxu0 0
        %891 = vmatpush1.bf16.msra.mxu0 0
        %892 = vmatprep.subr.bf16.mxu0 0
        %893 = vmatpush1.bf16.msra.mxu0 0
        %894 = vmatprep.subr.bf16.mxu0 0
        %895 = vmatpush1.bf16.msra.mxu0 0
        %896 = vmatprep.subr.bf16.mxu0 0
        %897 = vmatpush1.bf16.msra.mxu0 0
        %898 = vmatprep.subr.bf16.mxu0 0
        %899 = vmatpush1.bf16.msra.mxu0 0
        %900 = vmatprep.subr.bf16.mxu0 0
        %901 = vmatpush1.bf16.msra.mxu0 0
        %902 = vmatprep.subr.bf16.mxu0 0
        %903 = vmatpush1.bf16.msra.mxu0 0
        %904 = vmatprep.subr.bf16.mxu0 0
        %905 = vmatpush1.bf16.msra.mxu0 0
        %906 = vmatprep.subr.bf16.mxu0 0
        %907 = vmatpush1.bf16.msra.mxu0 0
        %908 = vmatprep.subr.bf16.mxu0 0
        %909 = vmatpush1.bf16.msra.mxu0 0
        %910 = vmatprep.subr.bf16.mxu0 0
        %911 = vmatpush1.bf16.msra.mxu0 0
        %912 = vmatprep.subr.bf16.mxu0 0
        %913 = vmatpush1.bf16.msra.mxu0 0
        %914 = vmatprep.subr.bf16.mxu0 0
        %915 = vmatpush1.bf16.msra.mxu0 0
        %916 = vmatprep.mubr.bf16.mxu0 0
        %917 = vmatmul.mubr.bf16.gmra.mrb[0].mxu0 %v879
        %v918 = vpop.f32.mrb[0].mxu0
        %v919 = vadd.f32 0.0, %v918
        %v920 = vpop.f32.mrb[0].mxu0
        %v921 = vpop.f32.mrb[0].mxu0
        %v922 = vpop.f32.mrb[0].mxu0
        %923 = vdwg.mxu0
        %v924 = vadd.f32 %v757, %v919
        %v925 = vlaneseq
        %v926 = vshrl.u32 %v925, 7
        %v927 = vsub.s32 2, %v926
        %v928 = vrot.slane %v580, %v927
        %930 = vbcast.lane.b32.xlu0 %v928, 256
        %v931 = vpop.permute.xlu0 %930
        %v932 = vmul.f32 %v931, %v928
        %933 = vrot.lane.b32.xlu0 %v589, 112
        %v934 = vpop.permute.xlu0 %933
        %935 = vrot.lane.b32.xlu0 %v589, 80
        %v936 = vpop.permute.xlu0 %935
        %v938 = vsel %vm601, %v934, 0
        %v941 = vsel %vm601, %v936, 0
        %943 = vmatprep.subr.bf16.mxu0 0
        %944 = vmatpush1.bf16.xpose.msra.mxu0 %v941
        %945 = vmatprep.subr.bf16.mxu0 0
        %946 = vmatpush1.bf16.xpose.msra.mxu0 0
        %947 = vmatprep.subr.bf16.mxu0 0
        %948 = vmatpush1.bf16.xpose.msra.mxu0 0
        %949 = vmatprep.subr.bf16.mxu0 0
        %950 = vmatpush1.bf16.xpose.msra.mxu0 0
        %951 = vmatprep.subr.bf16.mxu0 0
        %952 = vmatpush1.bf16.xpose.msra.mxu0 0
        %953 = vmatprep.subr.bf16.mxu0 0
        %954 = vmatpush1.bf16.xpose.msra.mxu0 0
        %955 = vmatprep.subr.bf16.mxu0 0
        %956 = vmatpush1.bf16.xpose.msra.mxu0 0
        %957 = vmatprep.subr.bf16.mxu0 0
        %958 = vmatpush1.bf16.xpose.msra.mxu0 0
        %959 = vmatprep.subr.bf16.mxu0 0
        %960 = vmatpush1.bf16.xpose.msra.mxu0 0
        %961 = vmatprep.subr.bf16.mxu0 0
        %962 = vmatpush1.bf16.xpose.msra.mxu0 0
        %963 = vmatprep.subr.bf16.mxu0 0
        %964 = vmatpush1.bf16.xpose.msra.mxu0 0
        %965 = vmatprep.subr.bf16.mxu0 0
        %966 = vmatpush1.bf16.xpose.msra.mxu0 0
        %967 = vmatprep.subr.bf16.mxu0 0
        %968 = vmatpush1.bf16.xpose.msra.mxu0 0
        %969 = vmatprep.subr.bf16.mxu0 0
        %970 = vmatpush1.bf16.xpose.msra.mxu0 0
        %971 = vmatprep.subr.bf16.mxu0 0
        %972 = vmatpush1.bf16.xpose.msra.mxu0 0
        %973 = vmatprep.subr.bf16.mxu0 0
        %974 = vmatpush1.bf16.xpose.msra.mxu0 0
        %975 = vmatprep.mubr.bf16.mxu0 0
        %976 = vmatmul.mubr.bf16.gmra.mrb[0].mxu0 %v938
        %v977 = vpop.f32.mrb[0].mxu0
        %v978 = vadd.f32 %v932, %v977
        %v979 = vpop.f32.mrb[0].mxu0
        %v980 = vpop.f32.mrb[0].mxu0
        %v981 = vpop.f32.mrb[0].mxu0
        %982 = vdwg.mxu0
        %v983 = vsel %vm601, %v978, -inf
        %984 = vmax.xlane.f32.xlu0 %v983
        %v985 = vpop.xlane.xlu0 %984
        %v986 = vsub.f32 %v978, %v985
        %v987 = vmul.f32 %v986, 1.442695
        %v988 = vpow.pop %v987
        %v989 = vsel %vm601, %v988, 0.0
        %990 = vadd.xlane.f32.xlu0 %v989
        %v991 = vpop.xlane.xlu0 %990
        %v992 = vrcp.pop %v991
        %v993 = vmul.f32 %v988, %v992
        %v994 = vpack.c.bf16 %v993, %v993
        %995 = vrot.lane.b32.xlu0 %v589, 48
        %v996 = vpop.permute.xlu0 %995
        %v998 = vsel %vm601, %v994, 0
        %v1001 = vsel %vm665, %v996, 0
        %1003 = vmatprep.subr.bf16.mxu0 0
        %1004 = vmatpush1.bf16.msra.mxu0 %v1001
        %1005 = vmatprep.subr.bf16.mxu0 0
        %1006 = vmatpush1.bf16.msra.mxu0 0
        %1007 = vmatprep.subr.bf16.mxu0 0
        %1008 = vmatpush1.bf16.msra.mxu0 0
        %1009 = vmatprep.subr.bf16.mxu0 0
        %1010 = vmatpush1.bf16.msra.mxu0 0
        %1011 = vmatprep.subr.bf16.mxu0 0
        %1012 = vmatpush1.bf16.msra.mxu0 0
        %1013 = vmatprep.subr.bf16.mxu0 0
        %1014 = vmatpush1.bf16.msra.mxu0 0
        %1015 = vmatprep.subr.bf16.mxu0 0
        %1016 = vmatpush1.bf16.msra.mxu0 0
        %1017 = vmatprep.subr.bf16.mxu0 0
        %1018 = vmatpush1.bf16.msra.mxu0 0
        %1019 = vmatprep.subr.bf16.mxu0 0
        %1020 = vmatpush1.bf16.msra.mxu0 0
        %1021 = vmatprep.subr.bf16.mxu0 0
        %1022 = vmatpush1.bf16.msra.mxu0 0
        %1023 = vmatprep.subr.bf16.mxu0 0
        %1024 = vmatpush1.bf16.msra.mxu0 0
        %1025 = vmatprep.subr.bf16.mxu0 0
        %1026 = vmatpush1.bf16.msra.mxu0 0
        %1027 = vmatprep.subr.bf16.mxu0 0
        %1028 = vmatpush1.bf16.msra.mxu0 0
        %1029 = vmatprep.subr.bf16.mxu0 0
        %1030 = vmatpush1.bf16.msra.mxu0 0
        %1031 = vmatprep.subr.bf16.mxu0 0
        %1032 = vmatpush1.bf16.msra.mxu0 0
        %1033 = vmatprep.subr.bf16.mxu0 0
        %1034 = vmatpush1.bf16.msra.mxu0 0
        %1035 = vmatprep.mubr.bf16.mxu0 0
        %1036 = vmatmul.mubr.bf16.gmra.mrb[0].mxu0 %v998
        %v1037 = vpop.f32.mrb[0].mxu0
        %v1038 = vadd.f32 0.0, %v1037
        %v1039 = vpop.f32.mrb[0].mxu0
        %v1040 = vpop.f32.mrb[0].mxu0
        %v1041 = vpop.f32.mrb[0].mxu0
        %1042 = vdwg.mxu0
        %v1043 = vpack.c.bf16 %v1038, %v1038
        %v1044 = vld [vmem:[%s6 + $0x8] sm:$0xf]
        %v1046 = vsel %vm601, %v1043, 0
        %v1049 = vsel %vm665, %v1044, 0
        %1051 = vmatprep.subr.bf16.mxu0 0
        %1052 = vmatpush1.bf16.msra.mxu0 %v1049
        %1053 = vmatprep.subr.bf16.mxu0 0
        %1054 = vmatpush1.bf16.msra.mxu0 0
        %1055 = vmatprep.subr.bf16.mxu0 0
        %1056 = vmatpush1.bf16.msra.mxu0 0
        %1057 = vmatprep.subr.bf16.mxu0 0
        %1058 = vmatpush1.bf16.msra.mxu0 0
        %1059 = vmatprep.subr.bf16.mxu0 0
        %1060 = vmatpush1.bf16.msra.mxu0 0
        %1061 = vmatprep.subr.bf16.mxu0 0
        %1062 = vmatpush1.bf16.msra.mxu0 0
        %1063 = vmatprep.subr.bf16.mxu0 0
        %1064 = vmatpush1.bf16.msra.mxu0 0
        %1065 = vmatprep.subr.bf16.mxu0 0
        %1066 = vmatpush1.bf16.msra.mxu0 0
        %1067 = vmatprep.subr.bf16.mxu0 0
        %1068 = vmatpush1.bf16.msra.mxu0 0
        %1069 = vmatprep.subr.bf16.mxu0 0
        %1070 = vmatpush1.bf16.msra.mxu0 0
        %1071 = vmatprep.subr.bf16.mxu0 0
        %1072 = vmatpush1.bf16.msra.mxu0 0
        %1073 = vmatprep.subr.bf16.mxu0 0
        %1074 = vmatpush1.bf16.msra.mxu0 0
        %1075 = vmatprep.subr.bf16.mxu0 0
        %1076 = vmatpush1.bf16.msra.mxu0 0
        %1077 = vmatprep.subr.bf16.mxu0 0
        %1078 = vmatpush1.bf16.msra.mxu0 0
        %1079 = vmatprep.subr.bf16.mxu0 0
        %1080 = vmatpush1.bf16.msra.mxu0 0
        %1081 = vmatprep.subr.bf16.mxu0 0
        %1082 = vmatpush1.bf16.msra.mxu0 0
        %1083 = vmatprep.mubr.bf16.mxu0 0
        %1084 = vmatmul.mubr.bf16.gmra.mrb[0].mxu0 %v1046
        %v1085 = vpop.f32.mrb[0].mxu0
        %v1086 = vadd.f32 0.0, %v1085
        %v1087 = vpop.f32.mrb[0].mxu0
        %v1088 = vpop.f32.mrb[0].mxu0
        %v1089 = vpop.f32.mrb[0].mxu0
        %1090 = vdwg.mxu0
        %v1091 = vadd.f32 %v924, %v1086
        %v1092 = vlaneseq
        %v1093 = vshrl.u32 %v1092, 7
        %v1094 = vsub.s32 3, %v1093
        %v1095 = vrot.slane %v580, %v1094
        %1097 = vbcast.lane.b32.xlu0 %v1095, 256
        %v1098 = vpop.permute.xlu0 %1097
        %v1099 = vmul.f32 %v1098, %v1095
        %1100 = vrot.lane.b32.xlu0 %v589, 104
        %v1101 = vpop.permute.xlu0 %1100
        %1102 = vrot.lane.b32.xlu0 %v589, 72
        %v1103 = vpop.permute.xlu0 %1102
        %v1105 = vsel %vm601, %v1101, 0
        %v1108 = vsel %vm601, %v1103, 0
        %1110 = vmatprep.subr.bf16.mxu0 0
        %1111 = vmatpush1.bf16.xpose.msra.mxu0 %v1108
        %1112 = vmatprep.subr.bf16.mxu0 0
        %1113 = vmatpush1.bf16.xpose.msra.mxu0 0
        %1114 = vmatprep.subr.bf16.mxu0 0
        %1115 = vmatpush1.bf16.xpose.msra.mxu0 0
        %1116 = vmatprep.subr.bf16.mxu0 0
        %1117 = vmatpush1.bf16.xpose.msra.mxu0 0
        %1118 = vmatprep.subr.bf16.mxu0 0
        %1119 = vmatpush1.bf16.xpose.msra.mxu0 0
        %1120 = vmatprep.subr.bf16.mxu0 0
        %1121 = vmatpush1.bf16.xpose.msra.mxu0 0
        %1122 = vmatprep.subr.bf16.mxu0 0
        %1123 = vmatpush1.bf16.xpose.msra.mxu0 0
        %1124 = vmatprep.subr.bf16.mxu0 0
        %1125 = vmatpush1.bf16.xpose.msra.mxu0 0
        %1126 = vmatprep.subr.bf16.mxu0 0
        %1127 = vmatpush1.bf16.xpose.msra.mxu0 0
        %1128 = vmatprep.subr.bf16.mxu0 0
        %1129 = vmatpush1.bf16.xpose.msra.mxu0 0
        %1130 = vmatprep.subr.bf16.mxu0 0
        %1131 = vmatpush1.bf16.xpose.msra.mxu0 0
        %1132 = vmatprep.subr.bf16.mxu0 0
        %1133 = vmatpush1.bf16.xpose.msra.mxu0 0
        %1134 = vmatprep.subr.bf16.mxu0 0
        %1135 = vmatpush1.bf16.xpose.msra.mxu0 0
        %1136 = vmatprep.subr.bf16.mxu0 0
        %1137 = vmatpush1.bf16.xpose.msra.mxu0 0
        %1138 = vmatprep.subr.bf16.mxu0 0
        %1139 = vmatpush1.bf16.xpose.msra.mxu0 0
        %1140 = vmatprep.subr.bf16.mxu0 0
        %1141 = vmatpush1.bf16.xpose.msra.mxu0 0
        %1142 = vmatprep.mubr.bf16.mxu0 0
        %1143 = vmatmul.mubr.bf16.gmra.mrb[0].mxu0 %v1105
        %v1144 = vpop.f32.mrb[0].mxu0
        %v1145 = vadd.f32 %v1099, %v1144
        %v1146 = vpop.f32.mrb[0].mxu0
        %v1147 = vpop.f32.mrb[0].mxu0
        %v1148 = vpop.f32.mrb[0].mxu0
        %1149 = vdwg.mxu0
        %v1150 = vsel %vm601, %v1145, -inf
        %1151 = vmax.xlane.f32.xlu0 %v1150
        %v1152 = vpop.xlane.xlu0 %1151
        %v1153 = vsub.f32 %v1145, %v1152
        %v1154 = vmul.f32 %v1153, 1.442695
        %v1155 = vpow.pop %v1154
        %v1156 = vsel %vm601, %v1155, 0.0
        %1157 = vadd.xlane.f32.xlu0 %v1156
        %v1158 = vpop.xlane.xlu0 %1157
        %v1159 = vrcp.pop %v1158
        %v1160 = vmul.f32 %v1155, %v1159
        %v1161 = vpack.c.bf16 %v1160, %v1160
        %1162 = vrot.lane.b32.xlu0 %v589, 40
        %v1163 = vpop.permute.xlu0 %1162
        %v1165 = vsel %vm601, %v1161, 0
        %v1168 = vsel %vm665, %v1163, 0
        %1170 = vmatprep.subr.bf16.mxu0 0
        %1171 = vmatpush1.bf16.msra.mxu0 %v1168
        %1172 = vmatprep.subr.bf16.mxu0 0
        %1173 = vmatpush1.bf16.msra.mxu0 0
        %1174 = vmatprep.subr.bf16.mxu0 0
        %1175 = vmatpush1.bf16.msra.mxu0 0
        %1176 = vmatprep.subr.bf16.mxu0 0
        %1177 = vmatpush1.bf16.msra.mxu0 0
        %1178 = vmatprep.subr.bf16.mxu0 0
        %1179 = vmatpush1.bf16.msra.mxu0 0
        %1180 = vmatprep.subr.bf16.mxu0 0
        %1181 = vmatpush1.bf16.msra.mxu0 0
        %1182 = vmatprep.subr.bf16.mxu0 0
        %1183 = vmatpush1.bf16.msra.mxu0 0
        %1184 = vmatprep.subr.bf16.mxu0 0
        %1185 = vmatpush1.bf16.msra.mxu0 0
        %1186 = vmatprep.subr.bf16.mxu0 0
        %1187 = vmatpush1.bf16.msra.mxu0 0
        %1188 = vmatprep.subr.bf16.mxu0 0
        %1189 = vmatpush1.bf16.msra.mxu0 0
        %1190 = vmatprep.subr.bf16.mxu0 0
        %1191 = vmatpush1.bf16.msra.mxu0 0
        %1192 = vmatprep.subr.bf16.mxu0 0
        %1193 = vmatpush1.bf16.msra.mxu0 0
        %1194 = vmatprep.subr.bf16.mxu0 0
        %1195 = vmatpush1.bf16.msra.mxu0 0
        %1196 = vmatprep.subr.bf16.mxu0 0
        %1197 = vmatpush1.bf16.msra.mxu0 0
        %1198 = vmatprep.subr.bf16.mxu0 0
        %1199 = vmatpush1.bf16.msra.mxu0 0
        %1200 = vmatprep.subr.bf16.mxu0 0
        %1201 = vmatpush1.bf16.msra.mxu0 0
        %1202 = vmatprep.mubr.bf16.mxu0 0
        %1203 = vmatmul.mubr.bf16.gmra.mrb[0].mxu0 %v1165
        %v1204 = vpop.f32.mrb[0].mxu0
        %v1205 = vadd.f32 0.0, %v1204
        %v1206 = vpop.f32.mrb[0].mxu0
        %v1207 = vpop.f32.mrb[0].mxu0
        %v1208 = vpop.f32.mrb[0].mxu0
        %1209 = vdwg.mxu0
        %v1210 = vpack.c.bf16 %v1205, %v1205
        %v1211 = vld [vmem:[%s6 + $0xc] sm:$0xf]
        %v1213 = vsel %vm601, %v1210, 0
        %v1216 = vsel %vm665, %v1211, 0
        %1218 = vmatprep.subr.bf16.mxu0 0
        %1219 = vmatpush1.bf16.msra.mxu0 %v1216
        %1220 = vmatprep.subr.bf16.mxu0 0
        %1221 = vmatpush1.bf16.msra.mxu0 0
        %1222 = vmatprep.subr.bf16.mxu0 0
        %1223 = vmatpush1.bf16.msra.mxu0 0
        %1224 = vmatprep.subr.bf16.mxu0 0
        %1225 = vmatpush1.bf16.msra.mxu0 0
        %1226 = vmatprep.subr.bf16.mxu0 0
        %1227 = vmatpush1.bf16.msra.mxu0 0
        %1228 = vmatprep.subr.bf16.mxu0 0
        %1229 = vmatpush1.bf16.msra.mxu0 0
        %1230 = vmatprep.subr.bf16.mxu0 0
        %1231 = vmatpush1.bf16.msra.mxu0 0
        %1232 = vmatprep.subr.bf16.mxu0 0
        %1233 = vmatpush1.bf16.msra.mxu0 0
        %1234 = vmatprep.subr.bf16.mxu0 0
        %1235 = vmatpush1.bf16.msra.mxu0 0
        %1236 = vmatprep.subr.bf16.mxu0 0
        %1237 = vmatpush1.bf16.msra.mxu0 0
        %1238 = vmatprep.subr.bf16.mxu0 0
        %1239 = vmatpush1.bf16.msra.mxu0 0
        %1240 = vmatprep.subr.bf16.mxu0 0
        %1241 = vmatpush1.bf16.msra.mxu0 0
        %1242 = vmatprep.subr.bf16.mxu0 0
        %1243 = vmatpush1.bf16.msra.mxu0 0
        %1244 = vmatprep.subr.bf16.mxu0 0
        %1245 = vmatpush1.bf16.msra.mxu0 0
        %1246 = vmatprep.subr.bf16.mxu0 0
        %1247 = vmatpush1.bf16.msra.mxu0 0
        %1248 = vmatprep.subr.bf16.mxu0 0
        %1249 = vmatpush1.bf16.msra.mxu0 0
        %1250 = vmatprep.mubr.bf16.mxu0 0
        %1251 = vmatmul.mubr.bf16.gmra.mrb[0].mxu0 %v1213
        %v1252 = vpop.f32.mrb[0].mxu0
        %v1253 = vadd.f32 0.0, %v1252
        %v1254 = vpop.f32.mrb[0].mxu0
        %v1255 = vpop.f32.mrb[0].mxu0
        %v1256 = vpop.f32.mrb[0].mxu0
        %1257 = vdwg.mxu0
        %v1258 = vadd.f32 %v1091, %v1253
        %v1259 = vadd.f32 %v481, %v1258
        %v1260 = vsel %vm482, %v1259, 0.0
        %1261 = vadd.xlane.f32.xlu0 %v1260
        %v1262 = vpop.xlane.xlu0 %1261
        %v1263 = vmul.f32 %v1262, %v486
        %v1264 = vsub.f32 %v1259, %v1263
        %v1265 = vmul.f32 %v1264, %v1264
        %v1266 = vsel %vm482, %v1265, 0.0
        %1267 = vadd.xlane.f32.xlu0 %v1266
        %v1268 = vpop.xlane.xlu0 %1267
        %v1269 = vmul.f32 %v1268, %v486
        %v1270 = vadd.f32 %v1269, 1e-05
        %v1271 = vrsqrt.pop %v1270
        %v1272 = vmul.f32 %v1264, %v1271
        %v1273 = vld [vmem:[%s8] sm:$0x1]
        %v1275 = vlaneseq
        %v1276 = vshrl.u32 %v1275, 7
        %v1277 = vsub.s32 0, %v1276
        %v1278 = vrot.slane %v1273, %v1277
        %v1280 = vmul.f32 %v1272, %v1278
        %v1281 = vld [vmem:[%s9] sm:$0x1]
        %v1283 = vlaneseq
        %v1284 = vshrl.u32 %v1283, 7
        %v1285 = vsub.s32 0, %v1284
        %v1286 = vrot.slane %v1281, %v1285
        %v1288 = vadd.f32 %v1280, %v1286
        %v1289 = vpack.c.bf16 %v1288, %v1288
        %v1290 = vld [vmem:[%s13] sm:$0x1]
        %v1292 = vlaneseq
        %v1293 = vshrl.u32 %v1292, 7
        %v1294 = vsub.s32 0, %v1293
        %v1295 = vrot.slane %v1290, %v1294
        %v1297 = vadd.f32 %v1295, 0.0
        %v1298 = vld [vmem:[%s10] sm:$0xf]
        %v1299 = vld [vmem:[%s10 + $0x4] sm:$0xf]
        %v1300 = vld [vmem:[%s10 + $0x8] sm:$0xf]
        %v1301 = vld [vmem:[%s10 + $0xc] sm:$0xf]
        %v1302 = vld [vmem:[%s11] sm:$0x1]
        %v1304 = vlaneseq
        %v1305 = vshrl.u32 %v1304, 7
        %v1306 = vsub.s32 0, %v1305
        %v1307 = vrot.slane %v1302, %v1306
        %v1313 = vunpack.c.l.b16 %v1298
        %v1314 = vunpack.c.l.b16 %v1299
        %v1315 = vunpack.c.l.b16 %v1300
        %v1316 = vunpack.c.l.b16 %v1301
        %v1317 = vpack.c.b16 %v1314, %v1313
        %v1318 = vpack.c.b16 %v1316, %v1315
        %v1322 = vsel %vm482, %v1289, 0
        %1324 = vmatprep.subr.bf16.mxu0 0
        %1325 = vmatpush1.bf16.msra.mxu0 %v1317
        %1326 = vmatprep.subr.bf16.mxu0 0
        %1327 = vmatpush1.bf16.msra.mxu0 %v1318
        %1328 = vmatprep.subr.bf16.mxu0 0
        %1329 = vmatpush1.bf16.msra.mxu0 0
        %1330 = vmatprep.subr.bf16.mxu0 0
        %1331 = vmatpush1.bf16.msra.mxu0 0
        %1332 = vmatprep.subr.bf16.mxu0 0
        %1333 = vmatpush1.bf16.msra.mxu0 0
        %1334 = vmatprep.subr.bf16.mxu0 0
        %1335 = vmatpush1.bf16.msra.mxu0 0
        %1336 = vmatprep.subr.bf16.mxu0 0
        %1337 = vmatpush1.bf16.msra.mxu0 0
        %1338 = vmatprep.subr.bf16.mxu0 0
        %1339 = vmatpush1.bf16.msra.mxu0 0
        %1340 = vmatprep.subr.bf16.mxu0 0
        %1341 = vmatpush1.bf16.msra.mxu0 0
        %1342 = vmatprep.subr.bf16.mxu0 0
        %1343 = vmatpush1.bf16.msra.mxu0 0
        %1344 = vmatprep.subr.bf16.mxu0 0
        %1345 = vmatpush1.bf16.msra.mxu0 0
        %1346 = vmatprep.subr.bf16.mxu0 0
        %1347 = vmatpush1.bf16.msra.mxu0 0
        %1348 = vmatprep.subr.bf16.mxu0 0
        %1349 = vmatpush1.bf16.msra.mxu0 0
        %1350 = vmatprep.subr.bf16.mxu0 0
        %1351 = vmatpush1.bf16.msra.mxu0 0
        %1352 = vmatprep.subr.bf16.mxu0 0
        %1353 = vmatpush1.bf16.msra.mxu0 0
        %1354 = vmatprep.subr.bf16.mxu0 0
        %1355 = vmatpush1.bf16.msra.mxu0 0
        %1356 = vmatprep.mubr.bf16.mxu0 0
        %1357 = vmatmul.mubr.bf16.gmra.mrb[0].mxu0 %v1322
        %v1358 = vpop.f32.mrb[0].mxu0
        %v1359 = vadd.f32 %v1307, %v1358
        %v1360 = vpop.f32.mrb[0].mxu0
        %v1361 = vpop.f32.mrb[0].mxu0
        %v1362 = vpop.f32.mrb[0].mxu0
        %1363 = vdwg.mxu0
        %v1364 = vmul.f32 %v1359, 1.702
        %v1365 = vxor.u32 %v1364, 2147483648
        %v1366 = vmul.f32 %v1365, 1.442695
        %v1367 = vpow.pop %v1366
        %v1368 = vadd.f32 %v1367, 1.0
        %v1369 = vrcp.pop %v1368
        %v1370 = vmul.f32 1.0, %v1369
        %v1371 = vmul.f32 %v1359, %v1370
        %v1372 = vpack.c.bf16 %v1371, %v1371
        %v1373 = vld [vmem:[%s12] sm:$0xf]
        %v1374 = vld [vmem:[%s12 + $0x4] sm:$0xf]
        %v1375 = vld [vmem:[%s12 + $0x8] sm:$0xf]
        %v1376 = vld [vmem:[%s12 + $0xc] sm:$0xf]
        %v1377 = vld [vmem:[%s12 + $0x10] sm:$0xf]
        %v1378 = vld [vmem:[%s12 + $0x14] sm:$0xf]
        %v1379 = vld [vmem:[%s12 + $0x18] sm:$0xf]
        %v1380 = vld [vmem:[%s12 + $0x1c] sm:$0xf]
        %v1381 = vld [vmem:[%s12 + $0x20] sm:$0xf]
        %v1382 = vld [vmem:[%s12 + $0x24] sm:$0xf]
        %v1383 = vld [vmem:[%s12 + $0x28] sm:$0xf]
        %v1384 = vld [vmem:[%s12 + $0x2c] sm:$0xf]
        %v1385 = vld [vmem:[%s12 + $0x30] sm:$0xf]
        %v1386 = vld [vmem:[%s12 + $0x34] sm:$0xf]
        %v1387 = vld [vmem:[%s12 + $0x38] sm:$0xf]
        %v1388 = vld [vmem:[%s12 + $0x3c] sm:$0xf]
        %v1405 = vunpack.c.l.b16 %v1373
        %v1406 = vunpack.c.l.b16 %v1374
        %v1407 = vunpack.c.l.b16 %v1375
        %v1408 = vunpack.c.l.b16 %v1376
        %v1409 = vunpack.c.l.b16 %v1377
        %v1410 = vunpack.c.l.b16 %v1378
        %v1411 = vunpack.c.l.b16 %v1379
        %v1412 = vunpack.c.l.b16 %v1380
        %v1413 = vunpack.c.l.b16 %v1381
        %v1414 = vunpack.c.l.b16 %v1382
        %v1415 = vunpack.c.l.b16 %v1383
        %v1416 = vunpack.c.l.b16 %v1384
        %v1417 = vunpack.c.l.b16 %v1385
        %v1418 = vunpack.c.l.b16 %v1386
        %v1419 = vunpack.c.l.b16 %v1387
        %v1420 = vunpack.c.l.b16 %v1388
        %v1421 = vpack.c.b16 %v1406, %v1405
        %v1422 = vpack.c.b16 %v1408, %v1407
        %v1423 = vpack.c.b16 %v1410, %v1409
        %v1424 = vpack.c.b16 %v1412, %v1411
        %v1425 = vpack.c.b16 %v1414, %v1413
        %v1426 = vpack.c.b16 %v1416, %v1415
        %v1427 = vpack.c.b16 %v1418, %v1417
        %v1428 = vpack.c.b16 %v1420, %v1419
        %1437 = vmatprep.subr.bf16.mxu0 0
        %1438 = vmatpush1.bf16.msra.mxu0 %v1421
        %1439 = vmatprep.subr.bf16.mxu0 0
        %1440 = vmatpush1.bf16.msra.mxu0 %v1422
        %1441 = vmatprep.subr.bf16.mxu0 0
        %1442 = vmatpush1.bf16.msra.mxu0 %v1423
        %1443 = vmatprep.subr.bf16.mxu0 0
        %1444 = vmatpush1.bf16.msra.mxu0 %v1424
        %1445 = vmatprep.subr.bf16.mxu0 0
        %1446 = vmatpush1.bf16.msra.mxu0 %v1425
        %1447 = vmatprep.subr.bf16.mxu0 0
        %1448 = vmatpush1.bf16.msra.mxu0 %v1426
        %1449 = vmatprep.subr.bf16.mxu0 0
        %1450 = vmatpush1.bf16.msra.mxu0 %v1427
        %1451 = vmatprep.subr.bf16.mxu0 0
        %1452 = vmatpush1.bf16.msra.mxu0 %v1428
        %1453 = vmatprep.subr.bf16.mxu0 0
        %1454 = vmatpush1.bf16.msra.mxu0 0
        %1455 = vmatprep.subr.bf16.mxu0 0
        %1456 = vmatpush1.bf16.msra.mxu0 0
        %1457 = vmatprep.subr.bf16.mxu0 0
        %1458 = vmatpush1.bf16.msra.mxu0 0
        %1459 = vmatprep.subr.bf16.mxu0 0
        %1460 = vmatpush1.bf16.msra.mxu0 0
        %1461 = vmatprep.subr.bf16.mxu0 0
        %1462 = vmatpush1.bf16.msra.mxu0 0
        %1463 = vmatprep.subr.bf16.mxu0 0
        %1464 = vmatpush1.bf16.msra.mxu0 0
        %1465 = vmatprep.subr.bf16.mxu0 0
        %1466 = vmatpush1.bf16.msra.mxu0 0
        %1467 = vmatprep.subr.bf16.mxu0 0
        %1468 = vmatpush1.bf16.msra.mxu0 0
        %1469 = vmatprep.mubr.bf16.mxu0 0
        %1470 = vmatmul.mubr.bf16.gmra.mrb[0].mxu0 %v1372
        %v1471 = vpop.f32.mrb[0].mxu0
        %v1472 = vadd.f32 0.0, %v1471
        %v1473 = vpop.f32.mrb[0].mxu0
        %v1474 = vpop.f32.mrb[0].mxu0
        %v1475 = vpop.f32.mrb[0].mxu0
        %1476 = vdwg.mxu0
        %v1477 = vadd.f32 %v1297, %v1472
        %v1478 = vadd.f32 %v1259, %v1477
        %1479 = vst.msk [vmem:[%s471] sm:$0xff] %vm482, %v1478
        %s1480 = sand.u32 %s340, 1
        %s1481 = scalar_lea.sflag [#allocation3], %s1480
        %s1482 = sand.u32 %s340, 1
        %s1483 = smul.addr %s1482, 8
        %s1484 = scalar_lea.vmem [#allocation2], %s1483
        // Predicated region
        $region77: #{outfits_transformer.3} parent=75 // pred_check
          %p1485 = pneg %p350
        $region78: #{outfits_transformer.3} parent=75 // pred_check_branch
          %1487 = sbr.rel (%p1485) target = $region80
        $region79: #{outfits_transformer.3} parent=75 // pred_region
          %s1489 = ssub.s32 128, 128
          %1490 = vsyncadd %s1481, %s1489
          %s1491 = smul.addr %s28, 128
          %s1492 = scalar_lea.hbm %s14, %s1491
          %s1494 = sshll.u32 %s1484, 4
          %s1495 = int_to_ptr.vmem [resolvable:$true] %s1494
          %1497 = dma.vmem_to_hbm [thread:$0]  %s1495, 128, %s1492, %s1481
        $region80: #{outfits_transformer.3} parent=75 // pred_fallthru
          _
      $region76: #{outfits_transformer.3} parent=5 // pred_fallthru
        _
      %p1498 = scmp.le.s32.totalorder 2, %s23
      // Predicated region
      $region81: #{outfits_transformer.3} parent=5 // pred_check
        %p1499 = pneg %p1498
      $region82: #{outfits_transformer.3} parent=5 // pred_check_branch
        %1501 = sbr.rel (%p1499) target = $region84
      $region83: #{outfits_transformer.3} parent=5 // pred_region
        %s1502 = ssub.s32 %s23, 2
        // Predicated region
        $region85: #{outfits_transformer.3} parent=83 // pred_check
          %p1503 = pneg %p356
        $region86: #{outfits_transformer.3} parent=83 // pred_check_branch
          %1505 = sbr.rel (%p1503) target = $region88
        $region87: #{outfits_transformer.3} parent=83 // pred_region
          %s1506 = sand.u32 %s341, 1
          %s1507 = scalar_lea.sflag [#allocation3], %s1506
          %s1508 = sand.u32 %s341, 1
          %s1509 = smul.addr %s1508, 8
          %s1510 = scalar_lea.vmem [#allocation2], %s1509
          %1511 = dma.done %s1507, 128
        $region88: #{outfits_transformer.3} parent=83 // pred_fallthru
          _
      $region84: #{outfits_transformer.3} parent=5 // pred_fallthru
        _
    $region6: #{outfits_transformer.3} parent=1 // loop_footer
      %s27 = sadd.s32 1, %s23
    $region7: #{outfits_transformer.3} parent=1 // loop_footer_branch
      %22 = sbr.rel target = $region3
    $region8: #{outfits_transformer.3} parent=1 // loop_exit
      _
    %1512 = vsyncpa [#allocation3], 1
    %s1513 = scalar_lea.sflag [#allocation3], 1
    %1514 = vsyncpa %s1513, 1

// kernel: outfits_transformer.2
$region0: #{outfits_transformer.2}
  #allocation0 [shape = 'u32[]', space=smem, size = 0x4, offset = 0x4, fixed_abs, tag = 'smem constant byte address 0x4 - core index']
  #allocation1 [shape = 'u32[144,128]{1,0:T(1,128)}', space=vmem, size = 0x12000, scoped, tag = 'internal scratch']
  %s0 = inlined_call_operand.vmem [shape: f32[2,8,32], index: 0, kind: input, shape index: {}]
  %s1 = inlined_call_operand.vmem [shape: f32[2,4,8], index: 1, kind: input, shape index: {}]
  %s2 = inlined_call_operand.vmem [shape: f32[1,32], index: 2, kind: input, shape index: {}]
  %s3 = inlined_call_operand.vmem [shape: f32[1,32], index: 3, kind: input, shape index: {}]
  %s4 = inlined_call_operand.vmem [shape: bf16[32,96], index: 4, kind: input, shape index: {}]
  %s5 = inlined_call_operand.vmem [shape: f32[1,96], index: 5, kind: input, shape index: {}]
  %s6 = inlined_call_operand.vmem [shape: bf16[32,32], index: 6, kind: input, shape index: {}]
  %s7 = inlined_call_operand.vmem [shape: f32[1,32], index: 7, kind: input, shape index: {}]
  %s8 = inlined_call_operand.vmem [shape: f32[1,32], index: 8, kind: input, shape index: {}]
  %s9 = inlined_call_operand.vmem [shape: f32[1,32], index: 9, kind: input, shape index: {}]
  %s10 = inlined_call_operand.vmem [shape: bf16[32,128], index: 10, kind: input, shape index: {}]
  %s11 = inlined_call_operand.vmem [shape: f32[1,128], index: 11, kind: input, shape index: {}]
  %s12 = inlined_call_operand.vmem [shape: bf16[128,32], index: 12, kind: input, shape index: {}]
  %s13 = inlined_call_operand.vmem [shape: f32[1,32], index: 13, kind: input, shape index: {}]
  %s14 = inlined_call_operand.vmem [shape: f32[2,8,32], index: 14, kind: output, shape index: {}]
  %s15 = sld [smem:[#allocation0]]
  $region89: #{outfits_transformer.2} parent=0
    _
  %s17 = ssub.s32 1, %s15
  %s18 = scalar_select 0, %s17, %s15
  loop: start=0, step=1, limit=4
  $region2: #{outfits_transformer.2} parent=0 // loop_pre_header
    _
  $region3: #{outfits_transformer.2} parent=0 // loop_header
    %s20 = sphi 0, %s24
    %p21 = scmp.ge.s32.totalorder %s20, 4
    %s30 = sphi 0, %s32
    %s33 = sphi 0, %s30
    %s34 = sphi 0, %s33
    %s50 = sphi 0, %s34
    %s56 = sphi 0, %s58
    %s59 = sphi 0, %s56
    %s60 = sphi 0, %s59
    %s76 = sphi 0, %s60
    %s80 = sphi 0, %s80
    %s82 = sphi 0, %s80
    %s83 = sphi 0, %s82
    %s97 = sphi 0, %s83
    %s101 = sphi 0, %s101
    %s103 = sphi 0, %s101
    %s104 = sphi 0, %s103
    %s118 = sphi 0, %s104
    %s122 = sphi 0, %s122
    %s124 = sphi 0, %s122
    %s125 = sphi 0, %s124
    %s139 = sphi 0, %s125
    %s143 = sphi 0, %s143
    %s145 = sphi 0, %s143
    %s146 = sphi 0, %s145
    %s160 = sphi 0, %s146
    %s164 = sphi 0, %s164
    %s166 = sphi 0, %s164
    %s167 = sphi 0, %s166
    %s181 = sphi 0, %s167
    %s185 = sphi 0, %s185
    %s187 = sphi 0, %s185
    %s188 = sphi 0, %s187
    %s202 = sphi 0, %s188
    %s206 = sphi 0, %s206
    %s208 = sphi 0, %s206
    %s209 = sphi 0, %s208
    %s223 = sphi 0, %s209
    %s227 = sphi 0, %s227
    %s229 = sphi 0, %s227
    %s230 = sphi 0, %s229
    %s244 = sphi 0, %s230
    %s248 = sphi 0, %s248
    %s250 = sphi 0, %s248
    %s251 = sphi 0, %s250
    %s265 = sphi 0, %s251
    %s269 = sphi 0, %s269
    %s271 = sphi 0, %s269
    %s272 = sphi 0, %s271
    %s286 = sphi 0, %s272
    %s290 = sphi 0, %s290
    %s292 = sphi 0, %s290
    %s293 = sphi 0, %s292
    %s307 = sphi 0, %s293
    %s311 = sphi 0, %s311
    %s313 = sphi 0, %s311
    %s314 = sphi 0, %s313
    %s328 = sphi 0, %s314
    %s334 = sphi 0, %s336
    %s337 = sphi 0, %s334
    %s338 = sphi 0, %s337
    %s354 = sphi 0, %s338
  $region4: #{outfits_transformer.2} parent=0 // loop_header_branch
    %23 = sbr.rel (%p21) target = $region8
  $region5: #{outfits_transformer.2} parent=0 // loop_body
    %s25 = ssub.s32 %s20, 1
    %s26 = ssub.s32 %s20, 2
    %s27 = sadd.s32 %s20, 1
    %s28 = ssub.s32 %s20, %s27
    %p29 = scmp.eq.s32.totalorder %s28, 0
    %s31 = sadd.s32 %s30, 1
    %s32 = scalar_select %p29, %s30, %s31
    %p35 = pneg %p29
    %p36 = scmp.eq.s32.totalorder %s20, 1
    %p37 = por %p35, %p36
    %p38 = scmp.ne.s32.totalorder %s30, %s33
    %p39 = scmp.eq.s32.totalorder %s20, 0
    %p40 = por %p38, %p39
    %p41 = scmp.ne.s32.totalorder %s30, %s33
    %p42 = scmp.eq.s32.totalorder %s25, 1
    %p43 = por %p41, %p42
    %p44 = scmp.ne.s32.totalorder %s33, %s34
    %p45 = scmp.eq.s32.totalorder %s25, 0
    %p46 = por %p44, %p45
    %p47 = scmp.ne.s32.totalorder %s33, %s34
    %p48 = scmp.eq.s32.totalorder %s26, 1
    %p49 = por %p47, %p48
    %p51 = scmp.ne.s32.totalorder %s34, %s50
    %p52 = scmp.eq.s32.totalorder %s26, 0
    %p53 = por %p51, %p52
    %s54 = ssub.s32 %s20, %s27
    %p55 = scmp.eq.s32.totalorder %s54, 0
    %s57 = sadd.s32 %s56, 1
    %s58 = scalar_select %p55, %s56, %s57
    %p61 = pneg %p55
    %p62 = scmp.eq.s32.totalorder %s20, 1
    %p63 = por %p61, %p62
    %p64 = scmp.ne.s32.totalorder %s56, %s59
    %p65 = scmp.eq.s32.totalorder %s20, 0
    %p66 = por %p64, %p65
    %p67 = scmp.ne.s32.totalorder %s56, %s59
    %p68 = scmp.eq.s32.totalorder %s25, 1
    %p69 = por %p67, %p68
    %p70 = scmp.ne.s32.totalorder %s59, %s60
    %p71 = scmp.eq.s32.totalorder %s25, 0
    %p72 = por %p70, %p71
    %p73 = scmp.ne.s32.totalorder %s59, %s60
    %p74 = scmp.eq.s32.totalorder %s26, 1
    %p75 = por %p73, %p74
    %p77 = scmp.ne.s32.totalorder %s60, %s76
    %p78 = scmp.eq.s32.totalorder %s26, 0
    %p79 = por %p77, %p78
    %s81 = sadd.s32 %s80, 1
    %p84 = scmp.eq.s32.totalorder %s20, 1
    %p85 = scmp.ne.s32.totalorder %s80, %s82
    %p86 = scmp.eq.s32.totalorder %s20, 0
    %p87 = por %p85, %p86
    %p88 = scmp.ne.s32.totalorder %s80, %s82
    %p89 = scmp.eq.s32.totalorder %s25, 1
    %p90 = por %p88, %p89
    %p91 = scmp.ne.s32.totalorder %s82, %s83
    %p92 = scmp.eq.s32.totalorder %s25, 0
    %p93 = por %p91, %p92
    %p94 = scmp.ne.s32.totalorder %s82, %s83
    %p95 = scmp.eq.s32.totalorder %s26, 1
    %p96 = por %p94, %p95
    %p98 = scmp.ne.s32.totalorder %s83, %s97
    %p99 = scmp.eq.s32.totalorder %s26, 0
    %p100 = por %p98, %p99
    %s102 = sadd.s32 %s101, 1
    %p105 = scmp.eq.s32.totalorder %s20, 1
    %p106 = scmp.ne.s32.totalorder %s101, %s103
    %p107 = scmp.eq.s32.totalorder %s20, 0
    %p108 = por %p106, %p107
    %p109 = scmp.ne.s32.totalorder %s101, %s103
    %p110 = scmp.eq.s32.totalorder %s25, 1
    %p111 = por %p109, %p110
    %p112 = scmp.ne.s32.totalorder %s103, %s104
    %p113 = scmp.eq.s32.totalorder %s25, 0
    %p114 = por %p112, %p113
    %p115 = scmp.ne.s32.totalorder %s103, %s104
    %p116 = scmp.eq.s32.totalorder %s26, 1
    %p117 = por %p115, %p116
    %p119 = scmp.ne.s32.totalorder %s104, %s118
    %p120 = scmp.eq.s32.totalorder %s26, 0
    %p121 = por %p119, %p120
    %s123 = sadd.s32 %s122, 1
    %p126 = scmp.eq.s32.totalorder %s20, 1
    %p127 = scmp.ne.s32.totalorder %s122, %s124
    %p128 = scmp.eq.s32.totalorder %s20, 0
    %p129 = por %p127, %p128
    %p130 = scmp.ne.s32.totalorder %s122, %s124
    %p131 = scmp.eq.s32.totalorder %s25, 1
    %p132 = por %p130, %p131
    %p133 = scmp.ne.s32.totalorder %s124, %s125
    %p134 = scmp.eq.s32.totalorder %s25, 0
    %p135 = por %p133, %p134
    %p136 = scmp.ne.s32.totalorder %s124, %s125
    %p137 = scmp.eq.s32.totalorder %s26, 1
    %p138 = por %p136, %p137
    %p140 = scmp.ne.s32.totalorder %s125, %s139
    %p141 = scmp.eq.s32.totalorder %s26, 0
    %p142 = por %p140, %p141
    %s144 = sadd.s32 %s143, 1
    %p147 = scmp.eq.s32.totalorder %s20, 1
    %p148 = scmp.ne.s32.totalorder %s143, %s145
    %p149 = scmp.eq.s32.totalorder %s20, 0
    %p150 = por %p148, %p149
    %p151 = scmp.ne.s32.totalorder %s143, %s145
    %p152 = scmp.eq.s32.totalorder %s25, 1
    %p153 = por %p151, %p152
    %p154 = scmp.ne.s32.totalorder %s145, %s146
    %p155 = scmp.eq.s32.totalorder %s25, 0
    %p156 = por %p154, %p155
    %p157 = scmp.ne.s32.totalorder %s145, %s146
    %p158 = scmp.eq.s32.totalorder %s26, 1
    %p159 = por %p157, %p158
    %p161 = scmp.ne.s32.totalorder %s146, %s160
    %p162 = scmp.eq.s32.totalorder %s26, 0
    %p163 = por %p161, %p162
    %s165 = sadd.s32 %s164, 1
    %p168 = scmp.eq.s32.totalorder %s20, 1
    %p169 = scmp.ne.s32.totalorder %s164, %s166
    %p170 = scmp.eq.s32.totalorder %s20, 0
    %p171 = por %p169, %p170
    %p172 = scmp.ne.s32.totalorder %s164, %s166
    %p173 = scmp.eq.s32.totalorder %s25, 1
    %p174 = por %p172, %p173
    %p175 = scmp.ne.s32.totalorder %s166, %s167
    %p176 = scmp.eq.s32.totalorder %s25, 0
    %p177 = por %p175, %p176
    %p178 = scmp.ne.s32.totalorder %s166, %s167
    %p179 = scmp.eq.s32.totalorder %s26, 1
    %p180 = por %p178, %p179
    %p182 = scmp.ne.s32.totalorder %s167, %s181
    %p183 = scmp.eq.s32.totalorder %s26, 0
    %p184 = por %p182, %p183
    %s186 = sadd.s32 %s185, 1
    %p189 = scmp.eq.s32.totalorder %s20, 1
    %p190 = scmp.ne.s32.totalorder %s185, %s187
    %p191 = scmp.eq.s32.totalorder %s20, 0
    %p192 = por %p190, %p191
    %p193 = scmp.ne.s32.totalorder %s185, %s187
    %p194 = scmp.eq.s32.totalorder %s25, 1
    %p195 = por %p193, %p194
    %p196 = scmp.ne.s32.totalorder %s187, %s188
    %p197 = scmp.eq.s32.totalorder %s25, 0
    %p198 = por %p196, %p197
    %p199 = scmp.ne.s32.totalorder %s187, %s188
    %p200 = scmp.eq.s32.totalorder %s26, 1
    %p201 = por %p199, %p200
    %p203 = scmp.ne.s32.totalorder %s188, %s202
    %p204 = scmp.eq.s32.totalorder %s26, 0
    %p205 = por %p203, %p204
    %s207 = sadd.s32 %s206, 1
    %p210 = scmp.eq.s32.totalorder %s20, 1
    %p211 = scmp.ne.s32.totalorder %s206, %s208
    %p212 = scmp.eq.s32.totalorder %s20, 0
    %p213 = por %p211, %p212
    %p214 = scmp.ne.s32.totalorder %s206, %s208
    %p215 = scmp.eq.s32.totalorder %s25, 1
    %p216 = por %p214, %p215
    %p217 = scmp.ne.s32.totalorder %s208, %s209
    %p218 = scmp.eq.s32.totalorder %s25, 0
    %p219 = por %p217, %p218
    %p220 = scmp.ne.s32.totalorder %s208, %s209
    %p221 = scmp.eq.s32.totalorder %s26, 1
    %p222 = por %p220, %p221
    %p224 = scmp.ne.s32.totalorder %s209, %s223
    %p225 = scmp.eq.s32.totalorder %s26, 0
    %p226 = por %p224, %p225
    %s228 = sadd.s32 %s227, 1
    %p231 = scmp.eq.s32.totalorder %s20, 1
    %p232 = scmp.ne.s32.totalorder %s227, %s229
    %p233 = scmp.eq.s32.totalorder %s20, 0
    %p234 = por %p232, %p233
    %p235 = scmp.ne.s32.totalorder %s227, %s229
    %p236 = scmp.eq.s32.totalorder %s25, 1
    %p237 = por %p235, %p236
    %p238 = scmp.ne.s32.totalorder %s229, %s230
    %p239 = scmp.eq.s32.totalorder %s25, 0
    %p240 = por %p238, %p239
    %p241 = scmp.ne.s32.totalorder %s229, %s230
    %p242 = scmp.eq.s32.totalorder %s26, 1
    %p243 = por %p241, %p242
    %p245 = scmp.ne.s32.totalorder %s230, %s244
    %p246 = scmp.eq.s32.totalorder %s26, 0
    %p247 = por %p245, %p246
    %s249 = sadd.s32 %s248, 1
    %p252 = scmp.eq.s32.totalorder %s20, 1
    %p253 = scmp.ne.s32.totalorder %s248, %s250
    %p254 = scmp.eq.s32.totalorder %s20, 0
    %p255 = por %p253, %p254
    %p256 = scmp.ne.s32.totalorder %s248, %s250
    %p257 = scmp.eq.s32.totalorder %s25, 1
    %p258 = por %p256, %p257
    %p259 = scmp.ne.s32.totalorder %s250, %s251
    %p260 = scmp.eq.s32.totalorder %s25, 0
    %p261 = por %p259, %p260
    %p262 = scmp.ne.s32.totalorder %s250, %s251
    %p263 = scmp.eq.s32.totalorder %s26, 1
    %p264 = por %p262, %p263
    %p266 = scmp.ne.s32.totalorder %s251, %s265
    %p267 = scmp.eq.s32.totalorder %s26, 0
    %p268 = por %p266, %p267
    %s270 = sadd.s32 %s269, 1
    %p273 = scmp.eq.s32.totalorder %s20, 1
    %p274 = scmp.ne.s32.totalorder %s269, %s271
    %p275 = scmp.eq.s32.totalorder %s20, 0
    %p276 = por %p274, %p275
    %p277 = scmp.ne.s32.totalorder %s269, %s271
    %p278 = scmp.eq.s32.totalorder %s25, 1
    %p279 = por %p277, %p278
    %p280 = scmp.ne.s32.totalorder %s271, %s272
    %p281 = scmp.eq.s32.totalorder %s25, 0
    %p282 = por %p280, %p281
    %p283 = scmp.ne.s32.totalorder %s271, %s272
    %p284 = scmp.eq.s32.totalorder %s26, 1
    %p285 = por %p283, %p284
    %p287 = scmp.ne.s32.totalorder %s272, %s286
    %p288 = scmp.eq.s32.totalorder %s26, 0
    %p289 = por %p287, %p288
    %s291 = sadd.s32 %s290, 1
    %p294 = scmp.eq.s32.totalorder %s20, 1
    %p295 = scmp.ne.s32.totalorder %s290, %s292
    %p296 = scmp.eq.s32.totalorder %s20, 0
    %p297 = por %p295, %p296
    %p298 = scmp.ne.s32.totalorder %s290, %s292
    %p299 = scmp.eq.s32.totalorder %s25, 1
    %p300 = por %p298, %p299
    %p301 = scmp.ne.s32.totalorder %s292, %s293
    %p302 = scmp.eq.s32.totalorder %s25, 0
    %p303 = por %p301, %p302
    %p304 = scmp.ne.s32.totalorder %s292, %s293
    %p305 = scmp.eq.s32.totalorder %s26, 1
    %p306 = por %p304, %p305
    %p308 = scmp.ne.s32.totalorder %s293, %s307
    %p309 = scmp.eq.s32.totalorder %s26, 0
    %p310 = por %p308, %p309
    %s312 = sadd.s32 %s311, 1
    %p315 = scmp.eq.s32.totalorder %s20, 1
    %p316 = scmp.ne.s32.totalorder %s311, %s313
    %p317 = scmp.eq.s32.totalorder %s20, 0
    %p318 = por %p316, %p317
    %p319 = scmp.ne.s32.totalorder %s311, %s313
    %p320 = scmp.eq.s32.totalorder %s25, 1
    %p321 = por %p319, %p320
    %p322 = scmp.ne.s32.totalorder %s313, %s314
    %p323 = scmp.eq.s32.totalorder %s25, 0
    %p324 = por %p322, %p323
    %p325 = scmp.ne.s32.totalorder %s313, %s314
    %p326 = scmp.eq.s32.totalorder %s26, 1
    %p327 = por %p325, %p326
    %p329 = scmp.ne.s32.totalorder %s314, %s328
    %p330 = scmp.eq.s32.totalorder %s26, 0
    %p331 = por %p329, %p330
    %s332 = ssub.s32 %s20, %s27
    %p333 = scmp.eq.s32.totalorder %s332, 0
    %s335 = sadd.s32 %s334, 1
    %s336 = scalar_select %p333, %s334, %s335
    %p339 = pneg %p333
    %p340 = scmp.eq.s32.totalorder %s20, 1
    %p341 = por %p339, %p340
    %p342 = scmp.ne.s32.totalorder %s334, %s337
    %p343 = scmp.eq.s32.totalorder %s20, 0
    %p344 = por %p342, %p343
    %p345 = scmp.ne.s32.totalorder %s334, %s337
    %p346 = scmp.eq.s32.totalorder %s25, 1
    %p347 = por %p345, %p346
    %p348 = scmp.ne.s32.totalorder %s337, %s338
    %p349 = scmp.eq.s32.totalorder %s25, 0
    %p350 = por %p348, %p349
    %p351 = scmp.ne.s32.totalorder %s337, %s338
    %p352 = scmp.eq.s32.totalorder %s26, 1
    %p353 = por %p351, %p352
    %p355 = scmp.ne.s32.totalorder %s338, %s354
    %p356 = scmp.eq.s32.totalorder %s26, 0
    %p357 = por %p355, %p356
    %p358 = scmp.le.s32.totalorder 1, %s20
    %p359 = scmp.lt.s32.totalorder %s20, 3
    %p360 = pnand %p358, %p359
    %p361 = pneg %p360
    // Predicated region
    $region9: #{outfits_transformer.2} parent=5 // pred_check
      _
    $region10: #{outfits_transformer.2} parent=5 // pred_check_branch
      %363 = sbr.rel (%p360) target = $region12
    $region11: #{outfits_transformer.2} parent=5 // pred_region
      %s364 = ssub.s32 %s20, 1
      // Predicated region
      $region13: #{outfits_transformer.2} parent=11 // pred_check
        %p365 = pneg %p93
      $region14: #{outfits_transformer.2} parent=11 // pred_check_branch
        %367 = sbr.rel (%p365) target = $region16
      $region15: #{outfits_transformer.2} parent=11 // pred_region
        _
      $region16: #{outfits_transformer.2} parent=11 // pred_fallthru
        _
      // Predicated region
      $region17: #{outfits_transformer.2} parent=11 // pred_check
        %p368 = pneg %p114
      $region18: #{outfits_transformer.2} parent=11 // pred_check_branch
        %370 = sbr.rel (%p368) target = $region20
      $region19: #{outfits_transformer.2} parent=11 // pred_region
        _
      $region20: #{outfits_transformer.2} parent=11 // pred_fallthru
        _
      // Predicated region
      $region21: #{outfits_transformer.2} parent=11 // pred_check
        %p371 = pneg %p135
      $region22: #{outfits_transformer.2} parent=11 // pred_check_branch
        %373 = sbr.rel (%p371) target = $region24
      $region23: #{outfits_transformer.2} parent=11 // pred_region
        _
      $region24: #{outfits_transformer.2} parent=11 // pred_fallthru
        _
      // Predicated region
      $region25: #{outfits_transformer.2} parent=11 // pred_check
        %p374 = pneg %p156
      $region26: #{outfits_transformer.2} parent=11 // pred_check_branch
        %376 = sbr.rel (%p374) target = $region28
      $region27: #{outfits_transformer.2} parent=11 // pred_region
        _
      $region28: #{outfits_transformer.2} parent=11 // pred_fallthru
        _
      // Predicated region
      $region29: #{outfits_transformer.2} parent=11 // pred_check
        %p377 = pneg %p177
      $region30: #{outfits_transformer.2} parent=11 // pred_check_branch
        %379 = sbr.rel (%p377) target = $region32
      $region31: #{outfits_transformer.2} parent=11 // pred_region
        _
      $region32: #{outfits_transformer.2} parent=11 // pred_fallthru
        _
      // Predicated region
      $region33: #{outfits_transformer.2} parent=11 // pred_check
        %p380 = pneg %p198
      $region34: #{outfits_transformer.2} parent=11 // pred_check_branch
        %382 = sbr.rel (%p380) target = $region36
      $region35: #{outfits_transformer.2} parent=11 // pred_region
        _
      $region36: #{outfits_transformer.2} parent=11 // pred_fallthru
        _
      // Predicated region
      $region37: #{outfits_transformer.2} parent=11 // pred_check
        %p383 = pneg %p219
      $region38: #{outfits_transformer.2} parent=11 // pred_check_branch
        %385 = sbr.rel (%p383) target = $region40
      $region39: #{outfits_transformer.2} parent=11 // pred_region
        _
      $region40: #{outfits_transformer.2} parent=11 // pred_fallthru
        _
      // Predicated region
      $region41: #{outfits_transformer.2} parent=11 // pred_check
        %p386 = pneg %p240
      $region42: #{outfits_transformer.2} parent=11 // pred_check_branch
        %388 = sbr.rel (%p386) target = $region44
      $region43: #{outfits_transformer.2} parent=11 // pred_region
        _
      $region44: #{outfits_transformer.2} parent=11 // pred_fallthru
        _
      // Predicated region
      $region45: #{outfits_transformer.2} parent=11 // pred_check
        %p389 = pneg %p261
      $region46: #{outfits_transformer.2} parent=11 // pred_check_branch
        %391 = sbr.rel (%p389) target = $region48
      $region47: #{outfits_transformer.2} parent=11 // pred_region
        _
      $region48: #{outfits_transformer.2} parent=11 // pred_fallthru
        _
      // Predicated region
      $region49: #{outfits_transformer.2} parent=11 // pred_check
        %p392 = pneg %p282
      $region50: #{outfits_transformer.2} parent=11 // pred_check_branch
        %394 = sbr.rel (%p392) target = $region52
      $region51: #{outfits_transformer.2} parent=11 // pred_region
        _
      $region52: #{outfits_transformer.2} parent=11 // pred_fallthru
        _
      // Predicated region
      $region53: #{outfits_transformer.2} parent=11 // pred_check
        %p395 = pneg %p303
      $region54: #{outfits_transformer.2} parent=11 // pred_check_branch
        %397 = sbr.rel (%p395) target = $region56
      $region55: #{outfits_transformer.2} parent=11 // pred_region
        _
      $region56: #{outfits_transformer.2} parent=11 // pred_fallthru
        _
      // Predicated region
      $region57: #{outfits_transformer.2} parent=11 // pred_check
        %p398 = pneg %p324
      $region58: #{outfits_transformer.2} parent=11 // pred_check_branch
        %400 = sbr.rel (%p398) target = $region60
      $region59: #{outfits_transformer.2} parent=11 // pred_region
        _
      $region60: #{outfits_transformer.2} parent=11 // pred_fallthru
        _
    $region12: #{outfits_transformer.2} parent=5 // pred_fallthru
      _
    %p401 = scmp.lt.s32.totalorder %s20, 2
    // Predicated region
    $region61: #{outfits_transformer.2} parent=5 // pred_check
      %p402 = pneg %p401
    $region62: #{outfits_transformer.2} parent=5 // pred_check_branch
      %404 = sbr.rel (%p402) target = $region64
    $region63: #{outfits_transformer.2} parent=5 // pred_region
      // Predicated region
      $region65: #{outfits_transformer.2} parent=63 // pred_check
        %p405 = pneg %p40
      $region66: #{outfits_transformer.2} parent=63 // pred_check_branch
        %407 = sbr.rel (%p405) target = $region68
      $region67: #{outfits_transformer.2} parent=63 // pred_region
        %p408 = scmp.lt.s32.totalorder %s20, 1
        %s409 = scalar_select %p408, %s20, 1
        %s410 = smul.addr %s409, 8
        %s411 = scalar_lea.vmem %s0, %s410
      $region68: #{outfits_transformer.2} parent=63 // pred_fallthru
        _
      // Predicated region
      $region69: #{outfits_transformer.2} parent=63 // pred_check
        %p412 = pneg %p66
      $region70: #{outfits_transformer.2} parent=63 // pred_check_branch
        %414 = sbr.rel (%p412) target = $region72
      $region71: #{outfits_transformer.2} parent=63 // pred_region
        %p415 = scmp.lt.s32.totalorder %s20, 1
        %s416 = scalar_select %p415, %s20, 1
        %s417 = smul.addr %s416, 4
        %s418 = scalar_lea.vmem %s1, %s417
      $region72: #{outfits_transformer.2} parent=63 // pred_fallthru
        _
    $region64: #{outfits_transformer.2} parent=5 // pred_fallthru
      _
    %p419 = scmp.le.s32.totalorder 1, %s20
    %p420 = scmp.lt.s32.totalorder %s20, 3
    %p421 = pnand %p419, %p420
    %p422 = pneg %p421
    // Predicated region
    $region73: #{outfits_transformer.2} parent=5 // pred_check
      _
    $region74: #{outfits_transformer.2} parent=5 // pred_check_branch
      %424 = sbr.rel (%p421) target = $region76
    $region75: #{outfits_transformer.2} parent=5 // pred_region
      %s425 = ssub.s32 %s20, 1
      %p426 = scmp.lt.s32.totalorder %s25, 1
      %s427 = scalar_select %p426, %s25, 1
      %s428 = smul.addr %s427, 8
      %s429 = scalar_lea.vmem %s0, %s428
      %p430 = pneg %p46
      %p431 = pneg %p43
      %p432 = scmp.lt.s32.totalorder %s25, 1
      %s433 = scalar_select %p432, %s25, 1
      %s434 = smul.addr %s433, 4
      %s435 = scalar_lea.vmem %s1, %s434
      %p436 = pneg %p72
      %p437 = pneg %p69
      %p438 = pneg %p93
      %p439 = pneg %p90
      %p440 = pneg %p114
      %p441 = pneg %p111
      %p442 = pneg %p135
      %p443 = pneg %p132
      %p444 = pneg %p156
      %p445 = pneg %p153
      %p446 = pneg %p177
      %p447 = pneg %p174
      %p448 = pneg %p198
      %p449 = pneg %p195
      %p450 = pneg %p219
      %p451 = pneg %p216
      %p452 = pneg %p240
      %p453 = pneg %p237
      %p454 = pneg %p261
      %p455 = pneg %p258
      %p456 = pneg %p282
      %p457 = pneg %p279
      %p458 = pneg %p303
      %p459 = pneg %p300
      %p460 = pneg %p324
      %p461 = pneg %p321
      %p462 = pneg %p350
      %p463 = pneg %p347
      %p464 = scmp.lt.s32.totalorder %s25, 1
      %s465 = scalar_select %p464, %s25, 1
      %s466 = smul.addr %s465, 8
      %s467 = scalar_lea.vmem %s14, %s466
      %p468 = scmp.lt.s32.totalorder %s25, 1
      %s469 = scalar_select %p468, %s25, 1
      %s470 = smul.addr %s469, 8
      %s471 = scalar_lea.vmem %s0, %s470
      %p472 = scmp.lt.s32.totalorder %s25, 1
      %s473 = scalar_select %p472, %s25, 1
      %s474 = smul.addr %s473, 4
      %s475 = scalar_lea.vmem %s1, %s474
      %p476 = scmp.lt.s32.totalorder %s25, 1
      %s477 = scalar_select %p476, %s25, 1
      %s478 = smul.addr %s477, 8
      %s479 = scalar_lea.vmem %s14, %s478
      %v481 = vld [vmem:[%s471] sm:$0xff]
      %vm482 = vcmask 261120
      %v483 = vsel %vm482, %v481, 0.0
      %484 = vadd.xlane.f32.xlu0 %v483
      %v485 = vpop.xlane.xlu0 %484
      %v486 = vrcp.pop 32.0
      %v487 = vmul.f32 %v485, %v486
      %v488 = vsub.f32 %v481, %v487
      %v489 = vmul.f32 %v488, %v488
      %v490 = vsel %vm482, %v489, 0.0
      %491 = vadd.xlane.f32.xlu0 %v490
      %v492 = vpop.xlane.xlu0 %491
      %v493 = vmul.f32 %v492, %v486
      %v494 = vadd.f32 %v493, 1e-05
      %v495 = vrsqrt.pop %v494
      %v496 = vmul.f32 %v488, %v495
      %v497 = vld [vmem:[%s2] sm:$0x1]
      %v499 = vlaneseq
      %v500 = vshrl.u32 %v499, 7
      %v501 = vsub.s32 0, %v500
      %v502 = vrot.slane %v497, %v501
      %v504 = vmul.f32 %v496, %v502
      %v505 = vld [vmem:[%s3] sm:$0x1]
      %v507 = vlaneseq
      %v508 = vshrl.u32 %v507, 7
      %v509 = vsub.s32 0, %v508
      %v510 = vrot.slane %v505, %v509
      %v512 = vadd.f32 %v504, %v510
      %v513 = vpack.c.bf16 %v512, %v512
      %v514 = vld [vmem:[%s4] sm:$0xf]
      %v515 = vld [vmem:[%s4 + $0x4] sm:$0xf]
      %v516 = vld [vmem:[%s4 + $0x8] sm:$0xf]
      %v517 = vld [vmem:[%s4 + $0xc] sm:$0xf]
      %v518 = vld [vmem:[%s5] sm:$0x1]
      %v520 = vlaneseq
      %v521 = vshrl.u32 %v520, 7
      %v522 = vsub.s32 0, %v521
      %v523 = vrot.slane %v518, %v522
      %v529 = vunpack.c.l.b16 %v514
      %v530 = vunpack.c.l.b16 %v515
      %v531 = vunpack.c.l.b16 %v516
      %v532 = vunpack.c.l.b16 %v517
      %v533 = vpack.c.b16 %v530, %v529
      %v534 = vpack.c.b16 %v532, %v531
      %v538 = vsel %vm482, %v513, 0
      %540 = vmatprep.subr.bf16.mxu0 0
      %541 = vmatpush1.bf16.msra.mxu0 %v533
      %542 = vmatprep.subr.bf16.mxu0 0
      %543 = vmatpush1.bf16.msra.mxu0 %v534
      %544 = vmatprep.subr.bf16.mxu0 0
      %545 = vmatpush1.bf16.msra.mxu0 0
      %546 = vmatprep.subr.bf16.mxu0 0
      %547 = vmatpush1.bf16.msra.mxu0 0
      %548 = vmatprep.subr.bf16.mxu0 0
      %549 = vmatpush1.bf16.msra.mxu0 0
      %550 = vmatprep.subr.bf16.mxu0 0
      %551 = vmatpush1.bf16.msra.mxu0 0
      %552 = vmatprep.subr.bf16.mxu0 0
      %553 = vmatpush1.bf16.msra.mxu0 0
      %554 = vmatprep.subr.bf16.mxu0 0
      %555 = vmatpush1.bf16.msra.mxu0 0
      %556 = vmatprep.subr.bf16.mxu0 0
      %557 = vmatpush1.bf16.msra.mxu0 0
      %558 = vmatprep.subr.bf16.mxu0 0
      %559 = vmatpush1.bf16.msra.mxu0 0
      %560 = vmatprep.subr.bf16.mxu0 0
      %561 = vmatpush1.bf16.msra.mxu0 0
      %562 = vmatprep.subr.bf16.mxu0 0
      %563 = vmatpush1.bf16.msra.mxu0 0
      %564 = vmatprep.subr.bf16.mxu0 0
      %565 = vmatpush1.bf16.msra.mxu0 0
      %566 = vmatprep.subr.bf16.mxu0 0
      %567 = vmatpush1.bf16.msra.mxu0 0
      %568 = vmatprep.subr.bf16.mxu0 0
      %569 = vmatpush1.bf16.msra.mxu0 0
      %570 = vmatprep.subr.bf16.mxu0 0
      %571 = vmatpush1.bf16.msra.mxu0 0
      %572 = vmatprep.mubr.bf16.mxu0 0
      %573 = vmatmul.mubr.bf16.gmra.mrb[0].mxu0 %v538
      %v574 = vpop.f32.mrb[0].mxu0
      %v575 = vadd.f32 %v523, %v574
      %v576 = vpop.f32.mrb[0].mxu0
      %v577 = vpop.f32.mrb[0].mxu0
      %v578 = vpop.f32.mrb[0].mxu0
      %579 = vdwg.mxu0
      %v580 = vld [vmem:[%s475] sm:$0xf]
      %v581 = vld [vmem:[%s7] sm:$0x1]
      %v583 = vlaneseq
      %v584 = vshrl.u32 %v583, 7
      %v585 = vsub.s32 0, %v584
      %v586 = vrot.slane %v581, %v585
      %v588 = vadd.f32 %v586, 0.0
      %v589 = vpack.c.bf16 %v575, %v575
      %v590 = vlaneseq
      %v591 = vshrl.u32 %v590, 7
      %v592 = vsub.s32 0, %v591
      %v593 = vrot.slane %v580, %v592
      %595 = vbcast.lane.b32.xlu0 %v593, 256
      %v596 = vpop.permute.xlu0 %595
      %v597 = vmul.f32 %v596, %v593
      %599 = vrot.lane.b32.xlu0 %v589, 96
      %v600 = vpop.permute.xlu0 %599
      %vm601 = vcmask 64512
      %v603 = vsel %vm601, %v589, 0
      %v606 = vsel %vm601, %v600, 0
      %608 = vmatprep.subr.bf16.mxu0 0
      %609 = vmatpush1.bf16.xpose.msra.mxu0 %v606
      %610 = vmatprep.subr.bf16.mxu0 0
      %611 = vmatpush1.bf16.xpose.msra.mxu0 0
      %612 = vmatprep.subr.bf16.mxu0 0
      %613 = vmatpush1.bf16.xpose.msra.mxu0 0
      %614 = vmatprep.subr.bf16.mxu0 0
      %615 = vmatpush1.bf16.xpose.msra.mxu0 0
      %616 = vmatprep.subr.bf16.mxu0 0
      %617 = vmatpush1.bf16.xpose.msra.mxu0 0
      %618 = vmatprep.subr.bf16.mxu0 0
      %619 = vmatpush1.bf16.xpose.msra.mxu0 0
      %620 = vmatprep.subr.bf16.mxu0 0
      %621 = vmatpush1.bf16.xpose.msra.mxu0 0
      %622 = vmatprep.subr.bf16.mxu0 0
      %623 = vmatpush1.bf16.xpose.msra.mxu0 0
      %624 = vmatprep.subr.bf16.mxu0 0
      %625 = vmatpush1.bf16.xpose.msra.mxu0 0
      %626 = vmatprep.subr.bf16.mxu0 0
      %627 = vmatpush1.bf16.xpose.msra.mxu0 0
      %628 = vmatprep.subr.bf16.mxu0 0
      %629 = vmatpush1.bf16.xpose.msra.mxu0 0
      %630 = vmatprep.subr.bf16.mxu0 0
      %631 = vmatpush1.bf16.xpose.msra.mxu0 0
      %632 = vmatprep.subr.bf16.mxu0 0
      %633 = vmatpush1.bf16.xpose.msra.mxu0 0
      %634 = vmatprep.subr.bf16.mxu0 0
      %635 = vmatpush1.bf16.xpose.msra.mxu0 0
      %636 = vmatprep.subr.bf16.mxu0 0
      %637 = vmatpush1.bf16.xpose.msra.mxu0 0
      %638 = vmatprep.subr.bf16.mxu0 0
      %639 = vmatpush1.bf16.xpose.msra.mxu0 0
      %640 = vmatprep.mubr.bf16.mxu0 0
      %641 = vmatmul.mubr.bf16.gmra.mrb[0].mxu0 %v603
      %v642 = vpop.f32.mrb[0].mxu0
      %v643 = vadd.f32 %v597, %v642
      %v644 = vpop.f32.mrb[0].mxu0
      %v645 = vpop.f32.mrb[0].mxu0
      %v646 = vpop.f32.mrb[0].mxu0
      %647 = vdwg.mxu0
      %v648 = vsel %vm601, %v643, -inf
      %649 = vmax.xlane.f32.xlu0 %v648
      %v650 = vpop.xlane.xlu0 %649
      %v651 = vsub.f32 %v643, %v650
      %v652 = vmul.f32 %v651, 1.442695
      %v653 = vpow.pop %v652
      %v654 = vsel %vm601, %v653, 0.0
      %655 = vadd.xlane.f32.xlu0 %v654
      %v656 = vpop.xlane.xlu0 %655
      %v657 = vrcp.pop %v656
      %v658 = vmul.f32 %v653, %v657
      %v659 = vpack.c.bf16 %v658, %v658
      %660 = vrot.lane.b32.xlu0 %v589, 64
      %v661 = vpop.permute.xlu0 %660
      %v663 = vsel %vm601, %v659, 0
      %vm665 = vcmask 1043456
      %v667 = vsel %vm665, %v661, 0
      %669 = vmatprep.subr.bf16.mxu0 0
      %670 = vmatpush1.bf16.msra.mxu0 %v667
      %671 = vmatprep.subr.bf16.mxu0 0
      %672 = vmatpush1.bf16.msra.mxu0 0
      %673 = vmatprep.subr.bf16.mxu0 0
      %674 = vmatpush1.bf16.msra.mxu0 0
      %675 = vmatprep.subr.bf16.mxu0 0
      %676 = vmatpush1.bf16.msra.mxu0 0
      %677 = vmatprep.subr.bf16.mxu0 0
      %678 = vmatpush1.bf16.msra.mxu0 0
      %679 = vmatprep.subr.bf16.mxu0 0
      %680 = vmatpush1.bf16.msra.mxu0 0
      %681 = vmatprep.subr.bf16.mxu0 0
      %682 = vmatpush1.bf16.msra.mxu0 0
      %683 = vmatprep.subr.bf16.mxu0 0
      %684 = vmatpush1.bf16.msra.mxu0 0
      %685 = vmatprep.subr.bf16.mxu0 0
      %686 = vmatpush1.bf16.msra.mxu0 0
      %687 = vmatprep.subr.bf16.mxu0 0
      %688 = vmatpush1.bf16.msra.mxu0 0
      %689 = vmatprep.subr.bf16.mxu0 0
      %690 = vmatpush1.bf16.msra.mxu0 0
      %691 = vmatprep.subr.bf16.mxu0 0
      %692 = vmatpush1.bf16.msra.mxu0 0
      %693 = vmatprep.subr.bf16.mxu0 0
      %694 = vmatpush1.bf16.msra.mxu0 0
      %695 = vmatprep.subr.bf16.mxu0 0
      %696 = vmatpush1.bf16.msra.mxu0 0
      %697 = vmatprep.subr.bf16.mxu0 0
      %698 = vmatpush1.bf16.msra.mxu0 0
      %699 = vmatprep.subr.bf16.mxu0 0
      %700 = vmatpush1.bf16.msra.mxu0 0
      %701 = vmatprep.mubr.bf16.mxu0 0
      %702 = vmatmul.mubr.bf16.gmra.mrb[0].mxu0 %v663
      %v703 = vpop.f32.mrb[0].mxu0
      %v704 = vadd.f32 0.0, %v703
      %v705 = vpop.f32.mrb[0].mxu0
      %v706 = vpop.f32.mrb[0].mxu0
      %v707 = vpop.f32.mrb[0].mxu0
      %708 = vdwg.mxu0
      %v709 = vpack.c.bf16 %v704, %v704
      %v710 = vld [vmem:[%s6] sm:$0xf]
      %v712 = vsel %vm601, %v709, 0
      %v715 = vsel %vm665, %v710, 0
      %717 = vmatprep.subr.bf16.mxu0 0
      %718 = vmatpush1.bf16.msra.mxu0 %v715
      %719 = vmatprep.subr.bf16.mxu0 0
      %720 = vmatpush1.bf16.msra.mxu0 0
      %721 = vmatprep.subr.bf16.mxu0 0
      %722 = vmatpush1.bf16.msra.mxu0 0
      %723 = vmatprep.subr.bf16.mxu0 0
      %724 = vmatpush1.bf16.msra.mxu0 0
      %725 = vmatprep.subr.bf16.mxu0 0
      %726 = vmatpush1.bf16.msra.mxu0 0
      %727 = vmatprep.subr.bf16.mxu0 0
      %728 = vmatpush1.bf16.msra.mxu0 0
      %729 = vmatprep.subr.bf16.mxu0 0
      %730 = vmatpush1.bf16.msra.mxu0 0
      %731 = vmatprep.subr.bf16.mxu0 0
      %732 = vmatpush1.bf16.msra.mxu0 0
      %733 = vmatprep.subr.bf16.mxu0 0
      %734 = vmatpush1.bf16.msra.mxu0 0
      %735 = vmatprep.subr.bf16.mxu0 0
      %736 = vmatpush1.bf16.msra.mxu0 0
      %737 = vmatprep.subr.bf16.mxu0 0
      %738 = vmatpush1.bf16.msra.mxu0 0
      %739 = vmatprep.subr.bf16.mxu0 0
      %740 = vmatpush1.bf16.msra.mxu0 0
      %741 = vmatprep.subr.bf16.mxu0 0
      %742 = vmatpush1.bf16.msra.mxu0 0
      %743 = vmatprep.subr.bf16.mxu0 0
      %744 = vmatpush1.bf16.msra.mxu0 0
      %745 = vmatprep.subr.bf16.mxu0 0
      %746 = vmatpush1.bf16.msra.mxu0 0
      %747 = vmatprep.subr.bf16.mxu0 0
      %748 = vmatpush1.bf16.msra.mxu0 0
      %749 = vmatprep.mubr.bf16.mxu0 0
      %750 = vmatmul.mubr.bf16.gmra.mrb[0].mxu0 %v712
      %v751 = vpop.f32.mrb[0].mxu0
      %v752 = vadd.f32 0.0, %v751
      %v753 = vpop.f32.mrb[0].mxu0
      %v754 = vpop.f32.mrb[0].mxu0
      %v755 = vpop.f32.mrb[0].mxu0
      %756 = vdwg.mxu0
      %v757 = vadd.f32 %v588, %v752
      %v758 = vlaneseq
      %v759 = vshrl.u32 %v758, 7
      %v760 = vsub.s32 1, %v759
      %v761 = vrot.slane %v580, %v760
      %763 = vbcast.lane.b32.xlu0 %v761, 256
      %v764 = vpop.permute.xlu0 %763
      %v765 = vmul.f32 %v764, %v761
      %766 = vrot.lane.b32.xlu0 %v589, 120
      %v767 = vpop.permute.xlu0 %766
      %768 = vrot.lane.b32.xlu0 %v589, 88
      %v769 = vpop.permute.xlu0 %768
      %v771 = vsel %vm601, %v767, 0
      %v774 = vsel %vm601, %v769, 0
      %776 = vmatprep.subr.bf16.mxu0 0
      %777 = vmatpush1.bf16.xpose.msra.mxu0 %v774
      %778 = vmatprep.subr.bf16.mxu0 0
      %779 = vmatpush1.bf16.xpose.msra.mxu0 0
      %780 = vmatprep.subr.bf16.mxu0 0
      %781 = vmatpush1.bf16.xpose.msra.mxu0 0
      %782 = vmatprep.subr.bf16.mxu0 0
      %783 = vmatpush1.bf16.xpose.msra.mxu0 0
      %784 = vmatprep.subr.bf16.mxu0 0
      %785 = vmatpush1.bf16.xpose.msra.mxu0 0
      %786 = vmatprep.subr.bf16.mxu0 0
      %787 = vmatpush1.bf16.xpose.msra.mxu0 0
      %788 = vmatprep.subr.bf16.mxu0 0
      %789 = vmatpush1.bf16.xpose.msra.mxu0 0
      %790 = vmatprep.subr.bf16.mxu0 0
      %791 = vmatpush1.bf16.xpose.msra.mxu0 0
      %792 = vmatprep.subr.bf16.mxu0 0
      %793 = vmatpush1.bf16.xpose.msra.mxu0 0
      %794 = vmatprep.subr.bf16.mxu0 0
      %795 = vmatpush1.bf16.xpose.msra.mxu0 0
      %796 = vmatprep.subr.bf16.mxu0 0
      %797 = vmatpush1.bf16.xpose.msra.mxu0 0
      %798 = vmatprep.subr.bf16.mxu0 0
      %799 = vmatpush1.bf16.xpose.msra.mxu0 0
      %800 = vmatprep.subr.bf16.mxu0 0
      %801 = vmatpush1.bf16.xpose.msra.mxu0 0
      %802 = vmatprep.subr.bf16.mxu0 0
      %803 = vmatpush1.bf16.xpose.msra.mxu0 0
      %804 = vmatprep.subr.bf16.mxu0 0
      %805 = vmatpush1.bf16.xpose.msra.mxu0 0
      %806 = vmatprep.subr.bf16.mxu0 0
      %807 = vmatpush1.bf16.xpose.msra.mxu0 0
      %808 = vmatprep.mubr.bf16.mxu0 0
      %809 = vmatmul.mubr.bf16.gmra.mrb[0].mxu0 %v771
      %v810 = vpop.f32.mrb[0].mxu0
      %v811 = vadd.f32 %v765, %v810
      %v812 = vpop.f32.mrb[0].mxu0
      %v813 = vpop.f32.mrb[0].mxu0
      %v814 = vpop.f32.mrb[0].mxu0
      %815 = vdwg.mxu0
      %v816 = vsel %vm601, %v811, -inf
      %817 = vmax.xlane.f32.xlu0 %v816
      %v818 = vpop.xlane.xlu0 %817
      %v819 = vsub.f32 %v811, %v818
      %v820 = vmul.f32 %v819, 1.442695
      %v821 = vpow.pop %v820
      %v822 = vsel %vm601, %v821, 0.0
      %823 = vadd.xlane.f32.xlu0 %v822
      %v824 = vpop.xlane.xlu0 %823
      %v825 = vrcp.pop %v824
      %v826 = vmul.f32 %v821, %v825
      %v827 = vpack.c.bf16 %v826, %v826
      %828 = vrot.lane.b32.xlu0 %v589, 56
      %v829 = vpop.permute.xlu0 %828
      %v831 = vsel %vm601, %v827, 0
      %v834 = vsel %vm665, %v829, 0
      %836 = vmatprep.subr.bf16.mxu0 0
      %837 = vmatpush1.bf16.msra.mxu0 %v834
      %838 = vmatprep.subr.bf16.mxu0 0
      %839 = vmatpush1.bf16.msra.mxu0 0
      %840 = vmatprep.subr.bf16.mxu0 0
      %841 = vmatpush1.bf16.msra.mxu0 0
      %842 = vmatprep.subr.bf16.mxu0 0
      %843 = vmatpush1.bf16.msra.mxu0 0
      %844 = vmatprep.subr.bf16.mxu0 0
      %845 = vmatpush1.bf16.msra.mxu0 0
      %846 = vmatprep.subr.bf16.mxu0 0
      %847 = vmatpush1.bf16.msra.mxu0 0
      %848 = vmatprep.subr.bf16.mxu0 0
      %849 = vmatpush1.bf16.msra.mxu0 0
      %850 = vmatprep.subr.bf16.mxu0 0
      %851 = vmatpush1.bf16.msra.mxu0 0
      %852 = vmatprep.subr.bf16.mxu0 0
      %853 = vmatpush1.bf16.msra.mxu0 0
      %854 = vmatprep.subr.bf16.mxu0 0
      %855 = vmatpush1.bf16.msra.mxu0 0
      %856 = vmatprep.subr.bf16.mxu0 0
      %857 = vmatpush1.bf16.msra.mxu0 0
      %858 = vmatprep.subr.bf16.mxu0 0
      %859 = vmatpush1.bf16.msra.mxu0 0
      %860 = vmatprep.subr.bf16.mxu0 0
      %861 = vmatpush1.bf16.msra.mxu0 0
      %862 = vmatprep.subr.bf16.mxu0 0
      %863 = vmatpush1.bf16.msra.mxu0 0
      %864 = vmatprep.subr.bf16.mxu0 0
      %865 = vmatpush1.bf16.msra.mxu0 0
      %866 = vmatprep.subr.bf16.mxu0 0
      %867 = vmatpush1.bf16.msra.mxu0 0
      %868 = vmatprep.mubr.bf16.mxu0 0
      %869 = vmatmul.mubr.bf16.gmra.mrb[0].mxu0 %v831
      %v870 = vpop.f32.mrb[0].mxu0
      %v871 = vadd.f32 0.0, %v870
      %v872 = vpop.f32.mrb[0].mxu0
      %v873 = vpop.f32.mrb[0].mxu0
      %v874 = vpop.f32.mrb[0].mxu0
      %875 = vdwg.mxu0
      %v876 = vpack.c.bf16 %v871, %v871
      %v877 = vld [vmem:[%s6 + $0x4] sm:$0xf]
      %v879 = vsel %vm601, %v876, 0
      %v882 = vsel %vm665, %v877, 0
      %884 = vmatprep.subr.bf16.mxu0 0
      %885 = vmatpush1.bf16.msra.mxu0 %v882
      %886 = vmatprep.subr.bf16.mxu0 0
      %887 = vmatpush1.bf16.msra.mxu0 0
      %888 = vmatprep.subr.bf16.mxu0 0
      %889 = vmatpush1.bf16.msra.mxu0 0
      %890 = vmatprep.subr.bf16.mxu0 0
      %891 = vmatpush1.bf16.msra.mxu0 0
      %892 = vmatprep.subr.bf16.mxu0 0
      %893 = vmatpush1.bf16.msra.mxu0 0
      %894 = vmatprep.subr.bf16.mxu0 0
      %895 = vmatpush1.bf16.msra.mxu0 0
      %896 = vmatprep.subr.bf16.mxu0 0
      %897 = vmatpush1.bf16.msra.mxu0 0
      %898 = vmatprep.subr.bf16.mxu0 0
      %899 = vmatpush1.bf16.msra.mxu0 0
      %900 = vmatprep.subr.bf16.mxu0 0
      %901 = vmatpush1.bf16.msra.mxu0 0
      %902 = vmatprep.subr.bf16.mxu0 0
      %903 = vmatpush1.bf16.msra.mxu0 0
      %904 = vmatprep.subr.bf16.mxu0 0
      %905 = vmatpush1.bf16.msra.mxu0 0
      %906 = vmatprep.subr.bf16.mxu0 0
      %907 = vmatpush1.bf16.msra.mxu0 0
      %908 = vmatprep.subr.bf16.mxu0 0
      %909 = vmatpush1.bf16.msra.mxu0 0
      %910 = vmatprep.subr.bf16.mxu0 0
      %911 = vmatpush1.bf16.msra.mxu0 0
      %912 = vmatprep.subr.bf16.mxu0 0
      %913 = vmatpush1.bf16.msra.mxu0 0
      %914 = vmatprep.subr.bf16.mxu0 0
      %915 = vmatpush1.bf16.msra.mxu0 0
      %916 = vmatprep.mubr.bf16.mxu0 0
      %917 = vmatmul.mubr.bf16.gmra.mrb[0].mxu0 %v879
      %v918 = vpop.f32.mrb[0].mxu0
      %v919 = vadd.f32 0.0, %v918
      %v920 = vpop.f32.mrb[0].mxu0
      %v921 = vpop.f32.mrb[0].mxu0
      %v922 = vpop.f32.mrb[0].mxu0
      %923 = vdwg.mxu0
      %v924 = vadd.f32 %v757, %v919
      %v925 = vlaneseq
      %v926 = vshrl.u32 %v925, 7
      %v927 = vsub.s32 2, %v926
      %v928 = vrot.slane %v580, %v927
      %930 = vbcast.lane.b32.xlu0 %v928, 256
      %v931 = vpop.permute.xlu0 %930
      %v932 = vmul.f32 %v931, %v928
      %933 = vrot.lane.b32.xlu0 %v589, 112
      %v934 = vpop.permute.xlu0 %933
      %935 = vrot.lane.b32.xlu0 %v589, 80
      %v936 = vpop.permute.xlu0 %935
      %v938 = vsel %vm601, %v934, 0
      %v941 = vsel %vm601, %v936, 0
      %943 = vmatprep.subr.bf16.mxu0 0
      %944 = vmatpush1.bf16.xpose.msra.mxu0 %v941
      %945 = vmatprep.subr.bf16.mxu0 0
      %946 = vmatpush1.bf16.xpose.msra.mxu0 0
      %947 = vmatprep.subr.bf16.mxu0 0
      %948 = vmatpush1.bf16.xpose.msra.mxu0 0
      %949 = vmatprep.subr.bf16.mxu0 0
      %950 = vmatpush1.bf16.xpose.msra.mxu0 0
      %951 = vmatprep.subr.bf16.mxu0 0
      %952 = vmatpush1.bf16.xpose.msra.mxu0 0
      %953 = vmatprep.subr.bf16.mxu0 0
      %954 = vmatpush1.bf16.xpose.msra.mxu0 0
      %955 = vmatprep.subr.bf16.mxu0 0
      %956 = vmatpush1.bf16.xpose.msra.mxu0 0
      %957 = vmatprep.subr.bf16.mxu0 0
      %958 = vmatpush1.bf16.xpose.msra.mxu0 0
      %959 = vmatprep.subr.bf16.mxu0 0
      %960 = vmatpush1.bf16.xpose.msra.mxu0 0
      %961 = vmatprep.subr.bf16.mxu0 0
      %962 = vmatpush1.bf16.xpose.msra.mxu0 0
      %963 = vmatprep.subr.bf16.mxu0 0
      %964 = vmatpush1.bf16.xpose.msra.mxu0 0
      %965 = vmatprep.subr.bf16.mxu0 0
      %966 = vmatpush1.bf16.xpose.msra.mxu0 0
      %967 = vmatprep.subr.bf16.mxu0 0
      %968 = vmatpush1.bf16.xpose.msra.mxu0 0
      %969 = vmatprep.subr.bf16.mxu0 0
      %970 = vmatpush1.bf16.xpose.msra.mxu0 0
      %971 = vmatprep.subr.bf16.mxu0 0
      %972 = vmatpush1.bf16.xpose.msra.mxu0 0
      %973 = vmatprep.subr.bf16.mxu0 0
      %974 = vmatpush1.bf16.xpose.msra.mxu0 0
      %975 = vmatprep.mubr.bf16.mxu0 0
      %976 = vmatmul.mubr.bf16.gmra.mrb[0].mxu0 %v938
      %v977 = vpop.f32.mrb[0].mxu0
      %v978 = vadd.f32 %v932, %v977
      %v979 = vpop.f32.mrb[0].mxu0
      %v980 = vpop.f32.mrb[0].mxu0
      %v981 = vpop.f32.mrb[0].mxu0
      %982 = vdwg.mxu0
      %v983 = vsel %vm601, %v978, -inf
      %984 = vmax.xlane.f32.xlu0 %v983
      %v985 = vpop.xlane.xlu0 %984
      %v986 = vsub.f32 %v978, %v985
      %v987 = vmul.f32 %v986, 1.442695
      %v988 = vpow.pop %v987
      %v989 = vsel %vm601, %v988, 0.0
      %990 = vadd.xlane.f32.xlu0 %v989
      %v991 = vpop.xlane.xlu0 %990
      %v992 = vrcp.pop %v991
      %v993 = vmul.f32 %v988, %v992
      %v994 = vpack.c.bf16 %v993, %v993
      %995 = vrot.lane.b32.xlu0 %v589, 48
      %v996 = vpop.permute.xlu0 %995
      %v998 = vsel %vm601, %v994, 0
      %v1001 = vsel %vm665, %v996, 0
      %1003 = vmatprep.subr.bf16.mxu0 0
      %1004 = vmatpush1.bf16.msra.mxu0 %v1001
      %1005 = vmatprep.subr.bf16.mxu0 0
      %1006 = vmatpush1.bf16.msra.mxu0 0
      %1007 = vmatprep.subr.bf16.mxu0 0
      %1008 = vmatpush1.bf16.msra.mxu0 0
      %1009 = vmatprep.subr.bf16.mxu0 0
      %1010 = vmatpush1.bf16.msra.mxu0 0
      %1011 = vmatprep.subr.bf16.mxu0 0
      %1012 = vmatpush1.bf16.msra.mxu0 0
      %1013 = vmatprep.subr.bf16.mxu0 0
      %1014 = vmatpush1.bf16.msra.mxu0 0
      %1015 = vmatprep.subr.bf16.mxu0 0
      %1016 = vmatpush1.bf16.msra.mxu0 0
      %1017 = vmatprep.subr.bf16.mxu0 0
      %1018 = vmatpush1.bf16.msra.mxu0 0
      %1019 = vmatprep.subr.bf16.mxu0 0
      %1020 = vmatpush1.bf16.msra.mxu0 0
      %1021 = vmatprep.subr.bf16.mxu0 0
      %1022 = vmatpush1.bf16.msra.mxu0 0
      %1023 = vmatprep.subr.bf16.mxu0 0
      %1024 = vmatpush1.bf16.msra.mxu0 0
      %1025 = vmatprep.subr.bf16.mxu0 0
      %1026 = vmatpush1.bf16.msra.mxu0 0
      %1027 = vmatprep.subr.bf16.mxu0 0
      %1028 = vmatpush1.bf16.msra.mxu0 0
      %1029 = vmatprep.subr.bf16.mxu0 0
      %1030 = vmatpush1.bf16.msra.mxu0 0
      %1031 = vmatprep.subr.bf16.mxu0 0
      %1032 = vmatpush1.bf16.msra.mxu0 0
      %1033 = vmatprep.subr.bf16.mxu0 0
      %1034 = vmatpush1.bf16.msra.mxu0 0
      %1035 = vmatprep.mubr.bf16.mxu0 0
      %1036 = vmatmul.mubr.bf16.gmra.mrb[0].mxu0 %v998
      %v1037 = vpop.f32.mrb[0].mxu0
      %v1038 = vadd.f32 0.0, %v1037
      %v1039 = vpop.f32.mrb[0].mxu0
      %v1040 = vpop.f32.mrb[0].mxu0
      %v1041 = vpop.f32.mrb[0].mxu0
      %1042 = vdwg.mxu0
      %v1043 = vpack.c.bf16 %v1038, %v1038
      %v1044 = vld [vmem:[%s6 + $0x8] sm:$0xf]
      %v1046 = vsel %vm601, %v1043, 0
      %v1049 = vsel %vm665, %v1044, 0
      %1051 = vmatprep.subr.bf16.mxu0 0
      %1052 = vmatpush1.bf16.msra.mxu0 %v1049
      %1053 = vmatprep.subr.bf16.mxu0 0
      %1054 = vmatpush1.bf16.msra.mxu0 0
      %1055 = vmatprep.subr.bf16.mxu0 0
      %1056 = vmatpush1.bf16.msra.mxu0 0
      %1057 = vmatprep.subr.bf16.mxu0 0
      %1058 = vmatpush1.bf16.msra.mxu0 0
      %1059 = vmatprep.subr.bf16.mxu0 0
      %1060 = vmatpush1.bf16.msra.mxu0 0
      %1061 = vmatprep.subr.bf16.mxu0 0
      %1062 = vmatpush1.bf16.msra.mxu0 0
      %1063 = vmatprep.subr.bf16.mxu0 0
      %1064 = vmatpush1.bf16.msra.mxu0 0
      %1065 = vmatprep.subr.bf16.mxu0 0
      %1066 = vmatpush1.bf16.msra.mxu0 0
      %1067 = vmatprep.subr.bf16.mxu0 0
      %1068 = vmatpush1.bf16.msra.mxu0 0
      %1069 = vmatprep.subr.bf16.mxu0 0
      %1070 = vmatpush1.bf16.msra.mxu0 0
      %1071 = vmatprep.subr.bf16.mxu0 0
      %1072 = vmatpush1.bf16.msra.mxu0 0
      %1073 = vmatprep.subr.bf16.mxu0 0
      %1074 = vmatpush1.bf16.msra.mxu0 0
      %1075 = vmatprep.subr.bf16.mxu0 0
      %1076 = vmatpush1.bf16.msra.mxu0 0
      %1077 = vmatprep.subr.bf16.mxu0 0
      %1078 = vmatpush1.bf16.msra.mxu0 0
      %1079 = vmatprep.subr.bf16.mxu0 0
      %1080 = vmatpush1.bf16.msra.mxu0 0
      %1081 = vmatprep.subr.bf16.mxu0 0
      %1082 = vmatpush1.bf16.msra.mxu0 0
      %1083 = vmatprep.mubr.bf16.mxu0 0
      %1084 = vmatmul.mubr.bf16.gmra.mrb[0].mxu0 %v1046
      %v1085 = vpop.f32.mrb[0].mxu0
      %v1086 = vadd.f32 0.0, %v1085
      %v1087 = vpop.f32.mrb[0].mxu0
      %v1088 = vpop.f32.mrb[0].mxu0
      %v1089 = vpop.f32.mrb[0].mxu0
      %1090 = vdwg.mxu0
      %v1091 = vadd.f32 %v924, %v1086
      %v1092 = vlaneseq
      %v1093 = vshrl.u32 %v1092, 7
      %v1094 = vsub.s32 3, %v1093
      %v1095 = vrot.slane %v580, %v1094
      %1097 = vbcast.lane.b32.xlu0 %v1095, 256
      %v1098 = vpop.permute.xlu0 %1097
      %v1099 = vmul.f32 %v1098, %v1095
      %1100 = vrot.lane.b32.xlu0 %v589, 104
      %v1101 = vpop.permute.xlu0 %1100
      %1102 = vrot.lane.b32.xlu0 %v589, 72
      %v1103 = vpop.permute.xlu0 %1102
      %v1105 = vsel %vm601, %v1101, 0
      %v1108 = vsel %vm601, %v1103, 0
      %1110 = vmatprep.subr.bf16.mxu0 0
      %1111 = vmatpush1.bf16.xpose.msra.mxu0 %v1108
      %1112 = vmatprep.subr.bf16.mxu0 0
      %1113 = vmatpush1.bf16.xpose.msra.mxu0 0
      %1114 = vmatprep.subr.bf16.mxu0 0
      %1115 = vmatpush1.bf16.xpose.msra.mxu0 0
      %1116 = vmatprep.subr.bf16.mxu0 0
      %1117 = vmatpush1.bf16.xpose.msra.mxu0 0
      %1118 = vmatprep.subr.bf16.mxu0 0
      %1119 = vmatpush1.bf16.xpose.msra.mxu0 0
      %1120 = vmatprep.subr.bf16.mxu0 0
      %1121 = vmatpush1.bf16.xpose.msra.mxu0 0
      %1122 = vmatprep.subr.bf16.mxu0 0
      %1123 = vmatpush1.bf16.xpose.msra.mxu0 0
      %1124 = vmatprep.subr.bf16.mxu0 0
      %1125 = vmatpush1.bf16.xpose.msra.mxu0 0
      %1126 = vmatprep.subr.bf16.mxu0 0
      %1127 = vmatpush1.bf16.xpose.msra.mxu0 0
      %1128 = vmatprep.subr.bf16.mxu0 0
      %1129 = vmatpush1.bf16.xpose.msra.mxu0 0
      %1130 = vmatprep.subr.bf16.mxu0 0
      %1131 = vmatpush1.bf16.xpose.msra.mxu0 0
      %1132 = vmatprep.subr.bf16.mxu0 0
      %1133 = vmatpush1.bf16.xpose.msra.mxu0 0
      %1134 = vmatprep.subr.bf16.mxu0 0
      %1135 = vmatpush1.bf16.xpose.msra.mxu0 0
      %1136 = vmatprep.subr.bf16.mxu0 0
      %1137 = vmatpush1.bf16.xpose.msra.mxu0 0
      %1138 = vmatprep.subr.bf16.mxu0 0
      %1139 = vmatpush1.bf16.xpose.msra.mxu0 0
      %1140 = vmatprep.subr.bf16.mxu0 0
      %1141 = vmatpush1.bf16.xpose.msra.mxu0 0
      %1142 = vmatprep.mubr.bf16.mxu0 0
      %1143 = vmatmul.mubr.bf16.gmra.mrb[0].mxu0 %v1105
      %v1144 = vpop.f32.mrb[0].mxu0
      %v1145 = vadd.f32 %v1099, %v1144
      %v1146 = vpop.f32.mrb[0].mxu0
      %v1147 = vpop.f32.mrb[0].mxu0
      %v1148 = vpop.f32.mrb[0].mxu0
      %1149 = vdwg.mxu0
      %v1150 = vsel %vm601, %v1145, -inf
      %1151 = vmax.xlane.f32.xlu0 %v1150
      %v1152 = vpop.xlane.xlu0 %1151
      %v1153 = vsub.f32 %v1145, %v1152
      %v1154 = vmul.f32 %v1153, 1.442695
      %v1155 = vpow.pop %v1154
      %v1156 = vsel %vm601, %v1155, 0.0
      %1157 = vadd.xlane.f32.xlu0 %v1156
      %v1158 = vpop.xlane.xlu0 %1157
      %v1159 = vrcp.pop %v1158
      %v1160 = vmul.f32 %v1155, %v1159
      %v1161 = vpack.c.bf16 %v1160, %v1160
      %1162 = vrot.lane.b32.xlu0 %v589, 40
      %v1163 = vpop.permute.xlu0 %1162
      %v1165 = vsel %vm601, %v1161, 0
      %v1168 = vsel %vm665, %v1163, 0
      %1170 = vmatprep.subr.bf16.mxu0 0
      %1171 = vmatpush1.bf16.msra.mxu0 %v1168
      %1172 = vmatprep.subr.bf16.mxu0 0
      %1173 = vmatpush1.bf16.msra.mxu0 0
      %1174 = vmatprep.subr.bf16.mxu0 0
      %1175 = vmatpush1.bf16.msra.mxu0 0
      %1176 = vmatprep.subr.bf16.mxu0 0
      %1177 = vmatpush1.bf16.msra.mxu0 0
      %1178 = vmatprep.subr.bf16.mxu0 0
      %1179 = vmatpush1.bf16.msra.mxu0 0
      %1180 = vmatprep.subr.bf16.mxu0 0
      %1181 = vmatpush1.bf16.msra.mxu0 0
      %1182 = vmatprep.subr.bf16.mxu0 0
      %1183 = vmatpush1.bf16.msra.mxu0 0
      %1184 = vmatprep.subr.bf16.mxu0 0
      %1185 = vmatpush1.bf16.msra.mxu0 0
      %1186 = vmatprep.subr.bf16.mxu0 0
      %1187 = vmatpush1.bf16.msra.mxu0 0
      %1188 = vmatprep.subr.bf16.mxu0 0
      %1189 = vmatpush1.bf16.msra.mxu0 0
      %1190 = vmatprep.subr.bf16.mxu0 0
      %1191 = vmatpush1.bf16.msra.mxu0 0
      %1192 = vmatprep.subr.bf16.mxu0 0
      %1193 = vmatpush1.bf16.msra.mxu0 0
      %1194 = vmatprep.subr.bf16.mxu0 0
      %1195 = vmatpush1.bf16.msra.mxu0 0
      %1196 = vmatprep.subr.bf16.mxu0 0
      %1197 = vmatpush1.bf16.msra.mxu0 0
      %1198 = vmatprep.subr.bf16.mxu0 0
      %1199 = vmatpush1.bf16.msra.mxu0 0
      %1200 = vmatprep.subr.bf16.mxu0 0
      %1201 = vmatpush1.bf16.msra.mxu0 0
      %1202 = vmatprep.mubr.bf16.mxu0 0
      %1203 = vmatmul.mubr.bf16.gmra.mrb[0].mxu0 %v1165
      %v1204 = vpop.f32.mrb[0].mxu0
      %v1205 = vadd.f32 0.0, %v1204
      %v1206 = vpop.f32.mrb[0].mxu0
      %v1207 = vpop.f32.mrb[0].mxu0
      %v1208 = vpop.f32.mrb[0].mxu0
      %1209 = vdwg.mxu0
      %v1210 = vpack.c.bf16 %v1205, %v1205
      %v1211 = vld [vmem:[%s6 + $0xc] sm:$0xf]
      %v1213 = vsel %vm601, %v1210, 0
      %v1216 = vsel %vm665, %v1211, 0
      %1218 = vmatprep.subr.bf16.mxu0 0
      %1219 = vmatpush1.bf16.msra.mxu0 %v1216
      %1220 = vmatprep.subr.bf16.mxu0 0
      %1221 = vmatpush1.bf16.msra.mxu0 0
      %1222 = vmatprep.subr.bf16.mxu0 0
      %1223 = vmatpush1.bf16.msra.mxu0 0
      %1224 = vmatprep.subr.bf16.mxu0 0
      %1225 = vmatpush1.bf16.msra.mxu0 0
      %1226 = vmatprep.subr.bf16.mxu0 0
      %1227 = vmatpush1.bf16.msra.mxu0 0
      %1228 = vmatprep.subr.bf16.mxu0 0
      %1229 = vmatpush1.bf16.msra.mxu0 0
      %1230 = vmatprep.subr.bf16.mxu0 0
      %1231 = vmatpush1.bf16.msra.mxu0 0
      %1232 = vmatprep.subr.bf16.mxu0 0
      %1233 = vmatpush1.bf16.msra.mxu0 0
      %1234 = vmatprep.subr.bf16.mxu0 0
      %1235 = vmatpush1.bf16.msra.mxu0 0
      %1236 = vmatprep.subr.bf16.mxu0 0
      %1237 = vmatpush1.bf16.msra.mxu0 0
      %1238 = vmatprep.subr.bf16.mxu0 0
      %1239 = vmatpush1.bf16.msra.mxu0 0
      %1240 = vmatprep.subr.bf16.mxu0 0
      %1241 = vmatpush1.bf16.msra.mxu0 0
      %1242 = vmatprep.subr.bf16.mxu0 0
      %1243 = vmatpush1.bf16.msra.mxu0 0
      %1244 = vmatprep.subr.bf16.mxu0 0
      %1245 = vmatpush1.bf16.msra.mxu0 0
      %1246 = vmatprep.subr.bf16.mxu0 0
      %1247 = vmatpush1.bf16.msra.mxu0 0
      %1248 = vmatprep.subr.bf16.mxu0 0
      %1249 = vmatpush1.bf16.msra.mxu0 0
      %1250 = vmatprep.mubr.bf16.mxu0 0
      %1251 = vmatmul.mubr.bf16.gmra.mrb[0].mxu0 %v1213
      %v1252 = vpop.f32.mrb[0].mxu0
      %v1253 = vadd.f32 0.0, %v1252
      %v1254 = vpop.f32.mrb[0].mxu0
      %v1255 = vpop.f32.mrb[0].mxu0
      %v1256 = vpop.f32.mrb[0].mxu0
      %1257 = vdwg.mxu0
      %v1258 = vadd.f32 %v1091, %v1253
      %v1259 = vadd.f32 %v481, %v1258
      %v1260 = vsel %vm482, %v1259, 0.0
      %1261 = vadd.xlane.f32.xlu0 %v1260
      %v1262 = vpop.xlane.xlu0 %1261
      %v1263 = vmul.f32 %v1262, %v486
      %v1264 = vsub.f32 %v1259, %v1263
      %v1265 = vmul.f32 %v1264, %v1264
      %v1266 = vsel %vm482, %v1265, 0.0
      %1267 = vadd.xlane.f32.xlu0 %v1266
      %v1268 = vpop.xlane.xlu0 %1267
      %v1269 = vmul.f32 %v1268, %v486
      %v1270 = vadd.f32 %v1269, 1e-05
      %v1271 = vrsqrt.pop %v1270
      %v1272 = vmul.f32 %v1264, %v1271
      %v1273 = vld [vmem:[%s8] sm:$0x1]
      %v1275 = vlaneseq
      %v1276 = vshrl.u32 %v1275, 7
      %v1277 = vsub.s32 0, %v1276
      %v1278 = vrot.slane %v1273, %v1277
      %v1280 = vmul.f32 %v1272, %v1278
      %v1281 = vld [vmem:[%s9] sm:$0x1]
      %v1283 = vlaneseq
      %v1284 = vshrl.u32 %v1283, 7
      %v1285 = vsub.s32 0, %v1284
      %v1286 = vrot.slane %v1281, %v1285
      %v1288 = vadd.f32 %v1280, %v1286
      %v1289 = vpack.c.bf16 %v1288, %v1288
      %v1290 = vld [vmem:[%s13] sm:$0x1]
      %v1292 = vlaneseq
      %v1293 = vshrl.u32 %v1292, 7
      %v1294 = vsub.s32 0, %v1293
      %v1295 = vrot.slane %v1290, %v1294
      %v1297 = vadd.f32 %v1295, 0.0
      %v1298 = vld [vmem:[%s10] sm:$0xf]
      %v1299 = vld [vmem:[%s10 + $0x4] sm:$0xf]
      %v1300 = vld [vmem:[%s10 + $0x8] sm:$0xf]
      %v1301 = vld [vmem:[%s10 + $0xc] sm:$0xf]
      %v1302 = vld [vmem:[%s11] sm:$0x1]
      %v1304 = vlaneseq
      %v1305 = vshrl.u32 %v1304, 7
      %v1306 = vsub.s32 0, %v1305
      %v1307 = vrot.slane %v1302, %v1306
      %v1313 = vunpack.c.l.b16 %v1298
      %v1314 = vunpack.c.l.b16 %v1299
      %v1315 = vunpack.c.l.b16 %v1300
      %v1316 = vunpack.c.l.b16 %v1301
      %v1317 = vpack.c.b16 %v1314, %v1313
      %v1318 = vpack.c.b16 %v1316, %v1315
      %v1322 = vsel %vm482, %v1289, 0
      %1324 = vmatprep.subr.bf16.mxu0 0
      %1325 = vmatpush1.bf16.msra.mxu0 %v1317
      %1326 = vmatprep.subr.bf16.mxu0 0
      %1327 = vmatpush1.bf16.msra.mxu0 %v1318
      %1328 = vmatprep.subr.bf16.mxu0 0
      %1329 = vmatpush1.bf16.msra.mxu0 0
      %1330 = vmatprep.subr.bf16.mxu0 0
      %1331 = vmatpush1.bf16.msra.mxu0 0
      %1332 = vmatprep.subr.bf16.mxu0 0
      %1333 = vmatpush1.bf16.msra.mxu0 0
      %1334 = vmatprep.subr.bf16.mxu0 0
      %1335 = vmatpush1.bf16.msra.mxu0 0
      %1336 = vmatprep.subr.bf16.mxu0 0
      %1337 = vmatpush1.bf16.msra.mxu0 0
      %1338 = vmatprep.subr.bf16.mxu0 0
      %1339 = vmatpush1.bf16.msra.mxu0 0
      %1340 = vmatprep.subr.bf16.mxu0 0
      %1341 = vmatpush1.bf16.msra.mxu0 0
      %1342 = vmatprep.subr.bf16.mxu0 0
      %1343 = vmatpush1.bf16.msra.mxu0 0
      %1344 = vmatprep.subr.bf16.mxu0 0
      %1345 = vmatpush1.bf16.msra.mxu0 0
      %1346 = vmatprep.subr.bf16.mxu0 0
      %1347 = vmatpush1.bf16.msra.mxu0 0
      %1348 = vmatprep.subr.bf16.mxu0 0
      %1349 = vmatpush1.bf16.msra.mxu0 0
      %1350 = vmatprep.subr.bf16.mxu0 0
      %1351 = vmatpush1.bf16.msra.mxu0 0
      %1352 = vmatprep.subr.bf16.mxu0 0
      %1353 = vmatpush1.bf16.msra.mxu0 0
      %1354 = vmatprep.subr.bf16.mxu0 0
      %1355 = vmatpush1.bf16.msra.mxu0 0
      %1356 = vmatprep.mubr.bf16.mxu0 0
      %1357 = vmatmul.mubr.bf16.gmra.mrb[0].mxu0 %v1322
      %v1358 = vpop.f32.mrb[0].mxu0
      %v1359 = vadd.f32 %v1307, %v1358
      %v1360 = vpop.f32.mrb[0].mxu0
      %v1361 = vpop.f32.mrb[0].mxu0
      %v1362 = vpop.f32.mrb[0].mxu0
      %1363 = vdwg.mxu0
      %v1364 = vmul.f32 %v1359, 1.702
      %v1365 = vxor.u32 %v1364, 2147483648
      %v1366 = vmul.f32 %v1365, 1.442695
      %v1367 = vpow.pop %v1366
      %v1368 = vadd.f32 %v1367, 1.0
      %v1369 = vrcp.pop %v1368
      %v1370 = vmul.f32 1.0, %v1369
      %v1371 = vmul.f32 %v1359, %v1370
      %v1372 = vpack.c.bf16 %v1371, %v1371
      %v1373 = vld [vmem:[%s12] sm:$0xf]
      %v1374 = vld [vmem:[%s12 + $0x4] sm:$0xf]
      %v1375 = vld [vmem:[%s12 + $0x8] sm:$0xf]
      %v1376 = vld [vmem:[%s12 + $0xc] sm:$0xf]
      %v1377 = vld [vmem:[%s12 + $0x10] sm:$0xf]
      %v1378 = vld [vmem:[%s12 + $0x14] sm:$0xf]
      %v1379 = vld [vmem:[%s12 + $0x18] sm:$0xf]
      %v1380 = vld [vmem:[%s12 + $0x1c] sm:$0xf]
      %v1381 = vld [vmem:[%s12 + $0x20] sm:$0xf]
      %v1382 = vld [vmem:[%s12 + $0x24] sm:$0xf]
      %v1383 = vld [vmem:[%s12 + $0x28] sm:$0xf]
      %v1384 = vld [vmem:[%s12 + $0x2c] sm:$0xf]
      %v1385 = vld [vmem:[%s12 + $0x30] sm:$0xf]
      %v1386 = vld [vmem:[%s12 + $0x34] sm:$0xf]
      %v1387 = vld [vmem:[%s12 + $0x38] sm:$0xf]
      %v1388 = vld [vmem:[%s12 + $0x3c] sm:$0xf]
      %v1405 = vunpack.c.l.b16 %v1373
      %v1406 = vunpack.c.l.b16 %v1374
      %v1407 = vunpack.c.l.b16 %v1375
      %v1408 = vunpack.c.l.b16 %v1376
      %v1409 = vunpack.c.l.b16 %v1377
      %v1410 = vunpack.c.l.b16 %v1378
      %v1411 = vunpack.c.l.b16 %v1379
      %v1412 = vunpack.c.l.b16 %v1380
      %v1413 = vunpack.c.l.b16 %v1381
      %v1414 = vunpack.c.l.b16 %v1382
      %v1415 = vunpack.c.l.b16 %v1383
      %v1416 = vunpack.c.l.b16 %v1384
      %v1417 = vunpack.c.l.b16 %v1385
      %v1418 = vunpack.c.l.b16 %v1386
      %v1419 = vunpack.c.l.b16 %v1387
      %v1420 = vunpack.c.l.b16 %v1388
      %v1421 = vpack.c.b16 %v1406, %v1405
      %v1422 = vpack.c.b16 %v1408, %v1407
      %v1423 = vpack.c.b16 %v1410, %v1409
      %v1424 = vpack.c.b16 %v1412, %v1411
      %v1425 = vpack.c.b16 %v1414, %v1413
      %v1426 = vpack.c.b16 %v1416, %v1415
      %v1427 = vpack.c.b16 %v1418, %v1417
      %v1428 = vpack.c.b16 %v1420, %v1419
      %1437 = vmatprep.subr.bf16.mxu0 0
      %1438 = vmatpush1.bf16.msra.mxu0 %v1421
      %1439 = vmatprep.subr.bf16.mxu0 0
      %1440 = vmatpush1.bf16.msra.mxu0 %v1422
      %1441 = vmatprep.subr.bf16.mxu0 0
      %1442 = vmatpush1.bf16.msra.mxu0 %v1423
      %1443 = vmatprep.subr.bf16.mxu0 0
      %1444 = vmatpush1.bf16.msra.mxu0 %v1424
      %1445 = vmatprep.subr.bf16.mxu0 0
      %1446 = vmatpush1.bf16.msra.mxu0 %v1425
      %1447 = vmatprep.subr.bf16.mxu0 0
      %1448 = vmatpush1.bf16.msra.mxu0 %v1426
      %1449 = vmatprep.subr.bf16.mxu0 0
      %1450 = vmatpush1.bf16.msra.mxu0 %v1427
      %1451 = vmatprep.subr.bf16.mxu0 0
      %1452 = vmatpush1.bf16.msra.mxu0 %v1428
      %1453 = vmatprep.subr.bf16.mxu0 0
      %1454 = vmatpush1.bf16.msra.mxu0 0
      %1455 = vmatprep.subr.bf16.mxu0 0
      %1456 = vmatpush1.bf16.msra.mxu0 0
      %1457 = vmatprep.subr.bf16.mxu0 0
      %1458 = vmatpush1.bf16.msra.mxu0 0
      %1459 = vmatprep.subr.bf16.mxu0 0
      %1460 = vmatpush1.bf16.msra.mxu0 0
      %1461 = vmatprep.subr.bf16.mxu0 0
      %1462 = vmatpush1.bf16.msra.mxu0 0
      %1463 = vmatprep.subr.bf16.mxu0 0
      %1464 = vmatpush1.bf16.msra.mxu0 0
      %1465 = vmatprep.subr.bf16.mxu0 0
      %1466 = vmatpush1.bf16.msra.mxu0 0
      %1467 = vmatprep.subr.bf16.mxu0 0
      %1468 = vmatpush1.bf16.msra.mxu0 0
      %1469 = vmatprep.mubr.bf16.mxu0 0
      %1470 = vmatmul.mubr.bf16.gmra.mrb[0].mxu0 %v1372
      %v1471 = vpop.f32.mrb[0].mxu0
      %v1472 = vadd.f32 0.0, %v1471
      %v1473 = vpop.f32.mrb[0].mxu0
      %v1474 = vpop.f32.mrb[0].mxu0
      %v1475 = vpop.f32.mrb[0].mxu0
      %1476 = vdwg.mxu0
      %v1477 = vadd.f32 %v1297, %v1472
      %v1478 = vadd.f32 %v1259, %v1477
      %1479 = vst.msk [vmem:[%s479] sm:$0xff] %vm482, %v1478
      %p1480 = scmp.lt.s32.totalorder %s25, 1
      %s1481 = scalar_select %p1480, %s25, 1
      %s1482 = smul.addr %s1481, 8
      %s1483 = scalar_lea.vmem %s14, %s1482
      // Predicated region
      $region77: #{outfits_transformer.2} parent=75 // pred_check
        %p1484 = pneg %p347
      $region78: #{outfits_transformer.2} parent=75 // pred_check_branch
        %1486 = sbr.rel (%p1484) target = $region80
      $region79: #{outfits_transformer.2} parent=75 // pred_region
        _
      $region80: #{outfits_transformer.2} parent=75 // pred_fallthru
        _
    $region76: #{outfits_transformer.2} parent=5 // pred_fallthru
      _
    %p1487 = scmp.le.s32.totalorder 2, %s20
    // Predicated region
    $region81: #{outfits_transformer.2} parent=5 // pred_check
      %p1488 = pneg %p1487
    $region82: #{outfits_transformer.2} parent=5 // pred_check_branch
      %1490 = sbr.rel (%p1488) target = $region84
    $region83: #{outfits_transformer.2} parent=5 // pred_region
      %s1491 = ssub.s32 %s20, 2
      // Predicated region
      $region85: #{outfits_transformer.2} parent=83 // pred_check
        %p1492 = pneg %p353
      $region86: #{outfits_transformer.2} parent=83 // pred_check_branch
        %1494 = sbr.rel (%p1492) target = $region88
      $region87: #{outfits_transformer.2} parent=83 // pred_region
        %p1495 = scmp.lt.s32.totalorder %s26, 1
        %s1496 = scalar_select %p1495, %s26, 1
        %s1497 = smul.addr %s1496, 8
        %s1498 = scalar_lea.vmem %s14, %s1497
      $region88: #{outfits_transformer.2} parent=83 // pred_fallthru
        _
    $region84: #{outfits_transformer.2} parent=5 // pred_fallthru
      _
  $region6: #{outfits_transformer.2} parent=0 // loop_footer
    %s24 = sadd.s32 1, %s20
  $region7: #{outfits_transformer.2} parent=0 // loop_footer_branch
    %19 = sbr.rel target = $region3
  $region8: #{outfits_transformer.2} parent=0 // loop_exit
    _

</llo_original>
